<compile_context>
chip_gen: v6e
topology: v6e:2x2x1
jax: 0.10.0
libtpu: 0.0.40
codegen_flags: <defaults>
</compile_context>

<pallas_src>
import functools
import math

import numpy as np
import jax
import jax.numpy as jnp
from jax.experimental import pallas as pl
from jax.experimental.pallas import tpu as pltpu


COCO_JOINT_NUM = 17
COCO_SKELETON = ((1, 2), (0, 1), (0, 2), (2, 4), (1, 3), (6, 8), (8, 10),
                 (5, 7), (7, 9), (12, 14), (14, 16), (11, 13), (13, 15),
                 (5, 6), (11, 12), (5, 11), (6, 12), (3, 5), (4, 6))


def make_adj_matrix(n, skeleton):
    m = np.zeros((n, n), dtype=np.float32)
    for i in range(n):
        m[i, i] = 1.0
    for a, b in skeleton:
        m[a, b] = 1.0
        m[b, a] = 1.0
    return jnp.asarray(m)


# ----------------------------------------------------------------------------
# Fused kernel: one grid point per batch element; everything stays in VMEM.
# ----------------------------------------------------------------------------
def _self_attention_kernel(noise_ref, obj_ref, qw_ref, kw_ref, vw_ref, w_ref,
                           bns_ref, bnb_ref, adj_ref, pw_ref, pb_ref, out_ref,
                           *, num_heads, scale):
    f32 = jnp.float32
    N, C = noise_ref.shape          # (17, dim)
    oN = obj_ref.shape[0]           # 64 object tokens
    hd = C // num_heads             # head_dim
    contract_last = (((1,), (1,)), ((), ()))   # q @ k^T without materializing k^T

    noise = noise_ref[...]          # (N, C)
    obj = obj_ref[...]              # (oN, C)

    # --- projections (qkv_bias=False) ---
    q2 = jnp.dot(noise, qw_ref[...], preferred_element_type=f32)   # (N, C)
    k2 = jnp.dot(obj,   kw_ref[...], preferred_element_type=f32)   # (oN, C)
    v2 = jnp.dot(obj,   vw_ref[...], preferred_element_type=f32)   # (oN, C)

    # --- per-head logits folded straight into the (H*oN, H*oN) graph matmul ---
    # Flattened logits A2 = [S_0 | ... | S_{H-1}] (N, H*oN), h-major, exactly
    # torch's attn.transpose(1,2).reshape(B,17,-1).  Then
    #     A2 @ W == sum_h S_h @ W[h*oN:(h+1)*oN, :]
    # which keeps every matmul 2-D and lane-dense and avoids any in-kernel
    # reshape/concatenate across the lane dimension.
    g = jnp.zeros((N, num_heads * oN), f32)
    for h in range(num_heads):
        qh = q2[:, h * hd:(h + 1) * hd]                            # (N, hd)
        kh = k2[:, h * hd:(h + 1) * hd]                            # (oN, hd)
        s_h = jax.lax.dot_general(qh, kh, contract_last,
                                  preferred_element_type=f32)      # (N, oN)
        g = g + jnp.dot(s_h, w_ref[h * oN:(h + 1) * oN, :],
                        preferred_element_type=f32)                # (N, H*oN)
    g = g * scale

    # --- BatchNorm1d (eval) folded to per-channel scale/shift, adjacency mix ---
    g = g * bns_ref[...] + bnb_ref[...]
    g = jnp.dot(adj_ref[...], g, preferred_element_type=f32)       # (N, H*oN)

    # --- per-head softmax over object tokens, attn @ v, proj folded per head ---
    # proj(concat_h x_h) == sum_h x_h @ Wp_t[h*hd:(h+1)*hd, :]
    acc = jnp.zeros((N, C), f32)
    for h in range(num_heads):
        s = g[:, h * oN:(h + 1) * oN]                              # (N, oN)
        s = s - jnp.max(s, axis=-1, keepdims=True)
        p = jnp.exp(s)
        p = p * pl.reciprocal(jnp.sum(p, axis=-1, keepdims=True), approx=True)
        # attn_drop is Dropout(p=0.0) -> identity at inference.
        x_h = jnp.dot(p, v2[:, h * hd:(h + 1) * hd],
                      preferred_element_type=f32)                  # (N, hd)
        acc = acc + jnp.dot(x_h, pw_ref[h * hd:(h + 1) * hd, :],
                            preferred_element_type=f32)            # (N, C)

    # proj bias; proj_drop is Dropout(p=0.0) -> identity.
    out_ref[...] = (acc + pb_ref[...]).astype(out_ref.dtype)


# ----------------------------------------------------------------------------
# Wrapper: single pallas_call, weights resident (constant index maps).
# ----------------------------------------------------------------------------
def self_attention_forward(noise, obj_emb, params, num_heads):
    B, N, C = noise.shape
    _, oN, _ = obj_emb.shape
    hd = C // num_heads
    scale = hd ** (-0.5)                 # qk_scale=None
    HN = num_heads * oN                  # 512 — must match W / batchnorm width
    assert params["W"].shape == (HN, HN)
    assert params["adj"].shape == (N, N)

    kernel = functools.partial(_self_attention_kernel,
                               num_heads=num_heads, scale=scale)
    return pl.pallas_call(
        kernel,
        out_shape=jax.ShapeDtypeStruct((B, N, C), noise.dtype),
        grid=(B,),
        in_specs=[
            pl.BlockSpec((None, N, C), lambda b: (b, 0, 0)),    # noise
            pl.BlockSpec((None, oN, C), lambda b: (b, 0, 0)),   # obj_emb
            pl.BlockSpec((C, C), lambda b: (0, 0)),             # q weight (in,out)
            pl.BlockSpec((C, C), lambda b: (0, 0)),             # k weight (in,out)
            pl.BlockSpec((C, C), lambda b: (0, 0)),             # v weight (in,out)
            pl.BlockSpec((HN, HN), lambda b: (0, 0)),           # graph W (512,512)
            pl.BlockSpec((1, HN), lambda b: (0, 0)),            # bn scale
            pl.BlockSpec((1, HN), lambda b: (0, 0)),            # bn shift
            pl.BlockSpec((N, N), lambda b: (0, 0)),             # adjacency (17,17)
            pl.BlockSpec((C, C), lambda b: (0, 0)),             # proj weight (in,out)
            pl.BlockSpec((1, C), lambda b: (0, 0)),             # proj bias
        ],
        out_specs=pl.BlockSpec((None, N, C), lambda b: (b, 0, 0)),
        compiler_params=pltpu.CompilerParams(
            dimension_semantics=("parallel",)),
    )(noise, obj_emb, params["q_w_t"], params["k_w_t"], params["v_w_t"],
      params["W"], params["bn_scale"], params["bn_shift"], params["adj"],
      params["proj_w_t"], params["proj_b"])

# TODO(synk): comb=True branch (channel-axis attention) not implemented;
#             module default is comb=False, which is what this kernel covers.
# TODO(synk): BatchNorm1d uses inference (running-stats) semantics; training-
#             mode batch statistics are not implemented.


# ----------------------------------------------------------------------------
# Pure-JAX reference (mirrors the torch forward, eval mode) for verification.
# ----------------------------------------------------------------------------
def self_attention_ref(noise, obj_emb, params, num_heads):
    B, N, C = noise.shape
    _, oN, _ = obj_emb.shape
    hd = C // num_heads
    scale = hd ** (-0.5)
    kv_w_t = jnp.concatenate([params["k_w_t"], params["v_w_t"]], axis=1)
    kv = (obj_emb @ kv_w_t).reshape(B, oN, 2, num_heads, hd)
    kv = jnp.transpose(kv, (2, 0, 3, 1, 4))                 # (2, B, H, oN, hd)
    q = (noise @ params["q_w_t"]).reshape(B, N, 1, num_heads, hd)
    q = jnp.transpose(q, (2, 0, 3, 1, 4))[0]                # (B, H, N, hd)
    k, v = kv[0], kv[1]
    attn = jnp.einsum("bhnd,bhmd->bhnm", q, k) * scale      # (B, H, N, oN)
    attn = jnp.transpose(attn, (0, 2, 1, 3)).reshape(B, N, num_heads * oN)
    attn = attn @ params["W"]
    attn = attn * params["bn_scale"] + params["bn_shift"]   # eval BatchNorm1d
    attn = jnp.einsum("nk,bkj->bnj", params["adj"], attn)
    attn = attn.reshape(B, N, num_heads, oN)
    attn = jnp.transpose(attn, (0, 2, 1, 3))                # (B, H, N, oN)
    attn = jax.nn.softmax(attn, axis=-1)
    x = jnp.einsum("bhnm,bhmd->bhnd", attn, v)
    x = jnp.transpose(x, (0, 2, 1, 3)).reshape(B, N, C)
    return x @ params["proj_w_t"] + params["proj_b"]


if __name__ == "__main__":
    B = 2
    num_heads = 8
    N = COCO_JOINT_NUM          # 17 joints (fixed by the graph branch)
    oN = 64                     # object tokens; W is (8*64, 8*64) => oN = 64
    C = 64                      # dim (head_dim = 8)
    HN = num_heads * oN         # 512

    key = jax.random.PRNGKey(0)
    keys = jax.random.split(key, 11)

    noise = jax.random.normal(keys[0], (B, N, C), dtype=jnp.float32)
    obj_emb = jax.random.normal(keys[1], (B, oN, C), dtype=jnp.float32)

    # torch Linear shapes: W (out, in), b (out,); qkv_bias=False.
    bound = 1.0 / math.sqrt(C)
    q_w = jax.random.uniform(keys[2], (C, C), jnp.float32, -bound, bound)
    kv_w = jax.random.uniform(keys[3], (2 * C, C), jnp.float32, -bound, bound)
    proj_w = jax.random.uniform(keys[4], (C, C), jnp.float32, -bound, bound)
    proj_b = jax.random.uniform(keys[5], (C,), jnp.float32, -bound, bound)
    W = 0.001 * jax.random.normal(keys[6], (HN, HN), dtype=jnp.float32)  # init.normal_(std=0.001)

    # BatchNorm1d(512) inference parameters, folded to scale/shift offline.
    gamma = jax.random.uniform(keys[7], (HN,), jnp.float32, 0.5, 1.5)
    beta = 0.1 * jax.random.normal(keys[8], (HN,), dtype=jnp.float32)
    running_mean = 0.1 * jax.random.normal(keys[9], (HN,), dtype=jnp.float32)
    running_var = jax.random.uniform(keys[10], (HN,), jnp.float32, 0.5, 1.5)
    eps = 1e-5
    bn_scale = gamma / jnp.sqrt(running_var + eps)
    bn_shift = beta - running_mean * bn_scale

    kv_w_t = kv_w.T                              # (C, 2C): [:, :C] -> k, [:, C:] -> v
    params = {
        "q_w_t": q_w.T,                          # (C, C)
        "k_w_t": kv_w_t[:, :C],                  # (C, C)
        "v_w_t": kv_w_t[:, C:],                  # (C, C)
        "W": W,                                  # (512, 512)
        "bn_scale": bn_scale.reshape(1, HN),
        "bn_shift": bn_shift.reshape(1, HN),
        "adj": make_adj_matrix(N, COCO_SKELETON),  # (17, 17)
        "proj_w_t": proj_w.T,                    # (C, C)
        "proj_b": proj_b.reshape(1, C),
    }

    out = self_attention_forward(noise, obj_emb, params, num_heads)
    out = jax.block_until_ready(out)

    ref = self_attention_ref(noise, obj_emb, params, num_heads)
    assert out.shape == (B, N, C)
    assert jnp.allclose(out, ref, atol=2e-3, rtol=2e-3), (
        "mismatch vs reference: max abs err = "
        + str(float(jnp.max(jnp.abs(out - ref)))))

    print("KERNEL_OK")
</pallas_src>

<mosaic_0001>
module attributes {stable_mosaic.version = 11 : i64} {
  func.func @_self_attention_kernel(%arg0: i32, %arg1: memref<1x17x64xf32, #tpu.memory_space<vmem>>, %arg2: memref<1x64x64xf32, #tpu.memory_space<vmem>>, %arg3: memref<64x64xf32, #tpu.memory_space<vmem>>, %arg4: memref<64x64xf32, #tpu.memory_space<vmem>>, %arg5: memref<64x64xf32, #tpu.memory_space<vmem>>, %arg6: memref<512x512xf32, #tpu.memory_space<vmem>>, %arg7: memref<1x512xf32, #tpu.memory_space<vmem>>, %arg8: memref<1x512xf32, #tpu.memory_space<vmem>>, %arg9: memref<17x17xf32, #tpu.memory_space<vmem>>, %arg10: memref<64x64xf32, #tpu.memory_space<vmem>>, %arg11: memref<1x64xf32, #tpu.memory_space<vmem>>, %arg12: memref<1x17x64xf32, #tpu.memory_space<vmem>>) attributes {dimension_semantics = [#tpu.dimension_semantics<parallel>], iteration_bounds = array<i64: 2>, scalar_prefetch = 0 : i64, scratch_operands = 0 : i64, tpu.core_type = #tpu.core_type<tc>, window_params = [{transform_indices = @transform_0, window_bounds = array<i64: 1, 17, 64>}, {transform_indices = @transform_1, window_bounds = array<i64: 1, 64, 64>}, {pipeline_mode = #tpu.pipeline_mode<synchronous>, transform_indices = @transform_2, window_bounds = array<i64: 64, 64>}, {pipeline_mode = #tpu.pipeline_mode<synchronous>, transform_indices = @transform_3, window_bounds = array<i64: 64, 64>}, {pipeline_mode = #tpu.pipeline_mode<synchronous>, transform_indices = @transform_4, window_bounds = array<i64: 64, 64>}, {pipeline_mode = #tpu.pipeline_mode<synchronous>, transform_indices = @transform_5, window_bounds = array<i64: 512, 512>}, {pipeline_mode = #tpu.pipeline_mode<synchronous>, transform_indices = @transform_6, window_bounds = array<i64: 1, 512>}, {pipeline_mode = #tpu.pipeline_mode<synchronous>, transform_indices = @transform_7, window_bounds = array<i64: 1, 512>}, {pipeline_mode = #tpu.pipeline_mode<synchronous>, transform_indices = @transform_8, window_bounds = array<i64: 17, 17>}, {pipeline_mode = #tpu.pipeline_mode<synchronous>, transform_indices = @transform_9, window_bounds = array<i64: 64, 64>}, {pipeline_mode = #tpu.pipeline_mode<synchronous>, transform_indices = @transform_10, window_bounds = array<i64: 1, 64>}, {transform_indices = @transform_11, window_bounds = array<i64: 1, 17, 64>}]} {
    %c0 = arith.constant 0 : index
    %c0_0 = arith.constant 0 : index
    %c0_1 = arith.constant 0 : index
    %0 = vector.load %arg1[%c0, %c0_0, %c0_1] : memref<1x17x64xf32, #tpu.memory_space<vmem>>, vector<1x17x64xf32>
    %1 = vector.shape_cast %0 : vector<1x17x64xf32> to vector<17x64xf32>
    %c0_2 = arith.constant 0 : index
    %c0_3 = arith.constant 0 : index
    %c0_4 = arith.constant 0 : index
    %2 = vector.load %arg2[%c0_2, %c0_3, %c0_4] : memref<1x64x64xf32, #tpu.memory_space<vmem>>, vector<1x64x64xf32>
    %3 = vector.shape_cast %2 : vector<1x64x64xf32> to vector<64x64xf32>
    %c0_5 = arith.constant 0 : index
    %c0_6 = arith.constant 0 : index
    %4 = vector.load %arg3[%c0_5, %c0_6] : memref<64x64xf32, #tpu.memory_space<vmem>>, vector<64x64xf32>
    %cst = arith.constant dense<0.000000e+00> : vector<17x64xf32>
    %5 = tpu.matmul %1, %4, %cst {dimension_numbers = #tpu.dot_dimension_numbers<[1], [0], [0], [1], [0, 0, 1, 1], [], []>} : vector<17x64xf32>, vector<64x64xf32>, vector<17x64xf32> -> vector<17x64xf32>
    %c0_7 = arith.constant 0 : index
    %c0_8 = arith.constant 0 : index
    %6 = vector.load %arg4[%c0_7, %c0_8] : memref<64x64xf32, #tpu.memory_space<vmem>>, vector<64x64xf32>
    %cst_9 = arith.constant dense<0.000000e+00> : vector<64x64xf32>
    %7 = tpu.matmul %3, %6, %cst_9 {dimension_numbers = #tpu.dot_dimension_numbers<[1], [0], [0], [1], [0, 0, 1, 1], [], []>} : vector<64x64xf32>, vector<64x64xf32>, vector<64x64xf32> -> vector<64x64xf32>
    %c0_10 = arith.constant 0 : index
    %c0_11 = arith.constant 0 : index
    %8 = vector.load %arg5[%c0_10, %c0_11] : memref<64x64xf32, #tpu.memory_space<vmem>>, vector<64x64xf32>
    %cst_12 = arith.constant dense<0.000000e+00> : vector<64x64xf32>
    %9 = tpu.matmul %3, %8, %cst_12 {dimension_numbers = #tpu.dot_dimension_numbers<[1], [0], [0], [1], [0, 0, 1, 1], [], []>} : vector<64x64xf32>, vector<64x64xf32>, vector<64x64xf32> -> vector<64x64xf32>
    %cst_13 = arith.constant 0.000000e+00 : f32
    %10 = vector.broadcast %cst_13 : f32 to vector<17x512xf32>
    %11 = vector.extract_strided_slice %5 {offsets = [0, 0], sizes = [17, 8], strides = [1, 1]} : vector<17x64xf32> to vector<17x8xf32>
    %12 = vector.extract_strided_slice %7 {offsets = [0, 0], sizes = [64, 8], strides = [1, 1]} : vector<64x64xf32> to vector<64x8xf32>
    %cst_14 = arith.constant dense<0.000000e+00> : vector<17x64xf32>
    %13 = tpu.matmul %11, %12, %cst_14 {dimension_numbers = #tpu.dot_dimension_numbers<[1], [1], [0], [0], [0, 0, 1, 0], [], []>} : vector<17x8xf32>, vector<64x8xf32>, vector<17x64xf32> -> vector<17x64xf32>
    %c0_15 = arith.constant 0 : index
    %c0_16 = arith.constant 0 : index
    %14 = vector.load %arg6[%c0_15, %c0_16] : memref<512x512xf32, #tpu.memory_space<vmem>>, vector<64x512xf32>
    %cst_17 = arith.constant dense<0.000000e+00> : vector<17x512xf32>
    %15 = tpu.matmul %13, %14, %cst_17 {dimension_numbers = #tpu.dot_dimension_numbers<[1], [0], [0], [1], [0, 0, 1, 1], [], []>} : vector<17x64xf32>, vector<64x512xf32>, vector<17x512xf32> -> vector<17x512xf32>
    %16 = arith.addf %10, %15 : vector<17x512xf32>
    %17 = vector.extract_strided_slice %5 {offsets = [0, 8], sizes = [17, 8], strides = [1, 1]} : vector<17x64xf32> to vector<17x8xf32>
    %18 = vector.extract_strided_slice %7 {offsets = [0, 8], sizes = [64, 8], strides = [1, 1]} : vector<64x64xf32> to vector<64x8xf32>
    %cst_18 = arith.constant dense<0.000000e+00> : vector<17x64xf32>
    %19 = tpu.matmul %17, %18, %cst_18 {dimension_numbers = #tpu.dot_dimension_numbers<[1], [1], [0], [0], [0, 0, 1, 0], [], []>} : vector<17x8xf32>, vector<64x8xf32>, vector<17x64xf32> -> vector<17x64xf32>
    %c64 = arith.constant 64 : index
    %c0_19 = arith.constant 0 : index
    %20 = vector.load %arg6[%c64, %c0_19] : memref<512x512xf32, #tpu.memory_space<vmem>>, vector<64x512xf32>
    %cst_20 = arith.constant dense<0.000000e+00> : vector<17x512xf32>
    %21 = tpu.matmul %19, %20, %cst_20 {dimension_numbers = #tpu.dot_dimension_numbers<[1], [0], [0], [1], [0, 0, 1, 1], [], []>} : vector<17x64xf32>, vector<64x512xf32>, vector<17x512xf32> -> vector<17x512xf32>
    %22 = arith.addf %16, %21 : vector<17x512xf32>
    %23 = vector.extract_strided_slice %5 {offsets = [0, 16], sizes = [17, 8], strides = [1, 1]} : vector<17x64xf32> to vector<17x8xf32>
    %24 = vector.extract_strided_slice %7 {offsets = [0, 16], sizes = [64, 8], strides = [1, 1]} : vector<64x64xf32> to vector<64x8xf32>
    %cst_21 = arith.constant dense<0.000000e+00> : vector<17x64xf32>
    %25 = tpu.matmul %23, %24, %cst_21 {dimension_numbers = #tpu.dot_dimension_numbers<[1], [1], [0], [0], [0, 0, 1, 0], [], []>} : vector<17x8xf32>, vector<64x8xf32>, vector<17x64xf32> -> vector<17x64xf32>
    %c128 = arith.constant 128 : index
    %c0_22 = arith.constant 0 : index
    %26 = vector.load %arg6[%c128, %c0_22] : memref<512x512xf32, #tpu.memory_space<vmem>>, vector<64x512xf32>
    %cst_23 = arith.constant dense<0.000000e+00> : vector<17x512xf32>
    %27 = tpu.matmul %25, %26, %cst_23 {dimension_numbers = #tpu.dot_dimension_numbers<[1], [0], [0], [1], [0, 0, 1, 1], [], []>} : vector<17x64xf32>, vector<64x512xf32>, vector<17x512xf32> -> vector<17x512xf32>
    %28 = arith.addf %22, %27 : vector<17x512xf32>
    %29 = vector.extract_strided_slice %5 {offsets = [0, 24], sizes = [17, 8], strides = [1, 1]} : vector<17x64xf32> to vector<17x8xf32>
    %30 = vector.extract_strided_slice %7 {offsets = [0, 24], sizes = [64, 8], strides = [1, 1]} : vector<64x64xf32> to vector<64x8xf32>
    %cst_24 = arith.constant dense<0.000000e+00> : vector<17x64xf32>
    %31 = tpu.matmul %29, %30, %cst_24 {dimension_numbers = #tpu.dot_dimension_numbers<[1], [1], [0], [0], [0, 0, 1, 0], [], []>} : vector<17x8xf32>, vector<64x8xf32>, vector<17x64xf32> -> vector<17x64xf32>
    %c192 = arith.constant 192 : index
    %c0_25 = arith.constant 0 : index
    %32 = vector.load %arg6[%c192, %c0_25] : memref<512x512xf32, #tpu.memory_space<vmem>>, vector<64x512xf32>
    %cst_26 = arith.constant dense<0.000000e+00> : vector<17x512xf32>
    %33 = tpu.matmul %31, %32, %cst_26 {dimension_numbers = #tpu.dot_dimension_numbers<[1], [0], [0], [1], [0, 0, 1, 1], [], []>} : vector<17x64xf32>, vector<64x512xf32>, vector<17x512xf32> -> vector<17x512xf32>
    %34 = arith.addf %28, %33 : vector<17x512xf32>
    %35 = vector.extract_strided_slice %5 {offsets = [0, 32], sizes = [17, 8], strides = [1, 1]} : vector<17x64xf32> to vector<17x8xf32>
    %36 = vector.extract_strided_slice %7 {offsets = [0, 32], sizes = [64, 8], strides = [1, 1]} : vector<64x64xf32> to vector<64x8xf32>
    %cst_27 = arith.constant dense<0.000000e+00> : vector<17x64xf32>
    %37 = tpu.matmul %35, %36, %cst_27 {dimension_numbers = #tpu.dot_dimension_numbers<[1], [1], [0], [0], [0, 0, 1, 0], [], []>} : vector<17x8xf32>, vector<64x8xf32>, vector<17x64xf32> -> vector<17x64xf32>
    %c256 = arith.constant 256 : index
    %c0_28 = arith.constant 0 : index
    %38 = vector.load %arg6[%c256, %c0_28] : memref<512x512xf32, #tpu.memory_space<vmem>>, vector<64x512xf32>
    %cst_29 = arith.constant dense<0.000000e+00> : vector<17x512xf32>
    %39 = tpu.matmul %37, %38, %cst_29 {dimension_numbers = #tpu.dot_dimension_numbers<[1], [0], [0], [1], [0, 0, 1, 1], [], []>} : vector<17x64xf32>, vector<64x512xf32>, vector<17x512xf32> -> vector<17x512xf32>
    %40 = arith.addf %34, %39 : vector<17x512xf32>
    %41 = vector.extract_strided_slice %5 {offsets = [0, 40], sizes = [17, 8], strides = [1, 1]} : vector<17x64xf32> to vector<17x8xf32>
    %42 = vector.extract_strided_slice %7 {offsets = [0, 40], sizes = [64, 8], strides = [1, 1]} : vector<64x64xf32> to vector<64x8xf32>
    %cst_30 = arith.constant dense<0.000000e+00> : vector<17x64xf32>
    %43 = tpu.matmul %41, %42, %cst_30 {dimension_numbers = #tpu.dot_dimension_numbers<[1], [1], [0], [0], [0, 0, 1, 0], [], []>} : vector<17x8xf32>, vector<64x8xf32>, vector<17x64xf32> -> vector<17x64xf32>
    %c320 = arith.constant 320 : index
    %c0_31 = arith.constant 0 : index
    %44 = vector.load %arg6[%c320, %c0_31] : memref<512x512xf32, #tpu.memory_space<vmem>>, vector<64x512xf32>
    %cst_32 = arith.constant dense<0.000000e+00> : vector<17x512xf32>
    %45 = tpu.matmul %43, %44, %cst_32 {dimension_numbers = #tpu.dot_dimension_numbers<[1], [0], [0], [1], [0, 0, 1, 1], [], []>} : vector<17x64xf32>, vector<64x512xf32>, vector<17x512xf32> -> vector<17x512xf32>
    %46 = arith.addf %40, %45 : vector<17x512xf32>
    %47 = vector.extract_strided_slice %5 {offsets = [0, 48], sizes = [17, 8], strides = [1, 1]} : vector<17x64xf32> to vector<17x8xf32>
    %48 = vector.extract_strided_slice %7 {offsets = [0, 48], sizes = [64, 8], strides = [1, 1]} : vector<64x64xf32> to vector<64x8xf32>
    %cst_33 = arith.constant dense<0.000000e+00> : vector<17x64xf32>
    %49 = tpu.matmul %47, %48, %cst_33 {dimension_numbers = #tpu.dot_dimension_numbers<[1], [1], [0], [0], [0, 0, 1, 0], [], []>} : vector<17x8xf32>, vector<64x8xf32>, vector<17x64xf32> -> vector<17x64xf32>
    %c384 = arith.constant 384 : index
    %c0_34 = arith.constant 0 : index
    %50 = vector.load %arg6[%c384, %c0_34] : memref<512x512xf32, #tpu.memory_space<vmem>>, vector<64x512xf32>
    %cst_35 = arith.constant dense<0.000000e+00> : vector<17x512xf32>
    %51 = tpu.matmul %49, %50, %cst_35 {dimension_numbers = #tpu.dot_dimension_numbers<[1], [0], [0], [1], [0, 0, 1, 1], [], []>} : vector<17x64xf32>, vector<64x512xf32>, vector<17x512xf32> -> vector<17x512xf32>
    %52 = arith.addf %46, %51 : vector<17x512xf32>
    %53 = vector.extract_strided_slice %5 {offsets = [0, 56], sizes = [17, 8], strides = [1, 1]} : vector<17x64xf32> to vector<17x8xf32>
    %54 = vector.extract_strided_slice %7 {offsets = [0, 56], sizes = [64, 8], strides = [1, 1]} : vector<64x64xf32> to vector<64x8xf32>
    %cst_36 = arith.constant dense<0.000000e+00> : vector<17x64xf32>
    %55 = tpu.matmul %53, %54, %cst_36 {dimension_numbers = #tpu.dot_dimension_numbers<[1], [1], [0], [0], [0, 0, 1, 0], [], []>} : vector<17x8xf32>, vector<64x8xf32>, vector<17x64xf32> -> vector<17x64xf32>
    %c448 = arith.constant 448 : index
    %c0_37 = arith.constant 0 : index
    %56 = vector.load %arg6[%c448, %c0_37] : memref<512x512xf32, #tpu.memory_space<vmem>>, vector<64x512xf32>
    %cst_38 = arith.constant dense<0.000000e+00> : vector<17x512xf32>
    %57 = tpu.matmul %55, %56, %cst_38 {dimension_numbers = #tpu.dot_dimension_numbers<[1], [0], [0], [1], [0, 0, 1, 1], [], []>} : vector<17x64xf32>, vector<64x512xf32>, vector<17x512xf32> -> vector<17x512xf32>
    %58 = arith.addf %52, %57 : vector<17x512xf32>
    %cst_39 = arith.constant 0.353553385 : f32
    %59 = vector.broadcast %cst_39 : f32 to vector<17x512xf32>
    %60 = arith.mulf %58, %59 : vector<17x512xf32>
    %c0_40 = arith.constant 0 : index
    %c0_41 = arith.constant 0 : index
    %61 = vector.load %arg7[%c0_40, %c0_41] : memref<1x512xf32, #tpu.memory_space<vmem>>, vector<1x512xf32>
    %62 = vector.broadcast %61 : vector<1x512xf32> to vector<17x512xf32>
    %63 = arith.mulf %60, %62 : vector<17x512xf32>
    %c0_42 = arith.constant 0 : index
    %c0_43 = arith.constant 0 : index
    %64 = vector.load %arg8[%c0_42, %c0_43] : memref<1x512xf32, #tpu.memory_space<vmem>>, vector<1x512xf32>
    %65 = vector.broadcast %64 : vector<1x512xf32> to vector<17x512xf32>
    %66 = arith.addf %63, %65 : vector<17x512xf32>
    %c0_44 = arith.constant 0 : index
    %c0_45 = arith.constant 0 : index
    %67 = vector.load %arg9[%c0_44, %c0_45] : memref<17x17xf32, #tpu.memory_space<vmem>>, vector<17x17xf32>
    %cst_46 = arith.constant dense<0.000000e+00> : vector<17x512xf32>
    %68 = tpu.matmul %67, %66, %cst_46 {dimension_numbers = #tpu.dot_dimension_numbers<[1], [0], [0], [1], [0, 0, 1, 1], [], []>} : vector<17x17xf32>, vector<17x512xf32>, vector<17x512xf32> -> vector<17x512xf32>
    %cst_47 = arith.constant 0.000000e+00 : f32
    %69 = vector.broadcast %cst_47 : f32 to vector<17x64xf32>
    %70 = vector.extract_strided_slice %68 {offsets = [0, 0], sizes = [17, 64], strides = [1, 1]} : vector<17x512xf32> to vector<17x64xf32>
    %cst_48 = arith.constant dense<0xFF800000> : vector<17xf32>
    %71 = vector.multi_reduction <maximumf>, %70, %cst_48 [1] : vector<17x64xf32> to vector<17xf32>
    %72 = vector.shape_cast %71 : vector<17xf32> to vector<17x1xf32>
    %73 = vector.broadcast %72 : vector<17x1xf32> to vector<17x64xf32>
    %74 = arith.subf %70, %73 : vector<17x64xf32>
    %75 = math.exp %74 : vector<17x64xf32>
    %cst_49 = arith.constant dense<0.000000e+00> : vector<17xf32>
    %76 = vector.multi_reduction <add>, %75, %cst_49 [1] : vector<17x64xf32> to vector<17xf32>
    %77 = vector.shape_cast %76 : vector<17xf32> to vector<17x1xf32>
    %78 = tpu.reciprocal %77 {approx = true} : vector<17x1xf32> -> vector<17x1xf32>
    %79 = vector.broadcast %78 : vector<17x1xf32> to vector<17x64xf32>
    %80 = arith.mulf %75, %79 : vector<17x64xf32>
    %81 = vector.extract_strided_slice %9 {offsets = [0, 0], sizes = [64, 8], strides = [1, 1]} : vector<64x64xf32> to vector<64x8xf32>
    %cst_50 = arith.constant dense<0.000000e+00> : vector<17x8xf32>
    %82 = tpu.matmul %80, %81, %cst_50 {dimension_numbers = #tpu.dot_dimension_numbers<[1], [0], [0], [1], [0, 0, 1, 1], [], []>} : vector<17x64xf32>, vector<64x8xf32>, vector<17x8xf32> -> vector<17x8xf32>
    %c0_51 = arith.constant 0 : index
    %c0_52 = arith.constant 0 : index
    %83 = vector.load %arg10[%c0_51, %c0_52] : memref<64x64xf32, #tpu.memory_space<vmem>>, vector<8x64xf32>
    %cst_53 = arith.constant dense<0.000000e+00> : vector<17x64xf32>
    %84 = tpu.matmul %82, %83, %cst_53 {dimension_numbers = #tpu.dot_dimension_numbers<[1], [0], [0], [1], [0, 0, 1, 1], [], []>} : vector<17x8xf32>, vector<8x64xf32>, vector<17x64xf32> -> vector<17x64xf32>
    %85 = arith.addf %69, %84 : vector<17x64xf32>
    %86 = vector.extract_strided_slice %68 {offsets = [0, 64], sizes = [17, 64], strides = [1, 1]} : vector<17x512xf32> to vector<17x64xf32>
    %cst_54 = arith.constant dense<0xFF800000> : vector<17xf32>
    %87 = vector.multi_reduction <maximumf>, %86, %cst_54 [1] : vector<17x64xf32> to vector<17xf32>
    %88 = vector.shape_cast %87 : vector<17xf32> to vector<17x1xf32>
    %89 = vector.broadcast %88 : vector<17x1xf32> to vector<17x64xf32>
    %90 = arith.subf %86, %89 : vector<17x64xf32>
    %91 = math.exp %90 : vector<17x64xf32>
    %cst_55 = arith.constant dense<0.000000e+00> : vector<17xf32>
    %92 = vector.multi_reduction <add>, %91, %cst_55 [1] : vector<17x64xf32> to vector<17xf32>
    %93 = vector.shape_cast %92 : vector<17xf32> to vector<17x1xf32>
    %94 = tpu.reciprocal %93 {approx = true} : vector<17x1xf32> -> vector<17x1xf32>
    %95 = vector.broadcast %94 : vector<17x1xf32> to vector<17x64xf32>
    %96 = arith.mulf %91, %95 : vector<17x64xf32>
    %97 = vector.extract_strided_slice %9 {offsets = [0, 8], sizes = [64, 8], strides = [1, 1]} : vector<64x64xf32> to vector<64x8xf32>
    %cst_56 = arith.constant dense<0.000000e+00> : vector<17x8xf32>
    %98 = tpu.matmul %96, %97, %cst_56 {dimension_numbers = #tpu.dot_dimension_numbers<[1], [0], [0], [1], [0, 0, 1, 1], [], []>} : vector<17x64xf32>, vector<64x8xf32>, vector<17x8xf32> -> vector<17x8xf32>
    %c8 = arith.constant 8 : index
    %c0_57 = arith.constant 0 : index
    %99 = vector.load %arg10[%c8, %c0_57] : memref<64x64xf32, #tpu.memory_space<vmem>>, vector<8x64xf32>
    %cst_58 = arith.constant dense<0.000000e+00> : vector<17x64xf32>
    %100 = tpu.matmul %98, %99, %cst_58 {dimension_numbers = #tpu.dot_dimension_numbers<[1], [0], [0], [1], [0, 0, 1, 1], [], []>} : vector<17x8xf32>, vector<8x64xf32>, vector<17x64xf32> -> vector<17x64xf32>
    %101 = arith.addf %85, %100 : vector<17x64xf32>
    %102 = vector.extract_strided_slice %68 {offsets = [0, 128], sizes = [17, 64], strides = [1, 1]} : vector<17x512xf32> to vector<17x64xf32>
    %cst_59 = arith.constant dense<0xFF800000> : vector<17xf32>
    %103 = vector.multi_reduction <maximumf>, %102, %cst_59 [1] : vector<17x64xf32> to vector<17xf32>
    %104 = vector.shape_cast %103 : vector<17xf32> to vector<17x1xf32>
    %105 = vector.broadcast %104 : vector<17x1xf32> to vector<17x64xf32>
    %106 = arith.subf %102, %105 : vector<17x64xf32>
    %107 = math.exp %106 : vector<17x64xf32>
    %cst_60 = arith.constant dense<0.000000e+00> : vector<17xf32>
    %108 = vector.multi_reduction <add>, %107, %cst_60 [1] : vector<17x64xf32> to vector<17xf32>
    %109 = vector.shape_cast %108 : vector<17xf32> to vector<17x1xf32>
    %110 = tpu.reciprocal %109 {approx = true} : vector<17x1xf32> -> vector<17x1xf32>
    %111 = vector.broadcast %110 : vector<17x1xf32> to vector<17x64xf32>
    %112 = arith.mulf %107, %111 : vector<17x64xf32>
    %113 = vector.extract_strided_slice %9 {offsets = [0, 16], sizes = [64, 8], strides = [1, 1]} : vector<64x64xf32> to vector<64x8xf32>
    %cst_61 = arith.constant dense<0.000000e+00> : vector<17x8xf32>
    %114 = tpu.matmul %112, %113, %cst_61 {dimension_numbers = #tpu.dot_dimension_numbers<[1], [0], [0], [1], [0, 0, 1, 1], [], []>} : vector<17x64xf32>, vector<64x8xf32>, vector<17x8xf32> -> vector<17x8xf32>
    %c16 = arith.constant 16 : index
    %c0_62 = arith.constant 0 : index
    %115 = vector.load %arg10[%c16, %c0_62] : memref<64x64xf32, #tpu.memory_space<vmem>>, vector<8x64xf32>
    %cst_63 = arith.constant dense<0.000000e+00> : vector<17x64xf32>
    %116 = tpu.matmul %114, %115, %cst_63 {dimension_numbers = #tpu.dot_dimension_numbers<[1], [0], [0], [1], [0, 0, 1, 1], [], []>} : vector<17x8xf32>, vector<8x64xf32>, vector<17x64xf32> -> vector<17x64xf32>
    %117 = arith.addf %101, %116 : vector<17x64xf32>
    %118 = vector.extract_strided_slice %68 {offsets = [0, 192], sizes = [17, 64], strides = [1, 1]} : vector<17x512xf32> to vector<17x64xf32>
    %cst_64 = arith.constant dense<0xFF800000> : vector<17xf32>
    %119 = vector.multi_reduction <maximumf>, %118, %cst_64 [1] : vector<17x64xf32> to vector<17xf32>
    %120 = vector.shape_cast %119 : vector<17xf32> to vector<17x1xf32>
    %121 = vector.broadcast %120 : vector<17x1xf32> to vector<17x64xf32>
    %122 = arith.subf %118, %121 : vector<17x64xf32>
    %123 = math.exp %122 : vector<17x64xf32>
    %cst_65 = arith.constant dense<0.000000e+00> : vector<17xf32>
    %124 = vector.multi_reduction <add>, %123, %cst_65 [1] : vector<17x64xf32> to vector<17xf32>
    %125 = vector.shape_cast %124 : vector<17xf32> to vector<17x1xf32>
    %126 = tpu.reciprocal %125 {approx = true} : vector<17x1xf32> -> vector<17x1xf32>
    %127 = vector.broadcast %126 : vector<17x1xf32> to vector<17x64xf32>
    %128 = arith.mulf %123, %127 : vector<17x64xf32>
    %129 = vector.extract_strided_slice %9 {offsets = [0, 24], sizes = [64, 8], strides = [1, 1]} : vector<64x64xf32> to vector<64x8xf32>
    %cst_66 = arith.constant dense<0.000000e+00> : vector<17x8xf32>
    %130 = tpu.matmul %128, %129, %cst_66 {dimension_numbers = #tpu.dot_dimension_numbers<[1], [0], [0], [1], [0, 0, 1, 1], [], []>} : vector<17x64xf32>, vector<64x8xf32>, vector<17x8xf32> -> vector<17x8xf32>
    %c24 = arith.constant 24 : index
    %c0_67 = arith.constant 0 : index
    %131 = vector.load %arg10[%c24, %c0_67] : memref<64x64xf32, #tpu.memory_space<vmem>>, vector<8x64xf32>
    %cst_68 = arith.constant dense<0.000000e+00> : vector<17x64xf32>
    %132 = tpu.matmul %130, %131, %cst_68 {dimension_numbers = #tpu.dot_dimension_numbers<[1], [0], [0], [1], [0, 0, 1, 1], [], []>} : vector<17x8xf32>, vector<8x64xf32>, vector<17x64xf32> -> vector<17x64xf32>
    %133 = arith.addf %117, %132 : vector<17x64xf32>
    %134 = vector.extract_strided_slice %68 {offsets = [0, 256], sizes = [17, 64], strides = [1, 1]} : vector<17x512xf32> to vector<17x64xf32>
    %cst_69 = arith.constant dense<0xFF800000> : vector<17xf32>
    %135 = vector.multi_reduction <maximumf>, %134, %cst_69 [1] : vector<17x64xf32> to vector<17xf32>
    %136 = vector.shape_cast %135 : vector<17xf32> to vector<17x1xf32>
    %137 = vector.broadcast %136 : vector<17x1xf32> to vector<17x64xf32>
    %138 = arith.subf %134, %137 : vector<17x64xf32>
    %139 = math.exp %138 : vector<17x64xf32>
    %cst_70 = arith.constant dense<0.000000e+00> : vector<17xf32>
    %140 = vector.multi_reduction <add>, %139, %cst_70 [1] : vector<17x64xf32> to vector<17xf32>
    %141 = vector.shape_cast %140 : vector<17xf32> to vector<17x1xf32>
    %142 = tpu.reciprocal %141 {approx = true} : vector<17x1xf32> -> vector<17x1xf32>
    %143 = vector.broadcast %142 : vector<17x1xf32> to vector<17x64xf32>
    %144 = arith.mulf %139, %143 : vector<17x64xf32>
    %145 = vector.extract_strided_slice %9 {offsets = [0, 32], sizes = [64, 8], strides = [1, 1]} : vector<64x64xf32> to vector<64x8xf32>
    %cst_71 = arith.constant dense<0.000000e+00> : vector<17x8xf32>
    %146 = tpu.matmul %144, %145, %cst_71 {dimension_numbers = #tpu.dot_dimension_numbers<[1], [0], [0], [1], [0, 0, 1, 1], [], []>} : vector<17x64xf32>, vector<64x8xf32>, vector<17x8xf32> -> vector<17x8xf32>
    %c32 = arith.constant 32 : index
    %c0_72 = arith.constant 0 : index
    %147 = vector.load %arg10[%c32, %c0_72] : memref<64x64xf32, #tpu.memory_space<vmem>>, vector<8x64xf32>
    %cst_73 = arith.constant dense<0.000000e+00> : vector<17x64xf32>
    %148 = tpu.matmul %146, %147, %cst_73 {dimension_numbers = #tpu.dot_dimension_numbers<[1], [0], [0], [1], [0, 0, 1, 1], [], []>} : vector<17x8xf32>, vector<8x64xf32>, vector<17x64xf32> -> vector<17x64xf32>
    %149 = arith.addf %133, %148 : vector<17x64xf32>
    %150 = vector.extract_strided_slice %68 {offsets = [0, 320], sizes = [17, 64], strides = [1, 1]} : vector<17x512xf32> to vector<17x64xf32>
    %cst_74 = arith.constant dense<0xFF800000> : vector<17xf32>
    %151 = vector.multi_reduction <maximumf>, %150, %cst_74 [1] : vector<17x64xf32> to vector<17xf32>
    %152 = vector.shape_cast %151 : vector<17xf32> to vector<17x1xf32>
    %153 = vector.broadcast %152 : vector<17x1xf32> to vector<17x64xf32>
    %154 = arith.subf %150, %153 : vector<17x64xf32>
    %155 = math.exp %154 : vector<17x64xf32>
    %cst_75 = arith.constant dense<0.000000e+00> : vector<17xf32>
    %156 = vector.multi_reduction <add>, %155, %cst_75 [1] : vector<17x64xf32> to vector<17xf32>
    %157 = vector.shape_cast %156 : vector<17xf32> to vector<17x1xf32>
    %158 = tpu.reciprocal %157 {approx = true} : vector<17x1xf32> -> vector<17x1xf32>
    %159 = vector.broadcast %158 : vector<17x1xf32> to vector<17x64xf32>
    %160 = arith.mulf %155, %159 : vector<17x64xf32>
    %161 = vector.extract_strided_slice %9 {offsets = [0, 40], sizes = [64, 8], strides = [1, 1]} : vector<64x64xf32> to vector<64x8xf32>
    %cst_76 = arith.constant dense<0.000000e+00> : vector<17x8xf32>
    %162 = tpu.matmul %160, %161, %cst_76 {dimension_numbers = #tpu.dot_dimension_numbers<[1], [0], [0], [1], [0, 0, 1, 1], [], []>} : vector<17x64xf32>, vector<64x8xf32>, vector<17x8xf32> -> vector<17x8xf32>
    %c40 = arith.constant 40 : index
    %c0_77 = arith.constant 0 : index
    %163 = vector.load %arg10[%c40, %c0_77] : memref<64x64xf32, #tpu.memory_space<vmem>>, vector<8x64xf32>
    %cst_78 = arith.constant dense<0.000000e+00> : vector<17x64xf32>
    %164 = tpu.matmul %162, %163, %cst_78 {dimension_numbers = #tpu.dot_dimension_numbers<[1], [0], [0], [1], [0, 0, 1, 1], [], []>} : vector<17x8xf32>, vector<8x64xf32>, vector<17x64xf32> -> vector<17x64xf32>
    %165 = arith.addf %149, %164 : vector<17x64xf32>
    %166 = vector.extract_strided_slice %68 {offsets = [0, 384], sizes = [17, 64], strides = [1, 1]} : vector<17x512xf32> to vector<17x64xf32>
    %cst_79 = arith.constant dense<0xFF800000> : vector<17xf32>
    %167 = vector.multi_reduction <maximumf>, %166, %cst_79 [1] : vector<17x64xf32> to vector<17xf32>
    %168 = vector.shape_cast %167 : vector<17xf32> to vector<17x1xf32>
    %169 = vector.broadcast %168 : vector<17x1xf32> to vector<17x64xf32>
    %170 = arith.subf %166, %169 : vector<17x64xf32>
    %171 = math.exp %170 : vector<17x64xf32>
    %cst_80 = arith.constant dense<0.000000e+00> : vector<17xf32>
    %172 = vector.multi_reduction <add>, %171, %cst_80 [1] : vector<17x64xf32> to vector<17xf32>
    %173 = vector.shape_cast %172 : vector<17xf32> to vector<17x1xf32>
    %174 = tpu.reciprocal %173 {approx = true} : vector<17x1xf32> -> vector<17x1xf32>
    %175 = vector.broadcast %174 : vector<17x1xf32> to vector<17x64xf32>
    %176 = arith.mulf %171, %175 : vector<17x64xf32>
    %177 = vector.extract_strided_slice %9 {offsets = [0, 48], sizes = [64, 8], strides = [1, 1]} : vector<64x64xf32> to vector<64x8xf32>
    %cst_81 = arith.constant dense<0.000000e+00> : vector<17x8xf32>
    %178 = tpu.matmul %176, %177, %cst_81 {dimension_numbers = #tpu.dot_dimension_numbers<[1], [0], [0], [1], [0, 0, 1, 1], [], []>} : vector<17x64xf32>, vector<64x8xf32>, vector<17x8xf32> -> vector<17x8xf32>
    %c48 = arith.constant 48 : index
    %c0_82 = arith.constant 0 : index
    %179 = vector.load %arg10[%c48, %c0_82] : memref<64x64xf32, #tpu.memory_space<vmem>>, vector<8x64xf32>
    %cst_83 = arith.constant dense<0.000000e+00> : vector<17x64xf32>
    %180 = tpu.matmul %178, %179, %cst_83 {dimension_numbers = #tpu.dot_dimension_numbers<[1], [0], [0], [1], [0, 0, 1, 1], [], []>} : vector<17x8xf32>, vector<8x64xf32>, vector<17x64xf32> -> vector<17x64xf32>
    %181 = arith.addf %165, %180 : vector<17x64xf32>
    %182 = vector.extract_strided_slice %68 {offsets = [0, 448], sizes = [17, 64], strides = [1, 1]} : vector<17x512xf32> to vector<17x64xf32>
    %cst_84 = arith.constant dense<0xFF800000> : vector<17xf32>
    %183 = vector.multi_reduction <maximumf>, %182, %cst_84 [1] : vector<17x64xf32> to vector<17xf32>
    %184 = vector.shape_cast %183 : vector<17xf32> to vector<17x1xf32>
    %185 = vector.broadcast %184 : vector<17x1xf32> to vector<17x64xf32>
    %186 = arith.subf %182, %185 : vector<17x64xf32>
    %187 = math.exp %186 : vector<17x64xf32>
    %cst_85 = arith.constant dense<0.000000e+00> : vector<17xf32>
    %188 = vector.multi_reduction <add>, %187, %cst_85 [1] : vector<17x64xf32> to vector<17xf32>
    %189 = vector.shape_cast %188 : vector<17xf32> to vector<17x1xf32>
    %190 = tpu.reciprocal %189 {approx = true} : vector<17x1xf32> -> vector<17x1xf32>
    %191 = vector.broadcast %190 : vector<17x1xf32> to vector<17x64xf32>
    %192 = arith.mulf %187, %191 : vector<17x64xf32>
    %193 = vector.extract_strided_slice %9 {offsets = [0, 56], sizes = [64, 8], strides = [1, 1]} : vector<64x64xf32> to vector<64x8xf32>
    %cst_86 = arith.constant dense<0.000000e+00> : vector<17x8xf32>
    %194 = tpu.matmul %192, %193, %cst_86 {dimension_numbers = #tpu.dot_dimension_numbers<[1], [0], [0], [1], [0, 0, 1, 1], [], []>} : vector<17x64xf32>, vector<64x8xf32>, vector<17x8xf32> -> vector<17x8xf32>
    %c56 = arith.constant 56 : index
    %c0_87 = arith.constant 0 : index
    %195 = vector.load %arg10[%c56, %c0_87] : memref<64x64xf32, #tpu.memory_space<vmem>>, vector<8x64xf32>
    %cst_88 = arith.constant dense<0.000000e+00> : vector<17x64xf32>
    %196 = tpu.matmul %194, %195, %cst_88 {dimension_numbers = #tpu.dot_dimension_numbers<[1], [0], [0], [1], [0, 0, 1, 1], [], []>} : vector<17x8xf32>, vector<8x64xf32>, vector<17x64xf32> -> vector<17x64xf32>
    %197 = arith.addf %181, %196 : vector<17x64xf32>
    %c0_89 = arith.constant 0 : index
    %c0_90 = arith.constant 0 : index
    %198 = vector.load %arg11[%c0_89, %c0_90] : memref<1x64xf32, #tpu.memory_space<vmem>>, vector<1x64xf32>
    %199 = vector.broadcast %198 : vector<1x64xf32> to vector<17x64xf32>
    %200 = arith.addf %197, %199 : vector<17x64xf32>
    %c0_91 = arith.constant 0 : index
    %c0_92 = arith.constant 0 : index
    %c0_93 = arith.constant 0 : index
    %201 = vector.load %arg12[%c0_91, %c0_92, %c0_93] : memref<1x17x64xf32, #tpu.memory_space<vmem>>, vector<1x17x64xf32>
    %202 = vector.shape_cast %201 : vector<1x17x64xf32> to vector<17x64xf32>
    %203 = vector.shape_cast %200 : vector<17x64xf32> to vector<1x17x64xf32>
    tpu.vector_store %arg12[%c0_91, %c0_92, %c0_93], %203 {strides = array<i32>} : memref<1x17x64xf32, #tpu.memory_space<vmem>>, vector<1x17x64xf32>,
    return
  }
  func.func @transform_0(%arg0: i32) -> (i32, i32, i32) {
    %c0_i32 = arith.constant 0 : i32
    %c0_i32_0 = arith.constant 0 : i32
    %c0_i32_1 = arith.constant 0 : i32
    return %arg0, %c0_i32, %c0_i32_0 : i32, i32, i32
  }
  func.func @transform_1(%arg0: i32) -> (i32, i32, i32) {
    %c0_i32 = arith.constant 0 : i32
    %c0_i32_0 = arith.constant 0 : i32
    %c0_i32_1 = arith.constant 0 : i32
    return %arg0, %c0_i32, %c0_i32_0 : i32, i32, i32
  }
  func.func @transform_2(%arg0: i32) -> (i32, i32) {
    %c0_i32 = arith.constant 0 : i32
    %c0_i32_0 = arith.constant 0 : i32
    %c0_i32_1 = arith.constant 0 : i32
    return %c0_i32, %c0_i32_0 : i32, i32
  }
  func.func @transform_3(%arg0: i32) -> (i32, i32) {
    %c0_i32 = arith.constant 0 : i32
    %c0_i32_0 = arith.constant 0 : i32
    %c0_i32_1 = arith.constant 0 : i32
    return %c0_i32, %c0_i32_0 : i32, i32
  }
  func.func @transform_4(%arg0: i32) -> (i32, i32) {
    %c0_i32 = arith.constant 0 : i32
    %c0_i32_0 = arith.constant 0 : i32
    %c0_i32_1 = arith.constant 0 : i32
    return %c0_i32, %c0_i32_0 : i32, i32
  }
  func.func @transform_5(%arg0: i32) -> (i32, i32) {
    %c0_i32 = arith.constant 0 : i32
    %c0_i32_0 = arith.constant 0 : i32
    %c0_i32_1 = arith.constant 0 : i32
    return %c0_i32, %c0_i32_0 : i32, i32
  }
  func.func @transform_6(%arg0: i32) -> (i32, i32) {
    %c0_i32 = arith.constant 0 : i32
    %c0_i32_0 = arith.constant 0 : i32
    %c0_i32_1 = arith.constant 0 : i32
    return %c0_i32, %c0_i32_0 : i32, i32
  }
  func.func @transform_7(%arg0: i32) -> (i32, i32) {
    %c0_i32 = arith.constant 0 : i32
    %c0_i32_0 = arith.constant 0 : i32
    %c0_i32_1 = arith.constant 0 : i32
    return %c0_i32, %c0_i32_0 : i32, i32
  }
  func.func @transform_8(%arg0: i32) -> (i32, i32) {
    %c0_i32 = arith.constant 0 : i32
    %c0_i32_0 = arith.constant 0 : i32
    %c0_i32_1 = arith.constant 0 : i32
    return %c0_i32, %c0_i32_0 : i32, i32
  }
  func.func @transform_9(%arg0: i32) -> (i32, i32) {
    %c0_i32 = arith.constant 0 : i32
    %c0_i32_0 = arith.constant 0 : i32
    %c0_i32_1 = arith.constant 0 : i32
    return %c0_i32, %c0_i32_0 : i32, i32
  }
  func.func @transform_10(%arg0: i32) -> (i32, i32) {
    %c0_i32 = arith.constant 0 : i32
    %c0_i32_0 = arith.constant 0 : i32
    %c0_i32_1 = arith.constant 0 : i32
    return %c0_i32, %c0_i32_0 : i32, i32
  }
  func.func @transform_11(%arg0: i32) -> (i32, i32, i32) {
    %c0_i32 = arith.constant 0 : i32
    %c0_i32_0 = arith.constant 0 : i32
    %c0_i32_1 = arith.constant 0 : i32
    return %arg0, %c0_i32, %c0_i32_0 : i32, i32, i32
  }
}

</mosaic_0001>

<llo_original>
// kernel: tpu_custom_call.1
$region0: #{tpu_custom_call.1}
  #allocation0 [shape = 'u32[]', space=smem, size = 0x4, offset = 0x4, fixed_abs, tag = 'smem constant byte address 0x4 - core index']
  #allocation1 [shape = 'u32[144,128]{1,0:T(1,128)}', space=vmem, size = 0x12000, scoped, tag = 'internal scratch']
  %s0 = inlined_call_operand.vmem [shape: f32[2,17,64], index: 0, kind: input, shape index: {}]
  %s1 = inlined_call_operand.hbm [shape: f32[2,64,64], index: 1, kind: input, shape index: {}]
  %s2 = inlined_call_operand.vmem [shape: f32[64,64], index: 2, kind: input, shape index: {}]
  %s3 = inlined_call_operand.hbm [shape: f32[64,64], index: 3, kind: input, shape index: {}]
  %s4 = inlined_call_operand.hbm [shape: f32[64,64], index: 4, kind: input, shape index: {}]
  %s5 = inlined_call_operand.hbm [shape: f32[512,512], index: 5, kind: input, shape index: {}]
  %s6 = inlined_call_operand.vmem [shape: f32[1,512], index: 6, kind: input, shape index: {}]
  %s7 = inlined_call_operand.hbm [shape: f32[1,512], index: 7, kind: input, shape index: {}]
  %s8 = inlined_call_operand.vmem [shape: f32[17,17], index: 8, kind: input, shape index: {}]
  %s9 = inlined_call_operand.hbm [shape: f32[64,64], index: 9, kind: input, shape index: {}]
  %s10 = inlined_call_operand.vmem [shape: f32[1,64], index: 10, kind: input, shape index: {}]
  %s11 = inlined_call_operand.vmem [shape: f32[2,17,64], index: 11, kind: output, shape index: {}]
  %s12 = sld [smem:[#allocation0]]
  $region101: #{tpu_custom_call.1} parent=0
    _
  %s14 = ssub.s32 1, %s12
  %s15 = scalar_select 0, %s14, %s12
  $region1: #{tpu_custom_call.1} parent=0
    #allocation2 [shape = 'u8[65536]{0}', space=vmem, size = 0x10000, scoped, tag = 'input window, operand 1']
    #allocation3 [shape = 's32[2]{0}', space=sflag, size = 0x8, scoped, tag = 'scoped memory for tpu_custom_call.1']
    #allocation4 [shape = 'u8[32768]{0}', space=vmem, size = 0x8000, scoped, tag = 'input window, operand 3, single buffered']
    #allocation5 [shape = 's32[1]{0}', space=sflag, size = 0x4, scoped, tag = 'scoped memory for tpu_custom_call.1']
    #allocation6 [shape = 'u8[32768]{0}', space=vmem, size = 0x8000, scoped, tag = 'input window, operand 4, single buffered']
    #allocation7 [shape = 'u8[1048576]{0}', space=vmem, size = 0x100000, scoped, tag = 'input window, operand 5, single buffered']
    #allocation8 [shape = 's32[1]{0}', space=sflag, size = 0x4, scoped, tag = 'scoped memory for tpu_custom_call.1']
    #allocation9 [shape = 'u8[2048]{0}', space=vmem, size = 0x800, scoped, tag = 'input window, operand 7, single buffered']
    #allocation10 [shape = 'u8[32768]{0}', space=vmem, size = 0x8000, scoped, tag = 'input window, operand 9, single buffered']
    #allocation11 [shape = 's32[1]{0}', space=sflag, size = 0x4, scoped, tag = 'scoped memory for tpu_custom_call.1']
    %16 = vsyncpa [#allocation3], 0
    %s17 = scalar_lea.sflag [#allocation3], 1
    %18 = vsyncpa %s17, 0
    %19 = vsyncpa [#allocation5], 0
    %20 = vsyncpa [#allocation8], 0
    %21 = vsyncpa [#allocation11], 0
    loop: start=0, step=1, limit=4
    $region2: #{tpu_custom_call.1} parent=1 // loop_pre_header
      _
    $region3: #{tpu_custom_call.1} parent=1 // loop_header
      %s23 = sphi 0, %s27
      %p24 = scmp.ge.s32.totalorder %s23, 4
      %s33 = sphi 0, %s35
      %s36 = sphi 0, %s33
      %s37 = sphi 0, %s36
      %s53 = sphi 0, %s37
      %s59 = sphi 0, %s61
      %s62 = sphi 0, %s59
      %s63 = sphi 0, %s62
      %s79 = sphi 0, %s63
      %s83 = sphi 0, %s83
      %s85 = sphi 0, %s83
      %s86 = sphi 0, %s85
      %s100 = sphi 0, %s86
      %s104 = sphi 0, %s104
      %s106 = sphi 0, %s104
      %s107 = sphi 0, %s106
      %s121 = sphi 0, %s107
      %s125 = sphi 0, %s125
      %s127 = sphi 0, %s125
      %s128 = sphi 0, %s127
      %s142 = sphi 0, %s128
      %s146 = sphi 0, %s146
      %s148 = sphi 0, %s146
      %s149 = sphi 0, %s148
      %s163 = sphi 0, %s149
      %s167 = sphi 0, %s167
      %s169 = sphi 0, %s167
      %s170 = sphi 0, %s169
      %s184 = sphi 0, %s170
      %s188 = sphi 0, %s188
      %s190 = sphi 0, %s188
      %s191 = sphi 0, %s190
      %s205 = sphi 0, %s191
      %s209 = sphi 0, %s209
      %s211 = sphi 0, %s209
      %s212 = sphi 0, %s211
      %s226 = sphi 0, %s212
      %s230 = sphi 0, %s230
      %s232 = sphi 0, %s230
      %s233 = sphi 0, %s232
      %s247 = sphi 0, %s233
      %s251 = sphi 0, %s251
      %s253 = sphi 0, %s251
      %s254 = sphi 0, %s253
      %s268 = sphi 0, %s254
      %s274 = sphi 0, %s276
      %s277 = sphi 0, %s274
      %s278 = sphi 0, %s277
      %s294 = sphi 0, %s278
    $region4: #{tpu_custom_call.1} parent=1 // loop_header_branch
      %26 = sbr.rel (%p24) target = $region8
    $region5: #{tpu_custom_call.1} parent=1 // loop_body
      %s28 = ssub.s32 %s23, 1
      %s29 = ssub.s32 %s23, 2
      %s30 = sadd.s32 %s23, 1
      %s31 = ssub.s32 %s23, %s30
      %p32 = scmp.eq.s32.totalorder %s31, 0
      %s34 = sadd.s32 %s33, 1
      %s35 = scalar_select %p32, %s33, %s34
      %p38 = pneg %p32
      %p39 = scmp.eq.s32.totalorder %s23, 1
      %p40 = por %p38, %p39
      %p41 = scmp.ne.s32.totalorder %s33, %s36
      %p42 = scmp.eq.s32.totalorder %s23, 0
      %p43 = por %p41, %p42
      %p44 = scmp.ne.s32.totalorder %s33, %s36
      %p45 = scmp.eq.s32.totalorder %s28, 1
      %p46 = por %p44, %p45
      %p47 = scmp.ne.s32.totalorder %s36, %s37
      %p48 = scmp.eq.s32.totalorder %s28, 0
      %p49 = por %p47, %p48
      %p50 = scmp.ne.s32.totalorder %s36, %s37
      %p51 = scmp.eq.s32.totalorder %s29, 1
      %p52 = por %p50, %p51
      %p54 = scmp.ne.s32.totalorder %s37, %s53
      %p55 = scmp.eq.s32.totalorder %s29, 0
      %p56 = por %p54, %p55
      %s57 = ssub.s32 %s23, %s30
      %p58 = scmp.eq.s32.totalorder %s57, 0
      %s60 = sadd.s32 %s59, 1
      %s61 = scalar_select %p58, %s59, %s60
      %p64 = pneg %p58
      %p65 = scmp.eq.s32.totalorder %s23, 1
      %p66 = por %p64, %p65
      %p67 = scmp.ne.s32.totalorder %s59, %s62
      %p68 = scmp.eq.s32.totalorder %s23, 0
      %p69 = por %p67, %p68
      %p70 = scmp.ne.s32.totalorder %s59, %s62
      %p71 = scmp.eq.s32.totalorder %s28, 1
      %p72 = por %p70, %p71
      %p73 = scmp.ne.s32.totalorder %s62, %s63
      %p74 = scmp.eq.s32.totalorder %s28, 0
      %p75 = por %p73, %p74
      %p76 = scmp.ne.s32.totalorder %s62, %s63
      %p77 = scmp.eq.s32.totalorder %s29, 1
      %p78 = por %p76, %p77
      %p80 = scmp.ne.s32.totalorder %s63, %s79
      %p81 = scmp.eq.s32.totalorder %s29, 0
      %p82 = por %p80, %p81
      %s84 = sadd.s32 %s83, 1
      %p87 = scmp.eq.s32.totalorder %s23, 1
      %p88 = scmp.ne.s32.totalorder %s83, %s85
      %p89 = scmp.eq.s32.totalorder %s23, 0
      %p90 = por %p88, %p89
      %p91 = scmp.ne.s32.totalorder %s83, %s85
      %p92 = scmp.eq.s32.totalorder %s28, 1
      %p93 = por %p91, %p92
      %p94 = scmp.ne.s32.totalorder %s85, %s86
      %p95 = scmp.eq.s32.totalorder %s28, 0
      %p96 = por %p94, %p95
      %p97 = scmp.ne.s32.totalorder %s85, %s86
      %p98 = scmp.eq.s32.totalorder %s29, 1
      %p99 = por %p97, %p98
      %p101 = scmp.ne.s32.totalorder %s86, %s100
      %p102 = scmp.eq.s32.totalorder %s29, 0
      %p103 = por %p101, %p102
      %s105 = sadd.s32 %s104, 1
      %p108 = scmp.eq.s32.totalorder %s23, 1
      %p109 = scmp.ne.s32.totalorder %s104, %s106
      %p110 = scmp.eq.s32.totalorder %s23, 0
      %p111 = por %p109, %p110
      %p112 = scmp.ne.s32.totalorder %s104, %s106
      %p113 = scmp.eq.s32.totalorder %s28, 1
      %p114 = por %p112, %p113
      %p115 = scmp.ne.s32.totalorder %s106, %s107
      %p116 = scmp.eq.s32.totalorder %s28, 0
      %p117 = por %p115, %p116
      %p118 = scmp.ne.s32.totalorder %s106, %s107
      %p119 = scmp.eq.s32.totalorder %s29, 1
      %p120 = por %p118, %p119
      %p122 = scmp.ne.s32.totalorder %s107, %s121
      %p123 = scmp.eq.s32.totalorder %s29, 0
      %p124 = por %p122, %p123
      %s126 = sadd.s32 %s125, 1
      %p129 = scmp.eq.s32.totalorder %s23, 1
      %p130 = scmp.ne.s32.totalorder %s125, %s127
      %p131 = scmp.eq.s32.totalorder %s23, 0
      %p132 = por %p130, %p131
      %p133 = scmp.ne.s32.totalorder %s125, %s127
      %p134 = scmp.eq.s32.totalorder %s28, 1
      %p135 = por %p133, %p134
      %p136 = scmp.ne.s32.totalorder %s127, %s128
      %p137 = scmp.eq.s32.totalorder %s28, 0
      %p138 = por %p136, %p137
      %p139 = scmp.ne.s32.totalorder %s127, %s128
      %p140 = scmp.eq.s32.totalorder %s29, 1
      %p141 = por %p139, %p140
      %p143 = scmp.ne.s32.totalorder %s128, %s142
      %p144 = scmp.eq.s32.totalorder %s29, 0
      %p145 = por %p143, %p144
      %s147 = sadd.s32 %s146, 1
      %p150 = scmp.eq.s32.totalorder %s23, 1
      %p151 = scmp.ne.s32.totalorder %s146, %s148
      %p152 = scmp.eq.s32.totalorder %s23, 0
      %p153 = por %p151, %p152
      %p154 = scmp.ne.s32.totalorder %s146, %s148
      %p155 = scmp.eq.s32.totalorder %s28, 1
      %p156 = por %p154, %p155
      %p157 = scmp.ne.s32.totalorder %s148, %s149
      %p158 = scmp.eq.s32.totalorder %s28, 0
      %p159 = por %p157, %p158
      %p160 = scmp.ne.s32.totalorder %s148, %s149
      %p161 = scmp.eq.s32.totalorder %s29, 1
      %p162 = por %p160, %p161
      %p164 = scmp.ne.s32.totalorder %s149, %s163
      %p165 = scmp.eq.s32.totalorder %s29, 0
      %p166 = por %p164, %p165
      %s168 = sadd.s32 %s167, 1
      %p171 = scmp.eq.s32.totalorder %s23, 1
      %p172 = scmp.ne.s32.totalorder %s167, %s169
      %p173 = scmp.eq.s32.totalorder %s23, 0
      %p174 = por %p172, %p173
      %p175 = scmp.ne.s32.totalorder %s167, %s169
      %p176 = scmp.eq.s32.totalorder %s28, 1
      %p177 = por %p175, %p176
      %p178 = scmp.ne.s32.totalorder %s169, %s170
      %p179 = scmp.eq.s32.totalorder %s28, 0
      %p180 = por %p178, %p179
      %p181 = scmp.ne.s32.totalorder %s169, %s170
      %p182 = scmp.eq.s32.totalorder %s29, 1
      %p183 = por %p181, %p182
      %p185 = scmp.ne.s32.totalorder %s170, %s184
      %p186 = scmp.eq.s32.totalorder %s29, 0
      %p187 = por %p185, %p186
      %s189 = sadd.s32 %s188, 1
      %p192 = scmp.eq.s32.totalorder %s23, 1
      %p193 = scmp.ne.s32.totalorder %s188, %s190
      %p194 = scmp.eq.s32.totalorder %s23, 0
      %p195 = por %p193, %p194
      %p196 = scmp.ne.s32.totalorder %s188, %s190
      %p197 = scmp.eq.s32.totalorder %s28, 1
      %p198 = por %p196, %p197
      %p199 = scmp.ne.s32.totalorder %s190, %s191
      %p200 = scmp.eq.s32.totalorder %s28, 0
      %p201 = por %p199, %p200
      %p202 = scmp.ne.s32.totalorder %s190, %s191
      %p203 = scmp.eq.s32.totalorder %s29, 1
      %p204 = por %p202, %p203
      %p206 = scmp.ne.s32.totalorder %s191, %s205
      %p207 = scmp.eq.s32.totalorder %s29, 0
      %p208 = por %p206, %p207
      %s210 = sadd.s32 %s209, 1
      %p213 = scmp.eq.s32.totalorder %s23, 1
      %p214 = scmp.ne.s32.totalorder %s209, %s211
      %p215 = scmp.eq.s32.totalorder %s23, 0
      %p216 = por %p214, %p215
      %p217 = scmp.ne.s32.totalorder %s209, %s211
      %p218 = scmp.eq.s32.totalorder %s28, 1
      %p219 = por %p217, %p218
      %p220 = scmp.ne.s32.totalorder %s211, %s212
      %p221 = scmp.eq.s32.totalorder %s28, 0
      %p222 = por %p220, %p221
      %p223 = scmp.ne.s32.totalorder %s211, %s212
      %p224 = scmp.eq.s32.totalorder %s29, 1
      %p225 = por %p223, %p224
      %p227 = scmp.ne.s32.totalorder %s212, %s226
      %p228 = scmp.eq.s32.totalorder %s29, 0
      %p229 = por %p227, %p228
      %s231 = sadd.s32 %s230, 1
      %p234 = scmp.eq.s32.totalorder %s23, 1
      %p235 = scmp.ne.s32.totalorder %s230, %s232
      %p236 = scmp.eq.s32.totalorder %s23, 0
      %p237 = por %p235, %p236
      %p238 = scmp.ne.s32.totalorder %s230, %s232
      %p239 = scmp.eq.s32.totalorder %s28, 1
      %p240 = por %p238, %p239
      %p241 = scmp.ne.s32.totalorder %s232, %s233
      %p242 = scmp.eq.s32.totalorder %s28, 0
      %p243 = por %p241, %p242
      %p244 = scmp.ne.s32.totalorder %s232, %s233
      %p245 = scmp.eq.s32.totalorder %s29, 1
      %p246 = por %p244, %p245
      %p248 = scmp.ne.s32.totalorder %s233, %s247
      %p249 = scmp.eq.s32.totalorder %s29, 0
      %p250 = por %p248, %p249
      %s252 = sadd.s32 %s251, 1
      %p255 = scmp.eq.s32.totalorder %s23, 1
      %p256 = scmp.ne.s32.totalorder %s251, %s253
      %p257 = scmp.eq.s32.totalorder %s23, 0
      %p258 = por %p256, %p257
      %p259 = scmp.ne.s32.totalorder %s251, %s253
      %p260 = scmp.eq.s32.totalorder %s28, 1
      %p261 = por %p259, %p260
      %p262 = scmp.ne.s32.totalorder %s253, %s254
      %p263 = scmp.eq.s32.totalorder %s28, 0
      %p264 = por %p262, %p263
      %p265 = scmp.ne.s32.totalorder %s253, %s254
      %p266 = scmp.eq.s32.totalorder %s29, 1
      %p267 = por %p265, %p266
      %p269 = scmp.ne.s32.totalorder %s254, %s268
      %p270 = scmp.eq.s32.totalorder %s29, 0
      %p271 = por %p269, %p270
      %s272 = ssub.s32 %s23, %s30
      %p273 = scmp.eq.s32.totalorder %s272, 0
      %s275 = sadd.s32 %s274, 1
      %s276 = scalar_select %p273, %s274, %s275
      %p279 = pneg %p273
      %p280 = scmp.eq.s32.totalorder %s23, 1
      %p281 = por %p279, %p280
      %p282 = scmp.ne.s32.totalorder %s274, %s277
      %p283 = scmp.eq.s32.totalorder %s23, 0
      %p284 = por %p282, %p283
      %p285 = scmp.ne.s32.totalorder %s274, %s277
      %p286 = scmp.eq.s32.totalorder %s28, 1
      %p287 = por %p285, %p286
      %p288 = scmp.ne.s32.totalorder %s277, %s278
      %p289 = scmp.eq.s32.totalorder %s28, 0
      %p290 = por %p288, %p289
      %p291 = scmp.ne.s32.totalorder %s277, %s278
      %p292 = scmp.eq.s32.totalorder %s29, 1
      %p293 = por %p291, %p292
      %p295 = scmp.ne.s32.totalorder %s278, %s294
      %p296 = scmp.eq.s32.totalorder %s29, 0
      %p297 = por %p295, %p296
      %p298 = scmp.le.s32.totalorder 1, %s23
      %p299 = scmp.lt.s32.totalorder %s23, 3
      %p300 = pnand %p298, %p299
      %p301 = pneg %p300
      // Predicated region
      $region9: #{tpu_custom_call.1} parent=5 // pred_check
        _
      $region10: #{tpu_custom_call.1} parent=5 // pred_check_branch
        %303 = sbr.rel (%p300) target = $region12
      $region11: #{tpu_custom_call.1} parent=5 // pred_region
        %s304 = ssub.s32 %s23, 1
        // Predicated region
        $region13: #{tpu_custom_call.1} parent=11 // pred_check
          %p305 = pneg %p96
        $region14: #{tpu_custom_call.1} parent=11 // pred_check_branch
          %307 = sbr.rel (%p305) target = $region16
        $region15: #{tpu_custom_call.1} parent=11 // pred_region
          _
        $region16: #{tpu_custom_call.1} parent=11 // pred_fallthru
          _
        // Predicated region
        $region17: #{tpu_custom_call.1} parent=11 // pred_check
          %p308 = pneg %p117
        $region18: #{tpu_custom_call.1} parent=11 // pred_check_branch
          %310 = sbr.rel (%p308) target = $region20
        $region19: #{tpu_custom_call.1} parent=11 // pred_region
          %s312 = ssub.s32 1024, 1024
          %313 = vsyncadd [#allocation5], %s312
          %s314 = sshll.u32 [#allocation4], 4
          %s315 = int_to_ptr.vmem [resolvable:$true] %s314
          %320 = dma.hbm_to_vmem [thread:$0]  %s3, 1024, %s315, [#allocation5], 128, 128, 8
        $region20: #{tpu_custom_call.1} parent=11 // pred_fallthru
          _
        // Predicated region
        $region21: #{tpu_custom_call.1} parent=11 // pred_check
          %p321 = pneg %p138
        $region22: #{tpu_custom_call.1} parent=11 // pred_check_branch
          %323 = sbr.rel (%p321) target = $region24
        $region23: #{tpu_custom_call.1} parent=11 // pred_region
          %s325 = ssub.s32 1024, 1024
          %326 = vsyncadd [#allocation5], %s325
          %s327 = sshll.u32 [#allocation6], 4
          %s328 = int_to_ptr.vmem [resolvable:$true] %s327
          %333 = dma.hbm_to_vmem [thread:$0]  %s4, 1024, %s328, [#allocation5], 128, 128, 8
        $region24: #{tpu_custom_call.1} parent=11 // pred_fallthru
          _
        // Predicated region
        $region25: #{tpu_custom_call.1} parent=11 // pred_check
          %p334 = pneg %p159
        $region26: #{tpu_custom_call.1} parent=11 // pred_check_branch
          %336 = sbr.rel (%p334) target = $region28
        $region27: #{tpu_custom_call.1} parent=11 // pred_region
          %s338 = ssub.s32 32768, 32768
          %339 = vsyncadd [#allocation8], %s338
          %s340 = sshll.u32 [#allocation7], 4
          %s341 = int_to_ptr.vmem [resolvable:$true] %s340
          %346 = dma.hbm_to_vmem [thread:$0]  %s5, 32768, %s341, [#allocation8], 512, 512, 32
        $region28: #{tpu_custom_call.1} parent=11 // pred_fallthru
          _
        // Predicated region
        $region29: #{tpu_custom_call.1} parent=11 // pred_check
          %p347 = pneg %p180
        $region30: #{tpu_custom_call.1} parent=11 // pred_check_branch
          %349 = sbr.rel (%p347) target = $region32
        $region31: #{tpu_custom_call.1} parent=11 // pred_region
          _
        $region32: #{tpu_custom_call.1} parent=11 // pred_fallthru
          _
        // Predicated region
        $region33: #{tpu_custom_call.1} parent=11 // pred_check
          %p350 = pneg %p201
        $region34: #{tpu_custom_call.1} parent=11 // pred_check_branch
          %352 = sbr.rel (%p350) target = $region36
        $region35: #{tpu_custom_call.1} parent=11 // pred_region
          %s354 = ssub.s32 64, 64
          %355 = vsyncadd [#allocation8], %s354
          %s357 = sshll.u32 [#allocation9], 4
          %s358 = int_to_ptr.vmem [resolvable:$true] %s357
          %360 = dma.hbm_to_vmem [thread:$0]  %s7, 64, %s358, [#allocation8]
        $region36: #{tpu_custom_call.1} parent=11 // pred_fallthru
          _
        // Predicated region
        $region37: #{tpu_custom_call.1} parent=11 // pred_check
          %p361 = pneg %p222
        $region38: #{tpu_custom_call.1} parent=11 // pred_check_branch
          %363 = sbr.rel (%p361) target = $region40
        $region39: #{tpu_custom_call.1} parent=11 // pred_region
          _
        $region40: #{tpu_custom_call.1} parent=11 // pred_fallthru
          _
        // Predicated region
        $region41: #{tpu_custom_call.1} parent=11 // pred_check
          %p364 = pneg %p243
        $region42: #{tpu_custom_call.1} parent=11 // pred_check_branch
          %366 = sbr.rel (%p364) target = $region44
        $region43: #{tpu_custom_call.1} parent=11 // pred_region
          %s368 = ssub.s32 1024, 1024
          %369 = vsyncadd [#allocation11], %s368
          %s370 = sshll.u32 [#allocation10], 4
          %s371 = int_to_ptr.vmem [resolvable:$true] %s370
          %376 = dma.hbm_to_vmem [thread:$0]  %s9, 1024, %s371, [#allocation11], 128, 128, 8
        $region44: #{tpu_custom_call.1} parent=11 // pred_fallthru
          _
        // Predicated region
        $region45: #{tpu_custom_call.1} parent=11 // pred_check
          %p377 = pneg %p264
        $region46: #{tpu_custom_call.1} parent=11 // pred_check_branch
          %379 = sbr.rel (%p377) target = $region48
        $region47: #{tpu_custom_call.1} parent=11 // pred_region
          _
        $region48: #{tpu_custom_call.1} parent=11 // pred_fallthru
          _
      $region12: #{tpu_custom_call.1} parent=5 // pred_fallthru
        _
      %p380 = scmp.lt.s32.totalorder %s23, 2
      // Predicated region
      $region49: #{tpu_custom_call.1} parent=5 // pred_check
        %p381 = pneg %p380
      $region50: #{tpu_custom_call.1} parent=5 // pred_check_branch
        %383 = sbr.rel (%p381) target = $region52
      $region51: #{tpu_custom_call.1} parent=5 // pred_region
        // Predicated region
        $region53: #{tpu_custom_call.1} parent=51 // pred_check
          %p384 = pneg %p43
        $region54: #{tpu_custom_call.1} parent=51 // pred_check_branch
          %386 = sbr.rel (%p384) target = $region56
        $region55: #{tpu_custom_call.1} parent=51 // pred_region
          %p387 = scmp.lt.s32.totalorder %s23, 1
          %s388 = scalar_select %p387, %s23, 1
          %s389 = smul.addr %s388, 3
          %s390 = smul.addr %s389, 8
          %s391 = scalar_lea.vmem %s0, %s390
        $region56: #{tpu_custom_call.1} parent=51 // pred_fallthru
          _
        // Predicated region
        $region57: #{tpu_custom_call.1} parent=51 // pred_check
          %p392 = pneg %p69
        $region58: #{tpu_custom_call.1} parent=51 // pred_check_branch
          %394 = sbr.rel (%p392) target = $region60
        $region59: #{tpu_custom_call.1} parent=51 // pred_region
          %s395 = sand.u32 %s59, 1
          %s396 = scalar_lea.sflag [#allocation3], %s395
          %s397 = sand.u32 %s59, 1
          %s398 = smul.addr %s397, 64
          %s399 = scalar_lea.vmem [#allocation2], %s398
          %s401 = ssub.s32 1024, 1024
          %402 = vsyncadd %s396, %s401
          %s403 = smul.addr %s23, 8
          %s404 = smul.addr %s403, 128
          %s405 = scalar_lea.hbm %s1, %s404
          %s406 = sshll.u32 %s399, 4
          %s407 = int_to_ptr.vmem [resolvable:$true] %s406
          %412 = dma.hbm_to_vmem [thread:$0]  %s405, 1024, %s407, %s396, 128, 128, 8
        $region60: #{tpu_custom_call.1} parent=51 // pred_fallthru
          _
      $region52: #{tpu_custom_call.1} parent=5 // pred_fallthru
        _
      %p413 = scmp.le.s32.totalorder 1, %s23
      %p414 = scmp.lt.s32.totalorder %s23, 3
      %p415 = pnand %p413, %p414
      %p416 = pneg %p415
      // Predicated region
      $region61: #{tpu_custom_call.1} parent=5 // pred_check
        _
      $region62: #{tpu_custom_call.1} parent=5 // pred_check_branch
        %418 = sbr.rel (%p415) target = $region64
      $region63: #{tpu_custom_call.1} parent=5 // pred_region
        %s419 = ssub.s32 %s23, 1
        %s420 = sand.u32 %s62, 1
        %s421 = scalar_lea.sflag [#allocation3], %s420
        %s422 = sand.u32 %s62, 1
        %s423 = smul.addr %s422, 64
        %s424 = scalar_lea.vmem [#allocation2], %s423
        // Predicated region
        $region65: #{tpu_custom_call.1} parent=63 // pred_check
          %p425 = pneg %p75
        $region66: #{tpu_custom_call.1} parent=63 // pred_check_branch
          %427 = sbr.rel (%p425) target = $region68
        $region67: #{tpu_custom_call.1} parent=63 // pred_region
          %428 = dma.done %s421, 1024
        $region68: #{tpu_custom_call.1} parent=63 // pred_fallthru
          _
        // Predicated region
        $region69: #{tpu_custom_call.1} parent=63 // pred_check
          %p429 = pneg %p117
        $region70: #{tpu_custom_call.1} parent=63 // pred_check_branch
          %431 = sbr.rel (%p429) target = $region72
        $region71: #{tpu_custom_call.1} parent=63 // pred_region
          %432 = dma.done [#allocation5], 1024
        $region72: #{tpu_custom_call.1} parent=63 // pred_fallthru
          _
        // Predicated region
        $region73: #{tpu_custom_call.1} parent=63 // pred_check
          %p433 = pneg %p138
        $region74: #{tpu_custom_call.1} parent=63 // pred_check_branch
          %435 = sbr.rel (%p433) target = $region76
        $region75: #{tpu_custom_call.1} parent=63 // pred_region
          %436 = dma.done [#allocation5], 1024
        $region76: #{tpu_custom_call.1} parent=63 // pred_fallthru
          _
        // Predicated region
        $region77: #{tpu_custom_call.1} parent=63 // pred_check
          %p437 = pneg %p159
        $region78: #{tpu_custom_call.1} parent=63 // pred_check_branch
          %439 = sbr.rel (%p437) target = $region80
        $region79: #{tpu_custom_call.1} parent=63 // pred_region
          %440 = dma.done [#allocation8], 32768
        $region80: #{tpu_custom_call.1} parent=63 // pred_fallthru
          _
        // Predicated region
        $region81: #{tpu_custom_call.1} parent=63 // pred_check
          %p441 = pneg %p201
        $region82: #{tpu_custom_call.1} parent=63 // pred_check_branch
          %443 = sbr.rel (%p441) target = $region84
        $region83: #{tpu_custom_call.1} parent=63 // pred_region
          %444 = dma.done [#allocation8], 64
        $region84: #{tpu_custom_call.1} parent=63 // pred_fallthru
          _
        // Predicated region
        $region85: #{tpu_custom_call.1} parent=63 // pred_check
          %p445 = pneg %p243
        $region86: #{tpu_custom_call.1} parent=63 // pred_check_branch
          %447 = sbr.rel (%p445) target = $region88
        $region87: #{tpu_custom_call.1} parent=63 // pred_region
          %448 = dma.done [#allocation11], 1024
        $region88: #{tpu_custom_call.1} parent=63 // pred_fallthru
          _
        %p449 = scmp.lt.s32.totalorder %s28, 1
        %s450 = scalar_select %p449, %s28, 1
        %s451 = smul.addr %s450, 3
        %s452 = smul.addr %s451, 8
        %s453 = scalar_lea.vmem %s0, %s452
        %p454 = pneg %p49
        %p455 = pneg %p46
        %s456 = sand.u32 %s62, 1
        %s457 = scalar_lea.sflag [#allocation3], %s456
        %s458 = sand.u32 %s62, 1
        %s459 = smul.addr %s458, 64
        %s460 = scalar_lea.vmem [#allocation2], %s459
        %p461 = pneg %p75
        %p462 = pneg %p72
        %p463 = pneg %p96
        %p464 = pneg %p93
        %p465 = pneg %p117
        %p466 = pneg %p114
        %p467 = pneg %p138
        %p468 = pneg %p135
        %p469 = pneg %p159
        %p470 = pneg %p156
        %p471 = pneg %p180
        %p472 = pneg %p177
        %p473 = pneg %p201
        %p474 = pneg %p198
        %p475 = pneg %p222
        %p476 = pneg %p219
        %p477 = pneg %p243
        %p478 = pneg %p240
        %p479 = pneg %p264
        %p480 = pneg %p261
        %p481 = pneg %p290
        %p482 = pneg %p287
        %p483 = scmp.lt.s32.totalorder %s28, 1
        %s484 = scalar_select %p483, %s28, 1
        %s485 = smul.addr %s484, 3
        %s486 = smul.addr %s485, 8
        %s487 = scalar_lea.vmem %s11, %s486
        %p488 = scmp.lt.s32.totalorder %s28, 1
        %s489 = scalar_select %p488, %s28, 1
        %s490 = smul.addr %s489, 3
        %s491 = smul.addr %s490, 8
        %s492 = scalar_lea.vmem %s0, %s491
        %p493 = scmp.lt.s32.totalorder %s28, 1
        %s494 = scalar_select %p493, %s28, 1
        %s495 = smul.addr %s494, 3
        %s496 = smul.addr %s495, 8
        %s497 = scalar_lea.vmem %s11, %s496
        %v498 = vld [vmem:[%s492] sm:$0xff]
        %v499 = vld [vmem:[%s492 + $0x8] sm:$0xff]
        %v500 = vld [vmem:[%s492 + $0x10] sm:$0x1]
        %v501 = vld [vmem:[%s424] sm:$0xff]
        %v502 = vld [vmem:[%s424 + $0x8] sm:$0xff]
        %v503 = vld [vmem:[%s424 + $0x10] sm:$0xff]
        %v504 = vld [vmem:[%s424 + $0x18] sm:$0xff]
        %v505 = vld [vmem:[%s424 + $0x20] sm:$0xff]
        %v506 = vld [vmem:[%s424 + $0x28] sm:$0xff]
        %v507 = vld [vmem:[%s424 + $0x30] sm:$0xff]
        %v508 = vld [vmem:[%s424 + $0x38] sm:$0xff]
        %v509 = vld [vmem:[%s2] sm:$0xff]
        %v510 = vld [vmem:[%s2 + $0x8] sm:$0xff]
        %v511 = vld [vmem:[%s2 + $0x10] sm:$0xff]
        %v512 = vld [vmem:[%s2 + $0x18] sm:$0xff]
        %v513 = vld [vmem:[%s2 + $0x20] sm:$0xff]
        %v514 = vld [vmem:[%s2 + $0x28] sm:$0xff]
        %v515 = vld [vmem:[%s2 + $0x30] sm:$0xff]
        %v516 = vld [vmem:[%s2 + $0x38] sm:$0xff]
        %vm517 = vcmask 523264
        %v519 = vsel %vm517, %v498, 0
        %v522 = vsel %vm517, %v499, 0
        %v525 = vsel %vm517, %v500, 0
        %527 = vmatprep.subr.mxu0 0.0
        %528 = vmatpush1.msra.mxu0 0.0
        %529 = vmatprep.subr.mxu0 0.0
        %530 = vmatpush1.msra.mxu0 0.0
        %531 = vmatprep.subr.mxu0 0.0
        %532 = vmatpush1.msra.mxu0 0.0
        %533 = vmatprep.subr.mxu0 0.0
        %534 = vmatpush1.msra.mxu0 0.0
        %535 = vmatprep.subr.mxu0 0.0
        %536 = vmatpush1.msra.mxu0 0.0
        %537 = vmatprep.subr.mxu0 0.0
        %538 = vmatpush1.msra.mxu0 0.0
        %539 = vmatprep.subr.mxu0 0.0
        %540 = vmatpush1.msra.mxu0 0.0
        %541 = vmatprep.subr.mxu0 0.0
        %542 = vmatpush1.msra.mxu0 0.0
        %543 = vmatprep.subr.mxu0 0.0
        %544 = vmatpush1.msra.mxu0 %v516
        %545 = vmatprep.subr.mxu0 0.0
        %546 = vmatpush1.msra.mxu0 %v515
        %547 = vmatprep.subr.mxu0 0.0
        %548 = vmatpush1.msra.mxu0 %v514
        %549 = vmatprep.subr.mxu0 0.0
        %550 = vmatpush1.msra.mxu0 %v513
        %551 = vmatprep.subr.mxu0 0.0
        %552 = vmatpush1.msra.mxu0 %v512
        %553 = vmatprep.subr.mxu0 0.0
        %554 = vmatpush1.msra.mxu0 %v511
        %555 = vmatprep.subr.mxu0 0.0
        %556 = vmatpush1.msra.mxu0 %v510
        %557 = vmatprep.subr.mxu0 0.0
        %558 = vmatpush1.msra.mxu0 %v509
        %559 = vmatprep.subr.mxu0 0.0
        %560 = vmatpush2.msra.mxu0 0.0
        %561 = vmatprep.subr.mxu0 0.0
        %562 = vmatpush2.msra.mxu0 0.0
        %563 = vmatprep.subr.mxu0 0.0
        %564 = vmatpush2.msra.mxu0 0.0
        %565 = vmatprep.subr.mxu0 0.0
        %566 = vmatpush2.msra.mxu0 0.0
        %567 = vmatprep.subr.mxu0 0.0
        %568 = vmatpush2.msra.mxu0 0.0
        %569 = vmatprep.subr.mxu0 0.0
        %570 = vmatpush2.msra.mxu0 0.0
        %571 = vmatprep.subr.mxu0 0.0
        %572 = vmatpush2.msra.mxu0 0.0
        %573 = vmatprep.subr.mxu0 0.0
        %574 = vmatpush2.msra.mxu0 0.0
        %575 = vmatprep.subr.mxu0 0.0
        %576 = vmatpush2.msra.mxu0 0.0
        %577 = vmatprep.subr.mxu0 0.0
        %578 = vmatpush2.msra.mxu0 0.0
        %579 = vmatprep.subr.mxu0 0.0
        %580 = vmatpush2.msra.mxu0 0.0
        %581 = vmatprep.subr.mxu0 0.0
        %582 = vmatpush2.msra.mxu0 0.0
        %583 = vmatprep.subr.mxu0 0.0
        %584 = vmatpush2.msra.mxu0 0.0
        %585 = vmatprep.subr.mxu0 0.0
        %586 = vmatpush2.msra.mxu0 0.0
        %587 = vmatprep.subr.mxu0 0.0
        %588 = vmatpush2.msra.mxu0 0.0
        %589 = vmatprep.subr.mxu0 0.0
        %590 = vmatpush2.msra.mxu0 0.0
        %591 = vmatprep.mubr.f32.mxu0 0.0
        %592 = vmatmul.mubr.f32.gmra.mxu0 %v519
        %v593 = vpop.f32.mrf.mxu0
        %v594 = vadd.f32 0.0, %v593
        %v595 = vpop.f32.mrf.mxu0
        %596 = vmatprep.mubr.f32.mxu0 0.0
        %597 = vmatmul.mubr.f32.gmra.mxu0 %v522
        %v598 = vpop.f32.mrf.mxu0
        %v599 = vadd.f32 0.0, %v598
        %v600 = vpop.f32.mrf.mxu0
        %601 = vmatprep.mubr.f32.mxu0 0.0
        %602 = vmatmul.mubr.f32.gmra.mxu0 %v525
        %v603 = vpop.f32.mrf.mxu0
        %v604 = vadd.f32 0.0, %v603
        %v605 = vpop.f32.mrf.mxu0
        %606 = vdwg.mxu0
        %v607 = vld [vmem:[#allocation4] sm:$0xff]
        %v608 = vld [vmem:[#allocation4 + $0x8] sm:$0xff]
        %v609 = vld [vmem:[#allocation4 + $0x10] sm:$0xff]
        %v610 = vld [vmem:[#allocation4 + $0x18] sm:$0xff]
        %v611 = vld [vmem:[#allocation4 + $0x20] sm:$0xff]
        %v612 = vld [vmem:[#allocation4 + $0x28] sm:$0xff]
        %v613 = vld [vmem:[#allocation4 + $0x30] sm:$0xff]
        %v614 = vld [vmem:[#allocation4 + $0x38] sm:$0xff]
        %v616 = vsel %vm517, %v501, 0
        %v619 = vsel %vm517, %v502, 0
        %v622 = vsel %vm517, %v503, 0
        %v625 = vsel %vm517, %v504, 0
        %v628 = vsel %vm517, %v505, 0
        %v631 = vsel %vm517, %v506, 0
        %v634 = vsel %vm517, %v507, 0
        %v637 = vsel %vm517, %v508, 0
        %639 = vmatprep.subr.mxu0 0.0
        %640 = vmatpush1.msra.mxu0 0.0
        %641 = vmatprep.subr.mxu0 0.0
        %642 = vmatpush1.msra.mxu0 0.0
        %643 = vmatprep.subr.mxu0 0.0
        %644 = vmatpush1.msra.mxu0 0.0
        %645 = vmatprep.subr.mxu0 0.0
        %646 = vmatpush1.msra.mxu0 0.0
        %647 = vmatprep.subr.mxu0 0.0
        %648 = vmatpush1.msra.mxu0 0.0
        %649 = vmatprep.subr.mxu0 0.0
        %650 = vmatpush1.msra.mxu0 0.0
        %651 = vmatprep.subr.mxu0 0.0
        %652 = vmatpush1.msra.mxu0 0.0
        %653 = vmatprep.subr.mxu0 0.0
        %654 = vmatpush1.msra.mxu0 0.0
        %655 = vmatprep.subr.mxu0 0.0
        %656 = vmatpush1.msra.mxu0 %v614
        %657 = vmatprep.subr.mxu0 0.0
        %658 = vmatpush1.msra.mxu0 %v613
        %659 = vmatprep.subr.mxu0 0.0
        %660 = vmatpush1.msra.mxu0 %v612
        %661 = vmatprep.subr.mxu0 0.0
        %662 = vmatpush1.msra.mxu0 %v611
        %663 = vmatprep.subr.mxu0 0.0
        %664 = vmatpush1.msra.mxu0 %v610
        %665 = vmatprep.subr.mxu0 0.0
        %666 = vmatpush1.msra.mxu0 %v609
        %667 = vmatprep.subr.mxu0 0.0
        %668 = vmatpush1.msra.mxu0 %v608
        %669 = vmatprep.subr.mxu0 0.0
        %670 = vmatpush1.msra.mxu0 %v607
        %671 = vmatprep.subr.mxu0 0.0
        %672 = vmatpush2.msra.mxu0 0.0
        %673 = vmatprep.subr.mxu0 0.0
        %674 = vmatpush2.msra.mxu0 0.0
        %675 = vmatprep.subr.mxu0 0.0
        %676 = vmatpush2.msra.mxu0 0.0
        %677 = vmatprep.subr.mxu0 0.0
        %678 = vmatpush2.msra.mxu0 0.0
        %679 = vmatprep.subr.mxu0 0.0
        %680 = vmatpush2.msra.mxu0 0.0
        %681 = vmatprep.subr.mxu0 0.0
        %682 = vmatpush2.msra.mxu0 0.0
        %683 = vmatprep.subr.mxu0 0.0
        %684 = vmatpush2.msra.mxu0 0.0
        %685 = vmatprep.subr.mxu0 0.0
        %686 = vmatpush2.msra.mxu0 0.0
        %687 = vmatprep.subr.mxu0 0.0
        %688 = vmatpush2.msra.mxu0 0.0
        %689 = vmatprep.subr.mxu0 0.0
        %690 = vmatpush2.msra.mxu0 0.0
        %691 = vmatprep.subr.mxu0 0.0
        %692 = vmatpush2.msra.mxu0 0.0
        %693 = vmatprep.subr.mxu0 0.0
        %694 = vmatpush2.msra.mxu0 0.0
        %695 = vmatprep.subr.mxu0 0.0
        %696 = vmatpush2.msra.mxu0 0.0
        %697 = vmatprep.subr.mxu0 0.0
        %698 = vmatpush2.msra.mxu0 0.0
        %699 = vmatprep.subr.mxu0 0.0
        %700 = vmatpush2.msra.mxu0 0.0
        %701 = vmatprep.subr.mxu0 0.0
        %702 = vmatpush2.msra.mxu0 0.0
        %703 = vmatprep.mubr.f32.mxu0 0.0
        %704 = vmatmul.mubr.f32.gmra.mxu0 %v616
        %v705 = vpop.f32.mrf.mxu0
        %v706 = vadd.f32 0.0, %v705
        %v707 = vpop.f32.mrf.mxu0
        %708 = vmatprep.mubr.f32.mxu0 0.0
        %709 = vmatmul.mubr.f32.gmra.mxu0 %v619
        %v710 = vpop.f32.mrf.mxu0
        %v711 = vadd.f32 0.0, %v710
        %v712 = vpop.f32.mrf.mxu0
        %713 = vmatprep.mubr.f32.mxu0 0.0
        %714 = vmatmul.mubr.f32.gmra.mxu0 %v622
        %v715 = vpop.f32.mrf.mxu0
        %v716 = vadd.f32 0.0, %v715
        %v717 = vpop.f32.mrf.mxu0
        %718 = vmatprep.mubr.f32.mxu0 0.0
        %719 = vmatmul.mubr.f32.gmra.mxu0 %v625
        %v720 = vpop.f32.mrf.mxu0
        %v721 = vadd.f32 0.0, %v720
        %v722 = vpop.f32.mrf.mxu0
        %723 = vmatprep.mubr.f32.mxu0 0.0
        %724 = vmatmul.mubr.f32.gmra.mxu0 %v628
        %v725 = vpop.f32.mrf.mxu0
        %v726 = vadd.f32 0.0, %v725
        %v727 = vpop.f32.mrf.mxu0
        %728 = vmatprep.mubr.f32.mxu0 0.0
        %729 = vmatmul.mubr.f32.gmra.mxu0 %v631
        %v730 = vpop.f32.mrf.mxu0
        %v731 = vadd.f32 0.0, %v730
        %v732 = vpop.f32.mrf.mxu0
        %733 = vmatprep.mubr.f32.mxu0 0.0
        %734 = vmatmul.mubr.f32.gmra.mxu0 %v634
        %v735 = vpop.f32.mrf.mxu0
        %v736 = vadd.f32 0.0, %v735
        %v737 = vpop.f32.mrf.mxu0
        %738 = vmatprep.mubr.f32.mxu0 0.0
        %739 = vmatmul.mubr.f32.gmra.mxu0 %v637
        %v740 = vpop.f32.mrf.mxu0
        %v741 = vadd.f32 0.0, %v740
        %v742 = vpop.f32.mrf.mxu0
        %743 = vdwg.mxu0
        %v744 = vld [vmem:[#allocation6] sm:$0xff]
        %v745 = vld [vmem:[#allocation6 + $0x8] sm:$0xff]
        %v746 = vld [vmem:[#allocation6 + $0x10] sm:$0xff]
        %v747 = vld [vmem:[#allocation6 + $0x18] sm:$0xff]
        %v748 = vld [vmem:[#allocation6 + $0x20] sm:$0xff]
        %v749 = vld [vmem:[#allocation6 + $0x28] sm:$0xff]
        %v750 = vld [vmem:[#allocation6 + $0x30] sm:$0xff]
        %v751 = vld [vmem:[#allocation6 + $0x38] sm:$0xff]
        %752 = vmatprep.subr.mxu0 0.0
        %753 = vmatpush1.msra.mxu0 0.0
        %754 = vmatprep.subr.mxu0 0.0
        %755 = vmatpush1.msra.mxu0 0.0
        %756 = vmatprep.subr.mxu0 0.0
        %757 = vmatpush1.msra.mxu0 0.0
        %758 = vmatprep.subr.mxu0 0.0
        %759 = vmatpush1.msra.mxu0 0.0
        %760 = vmatprep.subr.mxu0 0.0
        %761 = vmatpush1.msra.mxu0 0.0
        %762 = vmatprep.subr.mxu0 0.0
        %763 = vmatpush1.msra.mxu0 0.0
        %764 = vmatprep.subr.mxu0 0.0
        %765 = vmatpush1.msra.mxu0 0.0
        %766 = vmatprep.subr.mxu0 0.0
        %767 = vmatpush1.msra.mxu0 0.0
        %768 = vmatprep.subr.mxu0 0.0
        %769 = vmatpush1.msra.mxu0 %v751
        %770 = vmatprep.subr.mxu0 0.0
        %771 = vmatpush1.msra.mxu0 %v750
        %772 = vmatprep.subr.mxu0 0.0
        %773 = vmatpush1.msra.mxu0 %v749
        %774 = vmatprep.subr.mxu0 0.0
        %775 = vmatpush1.msra.mxu0 %v748
        %776 = vmatprep.subr.mxu0 0.0
        %777 = vmatpush1.msra.mxu0 %v747
        %778 = vmatprep.subr.mxu0 0.0
        %779 = vmatpush1.msra.mxu0 %v746
        %780 = vmatprep.subr.mxu0 0.0
        %781 = vmatpush1.msra.mxu0 %v745
        %782 = vmatprep.subr.mxu0 0.0
        %783 = vmatpush1.msra.mxu0 %v744
        %784 = vmatprep.subr.mxu0 0.0
        %785 = vmatpush2.msra.mxu0 0.0
        %786 = vmatprep.subr.mxu0 0.0
        %787 = vmatpush2.msra.mxu0 0.0
        %788 = vmatprep.subr.mxu0 0.0
        %789 = vmatpush2.msra.mxu0 0.0
        %790 = vmatprep.subr.mxu0 0.0
        %791 = vmatpush2.msra.mxu0 0.0
        %792 = vmatprep.subr.mxu0 0.0
        %793 = vmatpush2.msra.mxu0 0.0
        %794 = vmatprep.subr.mxu0 0.0
        %795 = vmatpush2.msra.mxu0 0.0
        %796 = vmatprep.subr.mxu0 0.0
        %797 = vmatpush2.msra.mxu0 0.0
        %798 = vmatprep.subr.mxu0 0.0
        %799 = vmatpush2.msra.mxu0 0.0
        %800 = vmatprep.subr.mxu0 0.0
        %801 = vmatpush2.msra.mxu0 0.0
        %802 = vmatprep.subr.mxu0 0.0
        %803 = vmatpush2.msra.mxu0 0.0
        %804 = vmatprep.subr.mxu0 0.0
        %805 = vmatpush2.msra.mxu0 0.0
        %806 = vmatprep.subr.mxu0 0.0
        %807 = vmatpush2.msra.mxu0 0.0
        %808 = vmatprep.subr.mxu0 0.0
        %809 = vmatpush2.msra.mxu0 0.0
        %810 = vmatprep.subr.mxu0 0.0
        %811 = vmatpush2.msra.mxu0 0.0
        %812 = vmatprep.subr.mxu0 0.0
        %813 = vmatpush2.msra.mxu0 0.0
        %814 = vmatprep.subr.mxu0 0.0
        %815 = vmatpush2.msra.mxu0 0.0
        %816 = vmatprep.mubr.f32.mxu0 0.0
        %817 = vmatmul.mubr.f32.gmra.mxu0 %v616
        %v818 = vpop.f32.mrf.mxu0
        %v819 = vadd.f32 0.0, %v818
        %v820 = vpop.f32.mrf.mxu0
        %821 = vmatprep.mubr.f32.mxu0 0.0
        %822 = vmatmul.mubr.f32.gmra.mxu0 %v619
        %v823 = vpop.f32.mrf.mxu0
        %v824 = vadd.f32 0.0, %v823
        %v825 = vpop.f32.mrf.mxu0
        %826 = vmatprep.mubr.f32.mxu0 0.0
        %827 = vmatmul.mubr.f32.gmra.mxu0 %v622
        %v828 = vpop.f32.mrf.mxu0
        %v829 = vadd.f32 0.0, %v828
        %v830 = vpop.f32.mrf.mxu0
        %831 = vmatprep.mubr.f32.mxu0 0.0
        %832 = vmatmul.mubr.f32.gmra.mxu0 %v625
        %v833 = vpop.f32.mrf.mxu0
        %v834 = vadd.f32 0.0, %v833
        %v835 = vpop.f32.mrf.mxu0
        %836 = vmatprep.mubr.f32.mxu0 0.0
        %837 = vmatmul.mubr.f32.gmra.mxu0 %v628
        %v838 = vpop.f32.mrf.mxu0
        %v839 = vadd.f32 0.0, %v838
        %v840 = vpop.f32.mrf.mxu0
        %841 = vmatprep.mubr.f32.mxu0 0.0
        %842 = vmatmul.mubr.f32.gmra.mxu0 %v631
        %v843 = vpop.f32.mrf.mxu0
        %v844 = vadd.f32 0.0, %v843
        %v845 = vpop.f32.mrf.mxu0
        %846 = vmatprep.mubr.f32.mxu0 0.0
        %847 = vmatmul.mubr.f32.gmra.mxu0 %v634
        %v848 = vpop.f32.mrf.mxu0
        %v849 = vadd.f32 0.0, %v848
        %v850 = vpop.f32.mrf.mxu0
        %851 = vmatprep.mubr.f32.mxu0 0.0
        %852 = vmatmul.mubr.f32.gmra.mxu0 %v637
        %v853 = vpop.f32.mrf.mxu0
        %v854 = vadd.f32 0.0, %v853
        %v855 = vpop.f32.mrf.mxu0
        %856 = vdwg.mxu0
        %vm857 = vcmask 64512
        %v859 = vsel %vm857, %v594, 0
        %v862 = vsel %vm857, %v599, 0
        %v865 = vsel %vm857, %v604, 0
        %v868 = vsel %vm857, %v706, 0
        %v871 = vsel %vm857, %v711, 0
        %v874 = vsel %vm857, %v716, 0
        %v877 = vsel %vm857, %v721, 0
        %v880 = vsel %vm857, %v726, 0
        %v883 = vsel %vm857, %v731, 0
        %v886 = vsel %vm857, %v736, 0
        %v889 = vsel %vm857, %v741, 0
        %891 = vmatprep.subr.mxu0 0.0
        %892 = vmatpush1.xpose.msra.mxu0 0.0
        %893 = vmatprep.subr.mxu0 0.0
        %894 = vmatpush1.xpose.msra.mxu0 0.0
        %895 = vmatprep.subr.mxu0 0.0
        %896 = vmatpush1.xpose.msra.mxu0 0.0
        %897 = vmatprep.subr.mxu0 0.0
        %898 = vmatpush1.xpose.msra.mxu0 0.0
        %899 = vmatprep.subr.mxu0 0.0
        %900 = vmatpush1.xpose.msra.mxu0 0.0
        %901 = vmatprep.subr.mxu0 0.0
        %902 = vmatpush1.xpose.msra.mxu0 0.0
        %903 = vmatprep.subr.mxu0 0.0
        %904 = vmatpush1.xpose.msra.mxu0 0.0
        %905 = vmatprep.subr.mxu0 0.0
        %906 = vmatpush1.xpose.msra.mxu0 0.0
        %907 = vmatprep.subr.mxu0 0.0
        %908 = vmatpush1.xpose.msra.mxu0 %v889
        %909 = vmatprep.subr.mxu0 0.0
        %910 = vmatpush1.xpose.msra.mxu0 %v886
        %911 = vmatprep.subr.mxu0 0.0
        %912 = vmatpush1.xpose.msra.mxu0 %v883
        %913 = vmatprep.subr.mxu0 0.0
        %914 = vmatpush1.xpose.msra.mxu0 %v880
        %915 = vmatprep.subr.mxu0 0.0
        %916 = vmatpush1.xpose.msra.mxu0 %v877
        %917 = vmatprep.subr.mxu0 0.0
        %918 = vmatpush1.xpose.msra.mxu0 %v874
        %919 = vmatprep.subr.mxu0 0.0
        %920 = vmatpush1.xpose.msra.mxu0 %v871
        %921 = vmatprep.subr.mxu0 0.0
        %922 = vmatpush1.xpose.msra.mxu0 %v868
        %923 = vmatprep.subr.mxu0 0.0
        %924 = vmatpush2.xpose.msra.mxu0 0.0
        %925 = vmatprep.subr.mxu0 0.0
        %926 = vmatpush2.xpose.msra.mxu0 0.0
        %927 = vmatprep.subr.mxu0 0.0
        %928 = vmatpush2.xpose.msra.mxu0 0.0
        %929 = vmatprep.subr.mxu0 0.0
        %930 = vmatpush2.xpose.msra.mxu0 0.0
        %931 = vmatprep.subr.mxu0 0.0
        %932 = vmatpush2.xpose.msra.mxu0 0.0
        %933 = vmatprep.subr.mxu0 0.0
        %934 = vmatpush2.xpose.msra.mxu0 0.0
        %935 = vmatprep.subr.mxu0 0.0
        %936 = vmatpush2.xpose.msra.mxu0 0.0
        %937 = vmatprep.subr.mxu0 0.0
        %938 = vmatpush2.xpose.msra.mxu0 0.0
        %939 = vmatprep.subr.mxu0 0.0
        %940 = vmatpush2.xpose.msra.mxu0 0.0
        %941 = vmatprep.subr.mxu0 0.0
        %942 = vmatpush2.xpose.msra.mxu0 0.0
        %943 = vmatprep.subr.mxu0 0.0
        %944 = vmatpush2.xpose.msra.mxu0 0.0
        %945 = vmatprep.subr.mxu0 0.0
        %946 = vmatpush2.xpose.msra.mxu0 0.0
        %947 = vmatprep.subr.mxu0 0.0
        %948 = vmatpush2.xpose.msra.mxu0 0.0
        %949 = vmatprep.subr.mxu0 0.0
        %950 = vmatpush2.xpose.msra.mxu0 0.0
        %951 = vmatprep.subr.mxu0 0.0
        %952 = vmatpush2.xpose.msra.mxu0 0.0
        %953 = vmatprep.subr.mxu0 0.0
        %954 = vmatpush2.xpose.msra.mxu0 0.0
        %955 = vmatprep.mubr.f32.mxu0 0.0
        %956 = vmatmul.mubr.f32.gmra.mxu0 %v859
        %v957 = vpop.f32.mrf.mxu0
        %v958 = vadd.f32 0.0, %v957
        %v959 = vpop.f32.mrf.mxu0
        %960 = vmatprep.mubr.f32.mxu0 0.0
        %961 = vmatmul.mubr.f32.gmra.mxu0 %v862
        %v962 = vpop.f32.mrf.mxu0
        %v963 = vadd.f32 0.0, %v962
        %v964 = vpop.f32.mrf.mxu0
        %965 = vmatprep.mubr.f32.mxu0 0.0
        %966 = vmatmul.mubr.f32.gmra.mxu0 %v865
        %v967 = vpop.f32.mrf.mxu0
        %v968 = vadd.f32 0.0, %v967
        %v969 = vpop.f32.mrf.mxu0
        %970 = vdwg.mxu0
        %v971 = vld [vmem:[#allocation7] sm:$0xff]
        %v972 = vld [vmem:[#allocation7 + $0x8] sm:$0xff]
        %v973 = vld [vmem:[#allocation7 + $0x10] sm:$0xff]
        %v974 = vld [vmem:[#allocation7 + $0x18] sm:$0xff]
        %v975 = vld [vmem:[#allocation7 + $0x20] sm:$0xff]
        %v976 = vld [vmem:[#allocation7 + $0x28] sm:$0xff]
        %v977 = vld [vmem:[#allocation7 + $0x30] sm:$0xff]
        %v978 = vld [vmem:[#allocation7 + $0x38] sm:$0xff]
        %v979 = vld [vmem:[#allocation7 + $0x40] sm:$0xff]
        %v980 = vld [vmem:[#allocation7 + $0x48] sm:$0xff]
        %v981 = vld [vmem:[#allocation7 + $0x50] sm:$0xff]
        %v982 = vld [vmem:[#allocation7 + $0x58] sm:$0xff]
        %v983 = vld [vmem:[#allocation7 + $0x60] sm:$0xff]
        %v984 = vld [vmem:[#allocation7 + $0x68] sm:$0xff]
        %v985 = vld [vmem:[#allocation7 + $0x70] sm:$0xff]
        %v986 = vld [vmem:[#allocation7 + $0x78] sm:$0xff]
        %v987 = vld [vmem:[#allocation7 + $0x80] sm:$0xff]
        %v988 = vld [vmem:[#allocation7 + $0x88] sm:$0xff]
        %v989 = vld [vmem:[#allocation7 + $0x90] sm:$0xff]
        %v990 = vld [vmem:[#allocation7 + $0x98] sm:$0xff]
        %v991 = vld [vmem:[#allocation7 + $0xa0] sm:$0xff]
        %v992 = vld [vmem:[#allocation7 + $0xa8] sm:$0xff]
        %v993 = vld [vmem:[#allocation7 + $0xb0] sm:$0xff]
        %v994 = vld [vmem:[#allocation7 + $0xb8] sm:$0xff]
        %v995 = vld [vmem:[#allocation7 + $0xc0] sm:$0xff]
        %v996 = vld [vmem:[#allocation7 + $0xc8] sm:$0xff]
        %v997 = vld [vmem:[#allocation7 + $0xd0] sm:$0xff]
        %v998 = vld [vmem:[#allocation7 + $0xd8] sm:$0xff]
        %v999 = vld [vmem:[#allocation7 + $0xe0] sm:$0xff]
        %v1000 = vld [vmem:[#allocation7 + $0xe8] sm:$0xff]
        %v1001 = vld [vmem:[#allocation7 + $0xf0] sm:$0xff]
        %v1002 = vld [vmem:[#allocation7 + $0xf8] sm:$0xff]
        %1003 = vrot.lane.b32.xlu0 %v594, 120
        %v1004 = vpop.permute.xlu0 %1003
        %1005 = vrot.lane.b32.xlu0 %v599, 120
        %v1006 = vpop.permute.xlu0 %1005
        %1007 = vrot.lane.b32.xlu0 %v604, 120
        %v1008 = vpop.permute.xlu0 %1007
        %1009 = vrot.lane.b32.xlu0 %v706, 120
        %v1010 = vpop.permute.xlu0 %1009
        %1011 = vrot.lane.b32.xlu0 %v711, 120
        %v1012 = vpop.permute.xlu0 %1011
        %1013 = vrot.lane.b32.xlu0 %v716, 120
        %v1014 = vpop.permute.xlu0 %1013
        %1015 = vrot.lane.b32.xlu0 %v721, 120
        %v1016 = vpop.permute.xlu0 %1015
        %1017 = vrot.lane.b32.xlu0 %v726, 120
        %v1018 = vpop.permute.xlu0 %1017
        %1019 = vrot.lane.b32.xlu0 %v731, 120
        %v1020 = vpop.permute.xlu0 %1019
        %1021 = vrot.lane.b32.xlu0 %v736, 120
        %v1022 = vpop.permute.xlu0 %1021
        %1023 = vrot.lane.b32.xlu0 %v741, 120
        %v1024 = vpop.permute.xlu0 %1023
        %v1025 = vsel %vm857, %v1004, 0
        %v1027 = vsel %vm857, %v1006, 0
        %v1029 = vsel %vm857, %v1008, 0
        %v1031 = vsel %vm857, %v1010, 0
        %v1033 = vsel %vm857, %v1012, 0
        %v1035 = vsel %vm857, %v1014, 0
        %v1037 = vsel %vm857, %v1016, 0
        %v1039 = vsel %vm857, %v1018, 0
        %v1041 = vsel %vm857, %v1020, 0
        %v1043 = vsel %vm857, %v1022, 0
        %v1045 = vsel %vm857, %v1024, 0
        %1047 = vmatprep.subr.mxu0 0.0
        %1048 = vmatpush1.xpose.msra.mxu0 0.0
        %1049 = vmatprep.subr.mxu0 0.0
        %1050 = vmatpush1.xpose.msra.mxu0 0.0
        %1051 = vmatprep.subr.mxu0 0.0
        %1052 = vmatpush1.xpose.msra.mxu0 0.0
        %1053 = vmatprep.subr.mxu0 0.0
        %1054 = vmatpush1.xpose.msra.mxu0 0.0
        %1055 = vmatprep.subr.mxu0 0.0
        %1056 = vmatpush1.xpose.msra.mxu0 0.0
        %1057 = vmatprep.subr.mxu0 0.0
        %1058 = vmatpush1.xpose.msra.mxu0 0.0
        %1059 = vmatprep.subr.mxu0 0.0
        %1060 = vmatpush1.xpose.msra.mxu0 0.0
        %1061 = vmatprep.subr.mxu0 0.0
        %1062 = vmatpush1.xpose.msra.mxu0 0.0
        %1063 = vmatprep.subr.mxu0 0.0
        %1064 = vmatpush1.xpose.msra.mxu0 %v1045
        %1065 = vmatprep.subr.mxu0 0.0
        %1066 = vmatpush1.xpose.msra.mxu0 %v1043
        %1067 = vmatprep.subr.mxu0 0.0
        %1068 = vmatpush1.xpose.msra.mxu0 %v1041
        %1069 = vmatprep.subr.mxu0 0.0
        %1070 = vmatpush1.xpose.msra.mxu0 %v1039
        %1071 = vmatprep.subr.mxu0 0.0
        %1072 = vmatpush1.xpose.msra.mxu0 %v1037
        %1073 = vmatprep.subr.mxu0 0.0
        %1074 = vmatpush1.xpose.msra.mxu0 %v1035
        %1075 = vmatprep.subr.mxu0 0.0
        %1076 = vmatpush1.xpose.msra.mxu0 %v1033
        %1077 = vmatprep.subr.mxu0 0.0
        %1078 = vmatpush1.xpose.msra.mxu0 %v1031
        %1079 = vmatprep.subr.mxu0 0.0
        %1080 = vmatpush2.xpose.msra.mxu0 0.0
        %1081 = vmatprep.subr.mxu0 0.0
        %1082 = vmatpush2.xpose.msra.mxu0 0.0
        %1083 = vmatprep.subr.mxu0 0.0
        %1084 = vmatpush2.xpose.msra.mxu0 0.0
        %1085 = vmatprep.subr.mxu0 0.0
        %1086 = vmatpush2.xpose.msra.mxu0 0.0
        %1087 = vmatprep.subr.mxu0 0.0
        %1088 = vmatpush2.xpose.msra.mxu0 0.0
        %1089 = vmatprep.subr.mxu0 0.0
        %1090 = vmatpush2.xpose.msra.mxu0 0.0
        %1091 = vmatprep.subr.mxu0 0.0
        %1092 = vmatpush2.xpose.msra.mxu0 0.0
        %1093 = vmatprep.subr.mxu0 0.0
        %1094 = vmatpush2.xpose.msra.mxu0 0.0
        %1095 = vmatprep.subr.mxu0 0.0
        %1096 = vmatpush2.xpose.msra.mxu0 0.0
        %1097 = vmatprep.subr.mxu0 0.0
        %1098 = vmatpush2.xpose.msra.mxu0 0.0
        %1099 = vmatprep.subr.mxu0 0.0
        %1100 = vmatpush2.xpose.msra.mxu0 0.0
        %1101 = vmatprep.subr.mxu0 0.0
        %1102 = vmatpush2.xpose.msra.mxu0 0.0
        %1103 = vmatprep.subr.mxu0 0.0
        %1104 = vmatpush2.xpose.msra.mxu0 0.0
        %1105 = vmatprep.subr.mxu0 0.0
        %1106 = vmatpush2.xpose.msra.mxu0 0.0
        %1107 = vmatprep.subr.mxu0 0.0
        %1108 = vmatpush2.xpose.msra.mxu0 0.0
        %1109 = vmatprep.subr.mxu0 0.0
        %1110 = vmatpush2.xpose.msra.mxu0 0.0
        %1111 = vmatprep.mubr.f32.mxu0 0.0
        %1112 = vmatmul.mubr.f32.gmra.mxu0 %v1025
        %v1113 = vpop.f32.mrf.mxu0
        %v1114 = vadd.f32 0.0, %v1113
        %v1115 = vpop.f32.mrf.mxu0
        %1116 = vmatprep.mubr.f32.mxu0 0.0
        %1117 = vmatmul.mubr.f32.gmra.mxu0 %v1027
        %v1118 = vpop.f32.mrf.mxu0
        %v1119 = vadd.f32 0.0, %v1118
        %v1120 = vpop.f32.mrf.mxu0
        %1121 = vmatprep.mubr.f32.mxu0 0.0
        %1122 = vmatmul.mubr.f32.gmra.mxu0 %v1029
        %v1123 = vpop.f32.mrf.mxu0
        %v1124 = vadd.f32 0.0, %v1123
        %v1125 = vpop.f32.mrf.mxu0
        %1126 = vdwg.mxu0
        %v1127 = vld [vmem:[#allocation7 + $0x100] sm:$0xff]
        %v1128 = vld [vmem:[#allocation7 + $0x108] sm:$0xff]
        %v1129 = vld [vmem:[#allocation7 + $0x110] sm:$0xff]
        %v1130 = vld [vmem:[#allocation7 + $0x118] sm:$0xff]
        %v1131 = vld [vmem:[#allocation7 + $0x120] sm:$0xff]
        %v1132 = vld [vmem:[#allocation7 + $0x128] sm:$0xff]
        %v1133 = vld [vmem:[#allocation7 + $0x130] sm:$0xff]
        %v1134 = vld [vmem:[#allocation7 + $0x138] sm:$0xff]
        %v1135 = vld [vmem:[#allocation7 + $0x140] sm:$0xff]
        %v1136 = vld [vmem:[#allocation7 + $0x148] sm:$0xff]
        %v1137 = vld [vmem:[#allocation7 + $0x150] sm:$0xff]
        %v1138 = vld [vmem:[#allocation7 + $0x158] sm:$0xff]
        %v1139 = vld [vmem:[#allocation7 + $0x160] sm:$0xff]
        %v1140 = vld [vmem:[#allocation7 + $0x168] sm:$0xff]
        %v1141 = vld [vmem:[#allocation7 + $0x170] sm:$0xff]
        %v1142 = vld [vmem:[#allocation7 + $0x178] sm:$0xff]
        %v1143 = vld [vmem:[#allocation7 + $0x180] sm:$0xff]
        %v1144 = vld [vmem:[#allocation7 + $0x188] sm:$0xff]
        %v1145 = vld [vmem:[#allocation7 + $0x190] sm:$0xff]
        %v1146 = vld [vmem:[#allocation7 + $0x198] sm:$0xff]
        %v1147 = vld [vmem:[#allocation7 + $0x1a0] sm:$0xff]
        %v1148 = vld [vmem:[#allocation7 + $0x1a8] sm:$0xff]
        %v1149 = vld [vmem:[#allocation7 + $0x1b0] sm:$0xff]
        %v1150 = vld [vmem:[#allocation7 + $0x1b8] sm:$0xff]
        %v1151 = vld [vmem:[#allocation7 + $0x1c0] sm:$0xff]
        %v1152 = vld [vmem:[#allocation7 + $0x1c8] sm:$0xff]
        %v1153 = vld [vmem:[#allocation7 + $0x1d0] sm:$0xff]
        %v1154 = vld [vmem:[#allocation7 + $0x1d8] sm:$0xff]
        %v1155 = vld [vmem:[#allocation7 + $0x1e0] sm:$0xff]
        %v1156 = vld [vmem:[#allocation7 + $0x1e8] sm:$0xff]
        %v1157 = vld [vmem:[#allocation7 + $0x1f0] sm:$0xff]
        %v1158 = vld [vmem:[#allocation7 + $0x1f8] sm:$0xff]
        %v1160 = vsel %vm517, %v1114, 0
        %v1163 = vsel %vm517, %v1119, 0
        %v1166 = vsel %vm517, %v1124, 0
        %1168 = vmatprep.subr.mxu0 0.0
        %1169 = vmatpush1.msra.mxu0 0.0
        %1170 = vmatprep.subr.mxu0 0.0
        %1171 = vmatpush1.msra.mxu0 0.0
        %1172 = vmatprep.subr.mxu0 0.0
        %1173 = vmatpush1.msra.mxu0 0.0
        %1174 = vmatprep.subr.mxu0 0.0
        %1175 = vmatpush1.msra.mxu0 0.0
        %1176 = vmatprep.subr.mxu0 0.0
        %1177 = vmatpush1.msra.mxu0 0.0
        %1178 = vmatprep.subr.mxu0 0.0
        %1179 = vmatpush1.msra.mxu0 0.0
        %1180 = vmatprep.subr.mxu0 0.0
        %1181 = vmatpush1.msra.mxu0 0.0
        %1182 = vmatprep.subr.mxu0 0.0
        %1183 = vmatpush1.msra.mxu0 0.0
        %1184 = vmatprep.subr.mxu0 %v1156
        %1185 = vmatpush1.msra.mxu0 %v1155
        %1186 = vmatprep.subr.mxu0 %v1152
        %1187 = vmatpush1.msra.mxu0 %v1151
        %1188 = vmatprep.subr.mxu0 %v1148
        %1189 = vmatpush1.msra.mxu0 %v1147
        %1190 = vmatprep.subr.mxu0 %v1144
        %1191 = vmatpush1.msra.mxu0 %v1143
        %1192 = vmatprep.subr.mxu0 %v1140
        %1193 = vmatpush1.msra.mxu0 %v1139
        %1194 = vmatprep.subr.mxu0 %v1136
        %1195 = vmatpush1.msra.mxu0 %v1135
        %1196 = vmatprep.subr.mxu0 %v1132
        %1197 = vmatpush1.msra.mxu0 %v1131
        %1198 = vmatprep.subr.mxu0 %v1128
        %1199 = vmatpush1.msra.mxu0 %v1127
        %1200 = vmatprep.subr.mxu0 0.0
        %1201 = vmatpush2.msra.mxu0 0.0
        %1202 = vmatprep.subr.mxu0 0.0
        %1203 = vmatpush2.msra.mxu0 0.0
        %1204 = vmatprep.subr.mxu0 0.0
        %1205 = vmatpush2.msra.mxu0 0.0
        %1206 = vmatprep.subr.mxu0 0.0
        %1207 = vmatpush2.msra.mxu0 0.0
        %1208 = vmatprep.subr.mxu0 0.0
        %1209 = vmatpush2.msra.mxu0 0.0
        %1210 = vmatprep.subr.mxu0 0.0
        %1211 = vmatpush2.msra.mxu0 0.0
        %1212 = vmatprep.subr.mxu0 0.0
        %1213 = vmatpush2.msra.mxu0 0.0
        %1214 = vmatprep.subr.mxu0 0.0
        %1215 = vmatpush2.msra.mxu0 0.0
        %1216 = vmatprep.subr.mxu0 0.0
        %1217 = vmatpush2.msra.mxu0 0.0
        %1218 = vmatprep.subr.mxu0 0.0
        %1219 = vmatpush2.msra.mxu0 0.0
        %1220 = vmatprep.subr.mxu0 0.0
        %1221 = vmatpush2.msra.mxu0 0.0
        %1222 = vmatprep.subr.mxu0 0.0
        %1223 = vmatpush2.msra.mxu0 0.0
        %1224 = vmatprep.subr.mxu0 0.0
        %1225 = vmatpush2.msra.mxu0 0.0
        %1226 = vmatprep.subr.mxu0 0.0
        %1227 = vmatpush2.msra.mxu0 0.0
        %1228 = vmatprep.subr.mxu0 0.0
        %1229 = vmatpush2.msra.mxu0 0.0
        %1230 = vmatprep.subr.mxu0 0.0
        %1231 = vmatpush2.msra.mxu0 0.0
        %1232 = vmatprep.mubr.f32.mxu0 0.0
        %1233 = vmatmul.mubr.f32.gmra.mxu0 %v1160
        %v1234 = vpop.f32.mrf.mxu0
        %v1235 = vadd.f32 0.0, %v1234
        %v1236 = vpop.f32.mrf.mxu0
        %v1237 = vadd.f32 0.0, %v1236
        %1238 = vmatprep.mubr.f32.mxu0 0.0
        %1239 = vmatmul.mubr.f32.gmra.mxu0 %v1163
        %v1240 = vpop.f32.mrf.mxu0
        %v1241 = vadd.f32 0.0, %v1240
        %v1242 = vpop.f32.mrf.mxu0
        %v1243 = vadd.f32 0.0, %v1242
        %1244 = vmatprep.mubr.f32.mxu0 0.0
        %1245 = vmatmul.mubr.f32.gmra.mxu0 %v1166
        %v1246 = vpop.f32.mrf.mxu0
        %v1247 = vadd.f32 0.0, %v1246
        %v1248 = vpop.f32.mrf.mxu0
        %v1249 = vadd.f32 0.0, %v1248
        %1250 = vdwg.mxu0
        %1251 = vmatprep.subr.mxu0 0.0
        %1252 = vmatpush1.msra.mxu0 0.0
        %1253 = vmatprep.subr.mxu0 0.0
        %1254 = vmatpush1.msra.mxu0 0.0
        %1255 = vmatprep.subr.mxu0 0.0
        %1256 = vmatpush1.msra.mxu0 0.0
        %1257 = vmatprep.subr.mxu0 0.0
        %1258 = vmatpush1.msra.mxu0 0.0
        %1259 = vmatprep.subr.mxu0 0.0
        %1260 = vmatpush1.msra.mxu0 0.0
        %1261 = vmatprep.subr.mxu0 0.0
        %1262 = vmatpush1.msra.mxu0 0.0
        %1263 = vmatprep.subr.mxu0 0.0
        %1264 = vmatpush1.msra.mxu0 0.0
        %1265 = vmatprep.subr.mxu0 0.0
        %1266 = vmatpush1.msra.mxu0 0.0
        %1267 = vmatprep.subr.mxu0 %v1158
        %1268 = vmatpush1.msra.mxu0 %v1157
        %1269 = vmatprep.subr.mxu0 %v1154
        %1270 = vmatpush1.msra.mxu0 %v1153
        %1271 = vmatprep.subr.mxu0 %v1150
        %1272 = vmatpush1.msra.mxu0 %v1149
        %1273 = vmatprep.subr.mxu0 %v1146
        %1274 = vmatpush1.msra.mxu0 %v1145
        %1275 = vmatprep.subr.mxu0 %v1142
        %1276 = vmatpush1.msra.mxu0 %v1141
        %1277 = vmatprep.subr.mxu0 %v1138
        %1278 = vmatpush1.msra.mxu0 %v1137
        %1279 = vmatprep.subr.mxu0 %v1134
        %1280 = vmatpush1.msra.mxu0 %v1133
        %1281 = vmatprep.subr.mxu0 %v1130
        %1282 = vmatpush1.msra.mxu0 %v1129
        %1283 = vmatprep.subr.mxu0 0.0
        %1284 = vmatpush2.msra.mxu0 0.0
        %1285 = vmatprep.subr.mxu0 0.0
        %1286 = vmatpush2.msra.mxu0 0.0
        %1287 = vmatprep.subr.mxu0 0.0
        %1288 = vmatpush2.msra.mxu0 0.0
        %1289 = vmatprep.subr.mxu0 0.0
        %1290 = vmatpush2.msra.mxu0 0.0
        %1291 = vmatprep.subr.mxu0 0.0
        %1292 = vmatpush2.msra.mxu0 0.0
        %1293 = vmatprep.subr.mxu0 0.0
        %1294 = vmatpush2.msra.mxu0 0.0
        %1295 = vmatprep.subr.mxu0 0.0
        %1296 = vmatpush2.msra.mxu0 0.0
        %1297 = vmatprep.subr.mxu0 0.0
        %1298 = vmatpush2.msra.mxu0 0.0
        %1299 = vmatprep.subr.mxu0 0.0
        %1300 = vmatpush2.msra.mxu0 0.0
        %1301 = vmatprep.subr.mxu0 0.0
        %1302 = vmatpush2.msra.mxu0 0.0
        %1303 = vmatprep.subr.mxu0 0.0
        %1304 = vmatpush2.msra.mxu0 0.0
        %1305 = vmatprep.subr.mxu0 0.0
        %1306 = vmatpush2.msra.mxu0 0.0
        %1307 = vmatprep.subr.mxu0 0.0
        %1308 = vmatpush2.msra.mxu0 0.0
        %1309 = vmatprep.subr.mxu0 0.0
        %1310 = vmatpush2.msra.mxu0 0.0
        %1311 = vmatprep.subr.mxu0 0.0
        %1312 = vmatpush2.msra.mxu0 0.0
        %1313 = vmatprep.subr.mxu0 0.0
        %1314 = vmatpush2.msra.mxu0 0.0
        %1315 = vmatprep.mubr.f32.mxu0 0.0
        %1316 = vmatmul.mubr.f32.gmra.mxu0 %v1160
        %v1317 = vpop.f32.mrf.mxu0
        %v1318 = vadd.f32 0.0, %v1317
        %v1319 = vpop.f32.mrf.mxu0
        %v1320 = vadd.f32 0.0, %v1319
        %1321 = vmatprep.mubr.f32.mxu0 0.0
        %1322 = vmatmul.mubr.f32.gmra.mxu0 %v1163
        %v1323 = vpop.f32.mrf.mxu0
        %v1324 = vadd.f32 0.0, %v1323
        %v1325 = vpop.f32.mrf.mxu0
        %v1326 = vadd.f32 0.0, %v1325
        %1327 = vmatprep.mubr.f32.mxu0 0.0
        %1328 = vmatmul.mubr.f32.gmra.mxu0 %v1166
        %v1329 = vpop.f32.mrf.mxu0
        %v1330 = vadd.f32 0.0, %v1329
        %v1331 = vpop.f32.mrf.mxu0
        %v1332 = vadd.f32 0.0, %v1331
        %1333 = vdwg.mxu0
        %v1335 = vsel %vm517, %v958, 0
        %v1338 = vsel %vm517, %v963, 0
        %v1341 = vsel %vm517, %v968, 0
        %1343 = vmatprep.subr.mxu0 0.0
        %1344 = vmatpush1.msra.mxu0 0.0
        %1345 = vmatprep.subr.mxu0 0.0
        %1346 = vmatpush1.msra.mxu0 0.0
        %1347 = vmatprep.subr.mxu0 0.0
        %1348 = vmatpush1.msra.mxu0 0.0
        %1349 = vmatprep.subr.mxu0 0.0
        %1350 = vmatpush1.msra.mxu0 0.0
        %1351 = vmatprep.subr.mxu0 0.0
        %1352 = vmatpush1.msra.mxu0 0.0
        %1353 = vmatprep.subr.mxu0 0.0
        %1354 = vmatpush1.msra.mxu0 0.0
        %1355 = vmatprep.subr.mxu0 0.0
        %1356 = vmatpush1.msra.mxu0 0.0
        %1357 = vmatprep.subr.mxu0 0.0
        %1358 = vmatpush1.msra.mxu0 0.0
        %1359 = vmatprep.subr.mxu0 %v1000
        %1360 = vmatpush1.msra.mxu0 %v999
        %1361 = vmatprep.subr.mxu0 %v996
        %1362 = vmatpush1.msra.mxu0 %v995
        %1363 = vmatprep.subr.mxu0 %v992
        %1364 = vmatpush1.msra.mxu0 %v991
        %1365 = vmatprep.subr.mxu0 %v988
        %1366 = vmatpush1.msra.mxu0 %v987
        %1367 = vmatprep.subr.mxu0 %v984
        %1368 = vmatpush1.msra.mxu0 %v983
        %1369 = vmatprep.subr.mxu0 %v980
        %1370 = vmatpush1.msra.mxu0 %v979
        %1371 = vmatprep.subr.mxu0 %v976
        %1372 = vmatpush1.msra.mxu0 %v975
        %1373 = vmatprep.subr.mxu0 %v972
        %1374 = vmatpush1.msra.mxu0 %v971
        %1375 = vmatprep.subr.mxu0 0.0
        %1376 = vmatpush2.msra.mxu0 0.0
        %1377 = vmatprep.subr.mxu0 0.0
        %1378 = vmatpush2.msra.mxu0 0.0
        %1379 = vmatprep.subr.mxu0 0.0
        %1380 = vmatpush2.msra.mxu0 0.0
        %1381 = vmatprep.subr.mxu0 0.0
        %1382 = vmatpush2.msra.mxu0 0.0
        %1383 = vmatprep.subr.mxu0 0.0
        %1384 = vmatpush2.msra.mxu0 0.0
        %1385 = vmatprep.subr.mxu0 0.0
        %1386 = vmatpush2.msra.mxu0 0.0
        %1387 = vmatprep.subr.mxu0 0.0
        %1388 = vmatpush2.msra.mxu0 0.0
        %1389 = vmatprep.subr.mxu0 0.0
        %1390 = vmatpush2.msra.mxu0 0.0
        %1391 = vmatprep.subr.mxu0 0.0
        %1392 = vmatpush2.msra.mxu0 0.0
        %1393 = vmatprep.subr.mxu0 0.0
        %1394 = vmatpush2.msra.mxu0 0.0
        %1395 = vmatprep.subr.mxu0 0.0
        %1396 = vmatpush2.msra.mxu0 0.0
        %1397 = vmatprep.subr.mxu0 0.0
        %1398 = vmatpush2.msra.mxu0 0.0
        %1399 = vmatprep.subr.mxu0 0.0
        %1400 = vmatpush2.msra.mxu0 0.0
        %1401 = vmatprep.subr.mxu0 0.0
        %1402 = vmatpush2.msra.mxu0 0.0
        %1403 = vmatprep.subr.mxu0 0.0
        %1404 = vmatpush2.msra.mxu0 0.0
        %1405 = vmatprep.subr.mxu0 0.0
        %1406 = vmatpush2.msra.mxu0 0.0
        %1407 = vmatprep.mubr.f32.mxu0 0.0
        %1408 = vmatmul.mubr.f32.gmra.mxu0 %v1335
        %v1409 = vpop.f32.mrf.mxu0
        %v1410 = vadd.f32 %v1235, %v1409
        %v1411 = vpop.f32.mrf.mxu0
        %v1412 = vadd.f32 %v1237, %v1411
        %1413 = vmatprep.mubr.f32.mxu0 0.0
        %1414 = vmatmul.mubr.f32.gmra.mxu0 %v1338
        %v1415 = vpop.f32.mrf.mxu0
        %v1416 = vadd.f32 %v1241, %v1415
        %v1417 = vpop.f32.mrf.mxu0
        %v1418 = vadd.f32 %v1243, %v1417
        %1419 = vmatprep.mubr.f32.mxu0 0.0
        %1420 = vmatmul.mubr.f32.gmra.mxu0 %v1341
        %v1421 = vpop.f32.mrf.mxu0
        %v1422 = vadd.f32 %v1247, %v1421
        %v1423 = vpop.f32.mrf.mxu0
        %v1424 = vadd.f32 %v1249, %v1423
        %1425 = vdwg.mxu0
        %1426 = vmatprep.subr.mxu0 0.0
        %1427 = vmatpush1.msra.mxu0 0.0
        %1428 = vmatprep.subr.mxu0 0.0
        %1429 = vmatpush1.msra.mxu0 0.0
        %1430 = vmatprep.subr.mxu0 0.0
        %1431 = vmatpush1.msra.mxu0 0.0
        %1432 = vmatprep.subr.mxu0 0.0
        %1433 = vmatpush1.msra.mxu0 0.0
        %1434 = vmatprep.subr.mxu0 0.0
        %1435 = vmatpush1.msra.mxu0 0.0
        %1436 = vmatprep.subr.mxu0 0.0
        %1437 = vmatpush1.msra.mxu0 0.0
        %1438 = vmatprep.subr.mxu0 0.0
        %1439 = vmatpush1.msra.mxu0 0.0
        %1440 = vmatprep.subr.mxu0 0.0
        %1441 = vmatpush1.msra.mxu0 0.0
        %1442 = vmatprep.subr.mxu0 %v1002
        %1443 = vmatpush1.msra.mxu0 %v1001
        %1444 = vmatprep.subr.mxu0 %v998
        %1445 = vmatpush1.msra.mxu0 %v997
        %1446 = vmatprep.subr.mxu0 %v994
        %1447 = vmatpush1.msra.mxu0 %v993
        %1448 = vmatprep.subr.mxu0 %v990
        %1449 = vmatpush1.msra.mxu0 %v989
        %1450 = vmatprep.subr.mxu0 %v986
        %1451 = vmatpush1.msra.mxu0 %v985
        %1452 = vmatprep.subr.mxu0 %v982
        %1453 = vmatpush1.msra.mxu0 %v981
        %1454 = vmatprep.subr.mxu0 %v978
        %1455 = vmatpush1.msra.mxu0 %v977
        %1456 = vmatprep.subr.mxu0 %v974
        %1457 = vmatpush1.msra.mxu0 %v973
        %1458 = vmatprep.subr.mxu0 0.0
        %1459 = vmatpush2.msra.mxu0 0.0
        %1460 = vmatprep.subr.mxu0 0.0
        %1461 = vmatpush2.msra.mxu0 0.0
        %1462 = vmatprep.subr.mxu0 0.0
        %1463 = vmatpush2.msra.mxu0 0.0
        %1464 = vmatprep.subr.mxu0 0.0
        %1465 = vmatpush2.msra.mxu0 0.0
        %1466 = vmatprep.subr.mxu0 0.0
        %1467 = vmatpush2.msra.mxu0 0.0
        %1468 = vmatprep.subr.mxu0 0.0
        %1469 = vmatpush2.msra.mxu0 0.0
        %1470 = vmatprep.subr.mxu0 0.0
        %1471 = vmatpush2.msra.mxu0 0.0
        %1472 = vmatprep.subr.mxu0 0.0
        %1473 = vmatpush2.msra.mxu0 0.0
        %1474 = vmatprep.subr.mxu0 0.0
        %1475 = vmatpush2.msra.mxu0 0.0
        %1476 = vmatprep.subr.mxu0 0.0
        %1477 = vmatpush2.msra.mxu0 0.0
        %1478 = vmatprep.subr.mxu0 0.0
        %1479 = vmatpush2.msra.mxu0 0.0
        %1480 = vmatprep.subr.mxu0 0.0
        %1481 = vmatpush2.msra.mxu0 0.0
        %1482 = vmatprep.subr.mxu0 0.0
        %1483 = vmatpush2.msra.mxu0 0.0
        %1484 = vmatprep.subr.mxu0 0.0
        %1485 = vmatpush2.msra.mxu0 0.0
        %1486 = vmatprep.subr.mxu0 0.0
        %1487 = vmatpush2.msra.mxu0 0.0
        %1488 = vmatprep.subr.mxu0 0.0
        %1489 = vmatpush2.msra.mxu0 0.0
        %1490 = vmatprep.mubr.f32.mxu0 0.0
        %1491 = vmatmul.mubr.f32.gmra.mxu0 %v1335
        %v1492 = vpop.f32.mrf.mxu0
        %v1493 = vadd.f32 %v1318, %v1492
        %v1494 = vpop.f32.mrf.mxu0
        %v1495 = vadd.f32 %v1320, %v1494
        %1496 = vmatprep.mubr.f32.mxu0 0.0
        %1497 = vmatmul.mubr.f32.gmra.mxu0 %v1338
        %v1498 = vpop.f32.mrf.mxu0
        %v1499 = vadd.f32 %v1324, %v1498
        %v1500 = vpop.f32.mrf.mxu0
        %v1501 = vadd.f32 %v1326, %v1500
        %1502 = vmatprep.mubr.f32.mxu0 0.0
        %1503 = vmatmul.mubr.f32.gmra.mxu0 %v1341
        %v1504 = vpop.f32.mrf.mxu0
        %v1505 = vadd.f32 %v1330, %v1504
        %v1506 = vpop.f32.mrf.mxu0
        %v1507 = vadd.f32 %v1332, %v1506
        %1508 = vdwg.mxu0
        %1509 = vrot.lane.b32.xlu0 %v594, 112
        %v1510 = vpop.permute.xlu0 %1509
        %1511 = vrot.lane.b32.xlu0 %v599, 112
        %v1512 = vpop.permute.xlu0 %1511
        %1513 = vrot.lane.b32.xlu0 %v604, 112
        %v1514 = vpop.permute.xlu0 %1513
        %1515 = vrot.lane.b32.xlu0 %v706, 112
        %v1516 = vpop.permute.xlu0 %1515
        %1517 = vrot.lane.b32.xlu0 %v711, 112
        %v1518 = vpop.permute.xlu0 %1517
        %1519 = vrot.lane.b32.xlu0 %v716, 112
        %v1520 = vpop.permute.xlu0 %1519
        %1521 = vrot.lane.b32.xlu0 %v721, 112
        %v1522 = vpop.permute.xlu0 %1521
        %1523 = vrot.lane.b32.xlu0 %v726, 112
        %v1524 = vpop.permute.xlu0 %1523
        %1525 = vrot.lane.b32.xlu0 %v731, 112
        %v1526 = vpop.permute.xlu0 %1525
        %1527 = vrot.lane.b32.xlu0 %v736, 112
        %v1528 = vpop.permute.xlu0 %1527
        %1529 = vrot.lane.b32.xlu0 %v741, 112
        %v1530 = vpop.permute.xlu0 %1529
        %v1531 = vsel %vm857, %v1510, 0
        %v1533 = vsel %vm857, %v1512, 0
        %v1535 = vsel %vm857, %v1514, 0
        %v1537 = vsel %vm857, %v1516, 0
        %v1539 = vsel %vm857, %v1518, 0
        %v1541 = vsel %vm857, %v1520, 0
        %v1543 = vsel %vm857, %v1522, 0
        %v1545 = vsel %vm857, %v1524, 0
        %v1547 = vsel %vm857, %v1526, 0
        %v1549 = vsel %vm857, %v1528, 0
        %v1551 = vsel %vm857, %v1530, 0
        %1553 = vmatprep.subr.mxu0 0.0
        %1554 = vmatpush1.xpose.msra.mxu0 0.0
        %1555 = vmatprep.subr.mxu0 0.0
        %1556 = vmatpush1.xpose.msra.mxu0 0.0
        %1557 = vmatprep.subr.mxu0 0.0
        %1558 = vmatpush1.xpose.msra.mxu0 0.0
        %1559 = vmatprep.subr.mxu0 0.0
        %1560 = vmatpush1.xpose.msra.mxu0 0.0
        %1561 = vmatprep.subr.mxu0 0.0
        %1562 = vmatpush1.xpose.msra.mxu0 0.0
        %1563 = vmatprep.subr.mxu0 0.0
        %1564 = vmatpush1.xpose.msra.mxu0 0.0
        %1565 = vmatprep.subr.mxu0 0.0
        %1566 = vmatpush1.xpose.msra.mxu0 0.0
        %1567 = vmatprep.subr.mxu0 0.0
        %1568 = vmatpush1.xpose.msra.mxu0 0.0
        %1569 = vmatprep.subr.mxu0 0.0
        %1570 = vmatpush1.xpose.msra.mxu0 %v1551
        %1571 = vmatprep.subr.mxu0 0.0
        %1572 = vmatpush1.xpose.msra.mxu0 %v1549
        %1573 = vmatprep.subr.mxu0 0.0
        %1574 = vmatpush1.xpose.msra.mxu0 %v1547
        %1575 = vmatprep.subr.mxu0 0.0
        %1576 = vmatpush1.xpose.msra.mxu0 %v1545
        %1577 = vmatprep.subr.mxu0 0.0
        %1578 = vmatpush1.xpose.msra.mxu0 %v1543
        %1579 = vmatprep.subr.mxu0 0.0
        %1580 = vmatpush1.xpose.msra.mxu0 %v1541
        %1581 = vmatprep.subr.mxu0 0.0
        %1582 = vmatpush1.xpose.msra.mxu0 %v1539
        %1583 = vmatprep.subr.mxu0 0.0
        %1584 = vmatpush1.xpose.msra.mxu0 %v1537
        %1585 = vmatprep.subr.mxu0 0.0
        %1586 = vmatpush2.xpose.msra.mxu0 0.0
        %1587 = vmatprep.subr.mxu0 0.0
        %1588 = vmatpush2.xpose.msra.mxu0 0.0
        %1589 = vmatprep.subr.mxu0 0.0
        %1590 = vmatpush2.xpose.msra.mxu0 0.0
        %1591 = vmatprep.subr.mxu0 0.0
        %1592 = vmatpush2.xpose.msra.mxu0 0.0
        %1593 = vmatprep.subr.mxu0 0.0
        %1594 = vmatpush2.xpose.msra.mxu0 0.0
        %1595 = vmatprep.subr.mxu0 0.0
        %1596 = vmatpush2.xpose.msra.mxu0 0.0
        %1597 = vmatprep.subr.mxu0 0.0
        %1598 = vmatpush2.xpose.msra.mxu0 0.0
        %1599 = vmatprep.subr.mxu0 0.0
        %1600 = vmatpush2.xpose.msra.mxu0 0.0
        %1601 = vmatprep.subr.mxu0 0.0
        %1602 = vmatpush2.xpose.msra.mxu0 0.0
        %1603 = vmatprep.subr.mxu0 0.0
        %1604 = vmatpush2.xpose.msra.mxu0 0.0
        %1605 = vmatprep.subr.mxu0 0.0
        %1606 = vmatpush2.xpose.msra.mxu0 0.0
        %1607 = vmatprep.subr.mxu0 0.0
        %1608 = vmatpush2.xpose.msra.mxu0 0.0
        %1609 = vmatprep.subr.mxu0 0.0
        %1610 = vmatpush2.xpose.msra.mxu0 0.0
        %1611 = vmatprep.subr.mxu0 0.0
        %1612 = vmatpush2.xpose.msra.mxu0 0.0
        %1613 = vmatprep.subr.mxu0 0.0
        %1614 = vmatpush2.xpose.msra.mxu0 0.0
        %1615 = vmatprep.subr.mxu0 0.0
        %1616 = vmatpush2.xpose.msra.mxu0 0.0
        %1617 = vmatprep.mubr.f32.mxu0 0.0
        %1618 = vmatmul.mubr.f32.gmra.mxu0 %v1531
        %v1619 = vpop.f32.mrf.mxu0
        %v1620 = vadd.f32 0.0, %v1619
        %v1621 = vpop.f32.mrf.mxu0
        %1622 = vmatprep.mubr.f32.mxu0 0.0
        %1623 = vmatmul.mubr.f32.gmra.mxu0 %v1533
        %v1624 = vpop.f32.mrf.mxu0
        %v1625 = vadd.f32 0.0, %v1624
        %v1626 = vpop.f32.mrf.mxu0
        %1627 = vmatprep.mubr.f32.mxu0 0.0
        %1628 = vmatmul.mubr.f32.gmra.mxu0 %v1535
        %v1629 = vpop.f32.mrf.mxu0
        %v1630 = vadd.f32 0.0, %v1629
        %v1631 = vpop.f32.mrf.mxu0
        %1632 = vdwg.mxu0
        %v1633 = vld [vmem:[#allocation7 + $0x200] sm:$0xff]
        %v1634 = vld [vmem:[#allocation7 + $0x208] sm:$0xff]
        %v1635 = vld [vmem:[#allocation7 + $0x210] sm:$0xff]
        %v1636 = vld [vmem:[#allocation7 + $0x218] sm:$0xff]
        %v1637 = vld [vmem:[#allocation7 + $0x220] sm:$0xff]
        %v1638 = vld [vmem:[#allocation7 + $0x228] sm:$0xff]
        %v1639 = vld [vmem:[#allocation7 + $0x230] sm:$0xff]
        %v1640 = vld [vmem:[#allocation7 + $0x238] sm:$0xff]
        %v1641 = vld [vmem:[#allocation7 + $0x240] sm:$0xff]
        %v1642 = vld [vmem:[#allocation7 + $0x248] sm:$0xff]
        %v1643 = vld [vmem:[#allocation7 + $0x250] sm:$0xff]
        %v1644 = vld [vmem:[#allocation7 + $0x258] sm:$0xff]
        %v1645 = vld [vmem:[#allocation7 + $0x260] sm:$0xff]
        %v1646 = vld [vmem:[#allocation7 + $0x268] sm:$0xff]
        %v1647 = vld [vmem:[#allocation7 + $0x270] sm:$0xff]
        %v1648 = vld [vmem:[#allocation7 + $0x278] sm:$0xff]
        %v1649 = vld [vmem:[#allocation7 + $0x280] sm:$0xff]
        %v1650 = vld [vmem:[#allocation7 + $0x288] sm:$0xff]
        %v1651 = vld [vmem:[#allocation7 + $0x290] sm:$0xff]
        %v1652 = vld [vmem:[#allocation7 + $0x298] sm:$0xff]
        %v1653 = vld [vmem:[#allocation7 + $0x2a0] sm:$0xff]
        %v1654 = vld [vmem:[#allocation7 + $0x2a8] sm:$0xff]
        %v1655 = vld [vmem:[#allocation7 + $0x2b0] sm:$0xff]
        %v1656 = vld [vmem:[#allocation7 + $0x2b8] sm:$0xff]
        %v1657 = vld [vmem:[#allocation7 + $0x2c0] sm:$0xff]
        %v1658 = vld [vmem:[#allocation7 + $0x2c8] sm:$0xff]
        %v1659 = vld [vmem:[#allocation7 + $0x2d0] sm:$0xff]
        %v1660 = vld [vmem:[#allocation7 + $0x2d8] sm:$0xff]
        %v1661 = vld [vmem:[#allocation7 + $0x2e0] sm:$0xff]
        %v1662 = vld [vmem:[#allocation7 + $0x2e8] sm:$0xff]
        %v1663 = vld [vmem:[#allocation7 + $0x2f0] sm:$0xff]
        %v1664 = vld [vmem:[#allocation7 + $0x2f8] sm:$0xff]
        %v1666 = vsel %vm517, %v1620, 0
        %v1669 = vsel %vm517, %v1625, 0
        %v1672 = vsel %vm517, %v1630, 0
        %1674 = vmatprep.subr.mxu0 0.0
        %1675 = vmatpush1.msra.mxu0 0.0
        %1676 = vmatprep.subr.mxu0 0.0
        %1677 = vmatpush1.msra.mxu0 0.0
        %1678 = vmatprep.subr.mxu0 0.0
        %1679 = vmatpush1.msra.mxu0 0.0
        %1680 = vmatprep.subr.mxu0 0.0
        %1681 = vmatpush1.msra.mxu0 0.0
        %1682 = vmatprep.subr.mxu0 0.0
        %1683 = vmatpush1.msra.mxu0 0.0
        %1684 = vmatprep.subr.mxu0 0.0
        %1685 = vmatpush1.msra.mxu0 0.0
        %1686 = vmatprep.subr.mxu0 0.0
        %1687 = vmatpush1.msra.mxu0 0.0
        %1688 = vmatprep.subr.mxu0 0.0
        %1689 = vmatpush1.msra.mxu0 0.0
        %1690 = vmatprep.subr.mxu0 %v1662
        %1691 = vmatpush1.msra.mxu0 %v1661
        %1692 = vmatprep.subr.mxu0 %v1658
        %1693 = vmatpush1.msra.mxu0 %v1657
        %1694 = vmatprep.subr.mxu0 %v1654
        %1695 = vmatpush1.msra.mxu0 %v1653
        %1696 = vmatprep.subr.mxu0 %v1650
        %1697 = vmatpush1.msra.mxu0 %v1649
        %1698 = vmatprep.subr.mxu0 %v1646
        %1699 = vmatpush1.msra.mxu0 %v1645
        %1700 = vmatprep.subr.mxu0 %v1642
        %1701 = vmatpush1.msra.mxu0 %v1641
        %1702 = vmatprep.subr.mxu0 %v1638
        %1703 = vmatpush1.msra.mxu0 %v1637
        %1704 = vmatprep.subr.mxu0 %v1634
        %1705 = vmatpush1.msra.mxu0 %v1633
        %1706 = vmatprep.subr.mxu0 0.0
        %1707 = vmatpush2.msra.mxu0 0.0
        %1708 = vmatprep.subr.mxu0 0.0
        %1709 = vmatpush2.msra.mxu0 0.0
        %1710 = vmatprep.subr.mxu0 0.0
        %1711 = vmatpush2.msra.mxu0 0.0
        %1712 = vmatprep.subr.mxu0 0.0
        %1713 = vmatpush2.msra.mxu0 0.0
        %1714 = vmatprep.subr.mxu0 0.0
        %1715 = vmatpush2.msra.mxu0 0.0
        %1716 = vmatprep.subr.mxu0 0.0
        %1717 = vmatpush2.msra.mxu0 0.0
        %1718 = vmatprep.subr.mxu0 0.0
        %1719 = vmatpush2.msra.mxu0 0.0
        %1720 = vmatprep.subr.mxu0 0.0
        %1721 = vmatpush2.msra.mxu0 0.0
        %1722 = vmatprep.subr.mxu0 0.0
        %1723 = vmatpush2.msra.mxu0 0.0
        %1724 = vmatprep.subr.mxu0 0.0
        %1725 = vmatpush2.msra.mxu0 0.0
        %1726 = vmatprep.subr.mxu0 0.0
        %1727 = vmatpush2.msra.mxu0 0.0
        %1728 = vmatprep.subr.mxu0 0.0
        %1729 = vmatpush2.msra.mxu0 0.0
        %1730 = vmatprep.subr.mxu0 0.0
        %1731 = vmatpush2.msra.mxu0 0.0
        %1732 = vmatprep.subr.mxu0 0.0
        %1733 = vmatpush2.msra.mxu0 0.0
        %1734 = vmatprep.subr.mxu0 0.0
        %1735 = vmatpush2.msra.mxu0 0.0
        %1736 = vmatprep.subr.mxu0 0.0
        %1737 = vmatpush2.msra.mxu0 0.0
        %1738 = vmatprep.mubr.f32.mxu0 0.0
        %1739 = vmatmul.mubr.f32.gmra.mxu0 %v1666
        %v1740 = vpop.f32.mrf.mxu0
        %v1741 = vadd.f32 0.0, %v1740
        %v1742 = vpop.f32.mrf.mxu0
        %v1743 = vadd.f32 0.0, %v1742
        %1744 = vmatprep.mubr.f32.mxu0 0.0
        %1745 = vmatmul.mubr.f32.gmra.mxu0 %v1669
        %v1746 = vpop.f32.mrf.mxu0
        %v1747 = vadd.f32 0.0, %v1746
        %v1748 = vpop.f32.mrf.mxu0
        %v1749 = vadd.f32 0.0, %v1748
        %1750 = vmatprep.mubr.f32.mxu0 0.0
        %1751 = vmatmul.mubr.f32.gmra.mxu0 %v1672
        %v1752 = vpop.f32.mrf.mxu0
        %v1753 = vadd.f32 0.0, %v1752
        %v1754 = vpop.f32.mrf.mxu0
        %v1755 = vadd.f32 0.0, %v1754
        %1756 = vdwg.mxu0
        %1757 = vmatprep.subr.mxu0 0.0
        %1758 = vmatpush1.msra.mxu0 0.0
        %1759 = vmatprep.subr.mxu0 0.0
        %1760 = vmatpush1.msra.mxu0 0.0
        %1761 = vmatprep.subr.mxu0 0.0
        %1762 = vmatpush1.msra.mxu0 0.0
        %1763 = vmatprep.subr.mxu0 0.0
        %1764 = vmatpush1.msra.mxu0 0.0
        %1765 = vmatprep.subr.mxu0 0.0
        %1766 = vmatpush1.msra.mxu0 0.0
        %1767 = vmatprep.subr.mxu0 0.0
        %1768 = vmatpush1.msra.mxu0 0.0
        %1769 = vmatprep.subr.mxu0 0.0
        %1770 = vmatpush1.msra.mxu0 0.0
        %1771 = vmatprep.subr.mxu0 0.0
        %1772 = vmatpush1.msra.mxu0 0.0
        %1773 = vmatprep.subr.mxu0 %v1664
        %1774 = vmatpush1.msra.mxu0 %v1663
        %1775 = vmatprep.subr.mxu0 %v1660
        %1776 = vmatpush1.msra.mxu0 %v1659
        %1777 = vmatprep.subr.mxu0 %v1656
        %1778 = vmatpush1.msra.mxu0 %v1655
        %1779 = vmatprep.subr.mxu0 %v1652
        %1780 = vmatpush1.msra.mxu0 %v1651
        %1781 = vmatprep.subr.mxu0 %v1648
        %1782 = vmatpush1.msra.mxu0 %v1647
        %1783 = vmatprep.subr.mxu0 %v1644
        %1784 = vmatpush1.msra.mxu0 %v1643
        %1785 = vmatprep.subr.mxu0 %v1640
        %1786 = vmatpush1.msra.mxu0 %v1639
        %1787 = vmatprep.subr.mxu0 %v1636
        %1788 = vmatpush1.msra.mxu0 %v1635
        %1789 = vmatprep.subr.mxu0 0.0
        %1790 = vmatpush2.msra.mxu0 0.0
        %1791 = vmatprep.subr.mxu0 0.0
        %1792 = vmatpush2.msra.mxu0 0.0
        %1793 = vmatprep.subr.mxu0 0.0
        %1794 = vmatpush2.msra.mxu0 0.0
        %1795 = vmatprep.subr.mxu0 0.0
        %1796 = vmatpush2.msra.mxu0 0.0
        %1797 = vmatprep.subr.mxu0 0.0
        %1798 = vmatpush2.msra.mxu0 0.0
        %1799 = vmatprep.subr.mxu0 0.0
        %1800 = vmatpush2.msra.mxu0 0.0
        %1801 = vmatprep.subr.mxu0 0.0
        %1802 = vmatpush2.msra.mxu0 0.0
        %1803 = vmatprep.subr.mxu0 0.0
        %1804 = vmatpush2.msra.mxu0 0.0
        %1805 = vmatprep.subr.mxu0 0.0
        %1806 = vmatpush2.msra.mxu0 0.0
        %1807 = vmatprep.subr.mxu0 0.0
        %1808 = vmatpush2.msra.mxu0 0.0
        %1809 = vmatprep.subr.mxu0 0.0
        %1810 = vmatpush2.msra.mxu0 0.0
        %1811 = vmatprep.subr.mxu0 0.0
        %1812 = vmatpush2.msra.mxu0 0.0
        %1813 = vmatprep.subr.mxu0 0.0
        %1814 = vmatpush2.msra.mxu0 0.0
        %1815 = vmatprep.subr.mxu0 0.0
        %1816 = vmatpush2.msra.mxu0 0.0
        %1817 = vmatprep.subr.mxu0 0.0
        %1818 = vmatpush2.msra.mxu0 0.0
        %1819 = vmatprep.subr.mxu0 0.0
        %1820 = vmatpush2.msra.mxu0 0.0
        %1821 = vmatprep.mubr.f32.mxu0 0.0
        %1822 = vmatmul.mubr.f32.gmra.mxu0 %v1666
        %v1823 = vpop.f32.mrf.mxu0
        %v1824 = vadd.f32 0.0, %v1823
        %v1825 = vpop.f32.mrf.mxu0
        %v1826 = vadd.f32 0.0, %v1825
        %1827 = vmatprep.mubr.f32.mxu0 0.0
        %1828 = vmatmul.mubr.f32.gmra.mxu0 %v1669
        %v1829 = vpop.f32.mrf.mxu0
        %v1830 = vadd.f32 0.0, %v1829
        %v1831 = vpop.f32.mrf.mxu0
        %v1832 = vadd.f32 0.0, %v1831
        %1833 = vmatprep.mubr.f32.mxu0 0.0
        %1834 = vmatmul.mubr.f32.gmra.mxu0 %v1672
        %v1835 = vpop.f32.mrf.mxu0
        %v1836 = vadd.f32 0.0, %v1835
        %v1837 = vpop.f32.mrf.mxu0
        %v1838 = vadd.f32 0.0, %v1837
        %1839 = vdwg.mxu0
        %v1840 = vadd.f32 %v1410, %v1741
        %v1841 = vadd.f32 %v1412, %v1743
        %v1842 = vadd.f32 %v1493, %v1824
        %v1843 = vadd.f32 %v1495, %v1826
        %v1844 = vadd.f32 %v1416, %v1747
        %v1845 = vadd.f32 %v1418, %v1749
        %v1846 = vadd.f32 %v1499, %v1830
        %v1847 = vadd.f32 %v1501, %v1832
        %v1848 = vadd.f32 %v1422, %v1753
        %v1849 = vadd.f32 %v1424, %v1755
        %v1850 = vadd.f32 %v1505, %v1836
        %v1851 = vadd.f32 %v1507, %v1838
        %1852 = vrot.lane.b32.xlu0 %v594, 104
        %v1853 = vpop.permute.xlu0 %1852
        %1854 = vrot.lane.b32.xlu0 %v599, 104
        %v1855 = vpop.permute.xlu0 %1854
        %1856 = vrot.lane.b32.xlu0 %v604, 104
        %v1857 = vpop.permute.xlu0 %1856
        %1858 = vrot.lane.b32.xlu0 %v706, 104
        %v1859 = vpop.permute.xlu0 %1858
        %1860 = vrot.lane.b32.xlu0 %v711, 104
        %v1861 = vpop.permute.xlu0 %1860
        %1862 = vrot.lane.b32.xlu0 %v716, 104
        %v1863 = vpop.permute.xlu0 %1862
        %1864 = vrot.lane.b32.xlu0 %v721, 104
        %v1865 = vpop.permute.xlu0 %1864
        %1866 = vrot.lane.b32.xlu0 %v726, 104
        %v1867 = vpop.permute.xlu0 %1866
        %1868 = vrot.lane.b32.xlu0 %v731, 104
        %v1869 = vpop.permute.xlu0 %1868
        %1870 = vrot.lane.b32.xlu0 %v736, 104
        %v1871 = vpop.permute.xlu0 %1870
        %1872 = vrot.lane.b32.xlu0 %v741, 104
        %v1873 = vpop.permute.xlu0 %1872
        %v1874 = vsel %vm857, %v1853, 0
        %v1876 = vsel %vm857, %v1855, 0
        %v1878 = vsel %vm857, %v1857, 0
        %v1880 = vsel %vm857, %v1859, 0
        %v1882 = vsel %vm857, %v1861, 0
        %v1884 = vsel %vm857, %v1863, 0
        %v1886 = vsel %vm857, %v1865, 0
        %v1888 = vsel %vm857, %v1867, 0
        %v1890 = vsel %vm857, %v1869, 0
        %v1892 = vsel %vm857, %v1871, 0
        %v1894 = vsel %vm857, %v1873, 0
        %1896 = vmatprep.subr.mxu0 0.0
        %1897 = vmatpush1.xpose.msra.mxu0 0.0
        %1898 = vmatprep.subr.mxu0 0.0
        %1899 = vmatpush1.xpose.msra.mxu0 0.0
        %1900 = vmatprep.subr.mxu0 0.0
        %1901 = vmatpush1.xpose.msra.mxu0 0.0
        %1902 = vmatprep.subr.mxu0 0.0
        %1903 = vmatpush1.xpose.msra.mxu0 0.0
        %1904 = vmatprep.subr.mxu0 0.0
        %1905 = vmatpush1.xpose.msra.mxu0 0.0
        %1906 = vmatprep.subr.mxu0 0.0
        %1907 = vmatpush1.xpose.msra.mxu0 0.0
        %1908 = vmatprep.subr.mxu0 0.0
        %1909 = vmatpush1.xpose.msra.mxu0 0.0
        %1910 = vmatprep.subr.mxu0 0.0
        %1911 = vmatpush1.xpose.msra.mxu0 0.0
        %1912 = vmatprep.subr.mxu0 0.0
        %1913 = vmatpush1.xpose.msra.mxu0 %v1894
        %1914 = vmatprep.subr.mxu0 0.0
        %1915 = vmatpush1.xpose.msra.mxu0 %v1892
        %1916 = vmatprep.subr.mxu0 0.0
        %1917 = vmatpush1.xpose.msra.mxu0 %v1890
        %1918 = vmatprep.subr.mxu0 0.0
        %1919 = vmatpush1.xpose.msra.mxu0 %v1888
        %1920 = vmatprep.subr.mxu0 0.0
        %1921 = vmatpush1.xpose.msra.mxu0 %v1886
        %1922 = vmatprep.subr.mxu0 0.0
        %1923 = vmatpush1.xpose.msra.mxu0 %v1884
        %1924 = vmatprep.subr.mxu0 0.0
        %1925 = vmatpush1.xpose.msra.mxu0 %v1882
        %1926 = vmatprep.subr.mxu0 0.0
        %1927 = vmatpush1.xpose.msra.mxu0 %v1880
        %1928 = vmatprep.subr.mxu0 0.0
        %1929 = vmatpush2.xpose.msra.mxu0 0.0
        %1930 = vmatprep.subr.mxu0 0.0
        %1931 = vmatpush2.xpose.msra.mxu0 0.0
        %1932 = vmatprep.subr.mxu0 0.0
        %1933 = vmatpush2.xpose.msra.mxu0 0.0
        %1934 = vmatprep.subr.mxu0 0.0
        %1935 = vmatpush2.xpose.msra.mxu0 0.0
        %1936 = vmatprep.subr.mxu0 0.0
        %1937 = vmatpush2.xpose.msra.mxu0 0.0
        %1938 = vmatprep.subr.mxu0 0.0
        %1939 = vmatpush2.xpose.msra.mxu0 0.0
        %1940 = vmatprep.subr.mxu0 0.0
        %1941 = vmatpush2.xpose.msra.mxu0 0.0
        %1942 = vmatprep.subr.mxu0 0.0
        %1943 = vmatpush2.xpose.msra.mxu0 0.0
        %1944 = vmatprep.subr.mxu0 0.0
        %1945 = vmatpush2.xpose.msra.mxu0 0.0
        %1946 = vmatprep.subr.mxu0 0.0
        %1947 = vmatpush2.xpose.msra.mxu0 0.0
        %1948 = vmatprep.subr.mxu0 0.0
        %1949 = vmatpush2.xpose.msra.mxu0 0.0
        %1950 = vmatprep.subr.mxu0 0.0
        %1951 = vmatpush2.xpose.msra.mxu0 0.0
        %1952 = vmatprep.subr.mxu0 0.0
        %1953 = vmatpush2.xpose.msra.mxu0 0.0
        %1954 = vmatprep.subr.mxu0 0.0
        %1955 = vmatpush2.xpose.msra.mxu0 0.0
        %1956 = vmatprep.subr.mxu0 0.0
        %1957 = vmatpush2.xpose.msra.mxu0 0.0
        %1958 = vmatprep.subr.mxu0 0.0
        %1959 = vmatpush2.xpose.msra.mxu0 0.0
        %1960 = vmatprep.mubr.f32.mxu0 0.0
        %1961 = vmatmul.mubr.f32.gmra.mxu0 %v1874
        %v1962 = vpop.f32.mrf.mxu0
        %v1963 = vadd.f32 0.0, %v1962
        %v1964 = vpop.f32.mrf.mxu0
        %1965 = vmatprep.mubr.f32.mxu0 0.0
        %1966 = vmatmul.mubr.f32.gmra.mxu0 %v1876
        %v1967 = vpop.f32.mrf.mxu0
        %v1968 = vadd.f32 0.0, %v1967
        %v1969 = vpop.f32.mrf.mxu0
        %1970 = vmatprep.mubr.f32.mxu0 0.0
        %1971 = vmatmul.mubr.f32.gmra.mxu0 %v1878
        %v1972 = vpop.f32.mrf.mxu0
        %v1973 = vadd.f32 0.0, %v1972
        %v1974 = vpop.f32.mrf.mxu0
        %1975 = vdwg.mxu0
        %v1976 = vld [vmem:[#allocation7 + $0x300] sm:$0xff]
        %v1977 = vld [vmem:[#allocation7 + $0x308] sm:$0xff]
        %v1978 = vld [vmem:[#allocation7 + $0x310] sm:$0xff]
        %v1979 = vld [vmem:[#allocation7 + $0x318] sm:$0xff]
        %v1980 = vld [vmem:[#allocation7 + $0x320] sm:$0xff]
        %v1981 = vld [vmem:[#allocation7 + $0x328] sm:$0xff]
        %v1982 = vld [vmem:[#allocation7 + $0x330] sm:$0xff]
        %v1983 = vld [vmem:[#allocation7 + $0x338] sm:$0xff]
        %v1984 = vld [vmem:[#allocation7 + $0x340] sm:$0xff]
        %v1985 = vld [vmem:[#allocation7 + $0x348] sm:$0xff]
        %v1986 = vld [vmem:[#allocation7 + $0x350] sm:$0xff]
        %v1987 = vld [vmem:[#allocation7 + $0x358] sm:$0xff]
        %v1988 = vld [vmem:[#allocation7 + $0x360] sm:$0xff]
        %v1989 = vld [vmem:[#allocation7 + $0x368] sm:$0xff]
        %v1990 = vld [vmem:[#allocation7 + $0x370] sm:$0xff]
        %v1991 = vld [vmem:[#allocation7 + $0x378] sm:$0xff]
        %v1992 = vld [vmem:[#allocation7 + $0x380] sm:$0xff]
        %v1993 = vld [vmem:[#allocation7 + $0x388] sm:$0xff]
        %v1994 = vld [vmem:[#allocation7 + $0x390] sm:$0xff]
        %v1995 = vld [vmem:[#allocation7 + $0x398] sm:$0xff]
        %v1996 = vld [vmem:[#allocation7 + $0x3a0] sm:$0xff]
        %v1997 = vld [vmem:[#allocation7 + $0x3a8] sm:$0xff]
        %v1998 = vld [vmem:[#allocation7 + $0x3b0] sm:$0xff]
        %v1999 = vld [vmem:[#allocation7 + $0x3b8] sm:$0xff]
        %v2000 = vld [vmem:[#allocation7 + $0x3c0] sm:$0xff]
        %v2001 = vld [vmem:[#allocation7 + $0x3c8] sm:$0xff]
        %v2002 = vld [vmem:[#allocation7 + $0x3d0] sm:$0xff]
        %v2003 = vld [vmem:[#allocation7 + $0x3d8] sm:$0xff]
        %v2004 = vld [vmem:[#allocation7 + $0x3e0] sm:$0xff]
        %v2005 = vld [vmem:[#allocation7 + $0x3e8] sm:$0xff]
        %v2006 = vld [vmem:[#allocation7 + $0x3f0] sm:$0xff]
        %v2007 = vld [vmem:[#allocation7 + $0x3f8] sm:$0xff]
        %v2009 = vsel %vm517, %v1963, 0
        %v2012 = vsel %vm517, %v1968, 0
        %v2015 = vsel %vm517, %v1973, 0
        %2017 = vmatprep.subr.mxu0 0.0
        %2018 = vmatpush1.msra.mxu0 0.0
        %2019 = vmatprep.subr.mxu0 0.0
        %2020 = vmatpush1.msra.mxu0 0.0
        %2021 = vmatprep.subr.mxu0 0.0
        %2022 = vmatpush1.msra.mxu0 0.0
        %2023 = vmatprep.subr.mxu0 0.0
        %2024 = vmatpush1.msra.mxu0 0.0
        %2025 = vmatprep.subr.mxu0 0.0
        %2026 = vmatpush1.msra.mxu0 0.0
        %2027 = vmatprep.subr.mxu0 0.0
        %2028 = vmatpush1.msra.mxu0 0.0
        %2029 = vmatprep.subr.mxu0 0.0
        %2030 = vmatpush1.msra.mxu0 0.0
        %2031 = vmatprep.subr.mxu0 0.0
        %2032 = vmatpush1.msra.mxu0 0.0
        %2033 = vmatprep.subr.mxu0 %v2005
        %2034 = vmatpush1.msra.mxu0 %v2004
        %2035 = vmatprep.subr.mxu0 %v2001
        %2036 = vmatpush1.msra.mxu0 %v2000
        %2037 = vmatprep.subr.mxu0 %v1997
        %2038 = vmatpush1.msra.mxu0 %v1996
        %2039 = vmatprep.subr.mxu0 %v1993
        %2040 = vmatpush1.msra.mxu0 %v1992
        %2041 = vmatprep.subr.mxu0 %v1989
        %2042 = vmatpush1.msra.mxu0 %v1988
        %2043 = vmatprep.subr.mxu0 %v1985
        %2044 = vmatpush1.msra.mxu0 %v1984
        %2045 = vmatprep.subr.mxu0 %v1981
        %2046 = vmatpush1.msra.mxu0 %v1980
        %2047 = vmatprep.subr.mxu0 %v1977
        %2048 = vmatpush1.msra.mxu0 %v1976
        %2049 = vmatprep.subr.mxu0 0.0
        %2050 = vmatpush2.msra.mxu0 0.0
        %2051 = vmatprep.subr.mxu0 0.0
        %2052 = vmatpush2.msra.mxu0 0.0
        %2053 = vmatprep.subr.mxu0 0.0
        %2054 = vmatpush2.msra.mxu0 0.0
        %2055 = vmatprep.subr.mxu0 0.0
        %2056 = vmatpush2.msra.mxu0 0.0
        %2057 = vmatprep.subr.mxu0 0.0
        %2058 = vmatpush2.msra.mxu0 0.0
        %2059 = vmatprep.subr.mxu0 0.0
        %2060 = vmatpush2.msra.mxu0 0.0
        %2061 = vmatprep.subr.mxu0 0.0
        %2062 = vmatpush2.msra.mxu0 0.0
        %2063 = vmatprep.subr.mxu0 0.0
        %2064 = vmatpush2.msra.mxu0 0.0
        %2065 = vmatprep.subr.mxu0 0.0
        %2066 = vmatpush2.msra.mxu0 0.0
        %2067 = vmatprep.subr.mxu0 0.0
        %2068 = vmatpush2.msra.mxu0 0.0
        %2069 = vmatprep.subr.mxu0 0.0
        %2070 = vmatpush2.msra.mxu0 0.0
        %2071 = vmatprep.subr.mxu0 0.0
        %2072 = vmatpush2.msra.mxu0 0.0
        %2073 = vmatprep.subr.mxu0 0.0
        %2074 = vmatpush2.msra.mxu0 0.0
        %2075 = vmatprep.subr.mxu0 0.0
        %2076 = vmatpush2.msra.mxu0 0.0
        %2077 = vmatprep.subr.mxu0 0.0
        %2078 = vmatpush2.msra.mxu0 0.0
        %2079 = vmatprep.subr.mxu0 0.0
        %2080 = vmatpush2.msra.mxu0 0.0
        %2081 = vmatprep.mubr.f32.mxu0 0.0
        %2082 = vmatmul.mubr.f32.gmra.mxu0 %v2009
        %v2083 = vpop.f32.mrf.mxu0
        %v2084 = vadd.f32 0.0, %v2083
        %v2085 = vpop.f32.mrf.mxu0
        %v2086 = vadd.f32 0.0, %v2085
        %2087 = vmatprep.mubr.f32.mxu0 0.0
        %2088 = vmatmul.mubr.f32.gmra.mxu0 %v2012
        %v2089 = vpop.f32.mrf.mxu0
        %v2090 = vadd.f32 0.0, %v2089
        %v2091 = vpop.f32.mrf.mxu0
        %v2092 = vadd.f32 0.0, %v2091
        %2093 = vmatprep.mubr.f32.mxu0 0.0
        %2094 = vmatmul.mubr.f32.gmra.mxu0 %v2015
        %v2095 = vpop.f32.mrf.mxu0
        %v2096 = vadd.f32 0.0, %v2095
        %v2097 = vpop.f32.mrf.mxu0
        %v2098 = vadd.f32 0.0, %v2097
        %2099 = vdwg.mxu0
        %2100 = vmatprep.subr.mxu0 0.0
        %2101 = vmatpush1.msra.mxu0 0.0
        %2102 = vmatprep.subr.mxu0 0.0
        %2103 = vmatpush1.msra.mxu0 0.0
        %2104 = vmatprep.subr.mxu0 0.0
        %2105 = vmatpush1.msra.mxu0 0.0
        %2106 = vmatprep.subr.mxu0 0.0
        %2107 = vmatpush1.msra.mxu0 0.0
        %2108 = vmatprep.subr.mxu0 0.0
        %2109 = vmatpush1.msra.mxu0 0.0
        %2110 = vmatprep.subr.mxu0 0.0
        %2111 = vmatpush1.msra.mxu0 0.0
        %2112 = vmatprep.subr.mxu0 0.0
        %2113 = vmatpush1.msra.mxu0 0.0
        %2114 = vmatprep.subr.mxu0 0.0
        %2115 = vmatpush1.msra.mxu0 0.0
        %2116 = vmatprep.subr.mxu0 %v2007
        %2117 = vmatpush1.msra.mxu0 %v2006
        %2118 = vmatprep.subr.mxu0 %v2003
        %2119 = vmatpush1.msra.mxu0 %v2002
        %2120 = vmatprep.subr.mxu0 %v1999
        %2121 = vmatpush1.msra.mxu0 %v1998
        %2122 = vmatprep.subr.mxu0 %v1995
        %2123 = vmatpush1.msra.mxu0 %v1994
        %2124 = vmatprep.subr.mxu0 %v1991
        %2125 = vmatpush1.msra.mxu0 %v1990
        %2126 = vmatprep.subr.mxu0 %v1987
        %2127 = vmatpush1.msra.mxu0 %v1986
        %2128 = vmatprep.subr.mxu0 %v1983
        %2129 = vmatpush1.msra.mxu0 %v1982
        %2130 = vmatprep.subr.mxu0 %v1979
        %2131 = vmatpush1.msra.mxu0 %v1978
        %2132 = vmatprep.subr.mxu0 0.0
        %2133 = vmatpush2.msra.mxu0 0.0
        %2134 = vmatprep.subr.mxu0 0.0
        %2135 = vmatpush2.msra.mxu0 0.0
        %2136 = vmatprep.subr.mxu0 0.0
        %2137 = vmatpush2.msra.mxu0 0.0
        %2138 = vmatprep.subr.mxu0 0.0
        %2139 = vmatpush2.msra.mxu0 0.0
        %2140 = vmatprep.subr.mxu0 0.0
        %2141 = vmatpush2.msra.mxu0 0.0
        %2142 = vmatprep.subr.mxu0 0.0
        %2143 = vmatpush2.msra.mxu0 0.0
        %2144 = vmatprep.subr.mxu0 0.0
        %2145 = vmatpush2.msra.mxu0 0.0
        %2146 = vmatprep.subr.mxu0 0.0
        %2147 = vmatpush2.msra.mxu0 0.0
        %2148 = vmatprep.subr.mxu0 0.0
        %2149 = vmatpush2.msra.mxu0 0.0
        %2150 = vmatprep.subr.mxu0 0.0
        %2151 = vmatpush2.msra.mxu0 0.0
        %2152 = vmatprep.subr.mxu0 0.0
        %2153 = vmatpush2.msra.mxu0 0.0
        %2154 = vmatprep.subr.mxu0 0.0
        %2155 = vmatpush2.msra.mxu0 0.0
        %2156 = vmatprep.subr.mxu0 0.0
        %2157 = vmatpush2.msra.mxu0 0.0
        %2158 = vmatprep.subr.mxu0 0.0
        %2159 = vmatpush2.msra.mxu0 0.0
        %2160 = vmatprep.subr.mxu0 0.0
        %2161 = vmatpush2.msra.mxu0 0.0
        %2162 = vmatprep.subr.mxu0 0.0
        %2163 = vmatpush2.msra.mxu0 0.0
        %2164 = vmatprep.mubr.f32.mxu0 0.0
        %2165 = vmatmul.mubr.f32.gmra.mxu0 %v2009
        %v2166 = vpop.f32.mrf.mxu0
        %v2167 = vadd.f32 0.0, %v2166
        %v2168 = vpop.f32.mrf.mxu0
        %v2169 = vadd.f32 0.0, %v2168
        %2170 = vmatprep.mubr.f32.mxu0 0.0
        %2171 = vmatmul.mubr.f32.gmra.mxu0 %v2012
        %v2172 = vpop.f32.mrf.mxu0
        %v2173 = vadd.f32 0.0, %v2172
        %v2174 = vpop.f32.mrf.mxu0
        %v2175 = vadd.f32 0.0, %v2174
        %2176 = vmatprep.mubr.f32.mxu0 0.0
        %2177 = vmatmul.mubr.f32.gmra.mxu0 %v2015
        %v2178 = vpop.f32.mrf.mxu0
        %v2179 = vadd.f32 0.0, %v2178
        %v2180 = vpop.f32.mrf.mxu0
        %v2181 = vadd.f32 0.0, %v2180
        %2182 = vdwg.mxu0
        %v2183 = vadd.f32 %v1840, %v2084
        %v2184 = vadd.f32 %v1841, %v2086
        %v2185 = vadd.f32 %v1842, %v2167
        %v2186 = vadd.f32 %v1843, %v2169
        %v2187 = vadd.f32 %v1844, %v2090
        %v2188 = vadd.f32 %v1845, %v2092
        %v2189 = vadd.f32 %v1846, %v2173
        %v2190 = vadd.f32 %v1847, %v2175
        %v2191 = vadd.f32 %v1848, %v2096
        %v2192 = vadd.f32 %v1849, %v2098
        %v2193 = vadd.f32 %v1850, %v2179
        %v2194 = vadd.f32 %v1851, %v2181
        %2195 = vrot.lane.b32.xlu0 %v594, 96
        %v2196 = vpop.permute.xlu0 %2195
        %2197 = vrot.lane.b32.xlu0 %v599, 96
        %v2198 = vpop.permute.xlu0 %2197
        %2199 = vrot.lane.b32.xlu0 %v604, 96
        %v2200 = vpop.permute.xlu0 %2199
        %2201 = vrot.lane.b32.xlu0 %v706, 96
        %v2202 = vpop.permute.xlu0 %2201
        %2203 = vrot.lane.b32.xlu0 %v711, 96
        %v2204 = vpop.permute.xlu0 %2203
        %2205 = vrot.lane.b32.xlu0 %v716, 96
        %v2206 = vpop.permute.xlu0 %2205
        %2207 = vrot.lane.b32.xlu0 %v721, 96
        %v2208 = vpop.permute.xlu0 %2207
        %2209 = vrot.lane.b32.xlu0 %v726, 96
        %v2210 = vpop.permute.xlu0 %2209
        %2211 = vrot.lane.b32.xlu0 %v731, 96
        %v2212 = vpop.permute.xlu0 %2211
        %2213 = vrot.lane.b32.xlu0 %v736, 96
        %v2214 = vpop.permute.xlu0 %2213
        %2215 = vrot.lane.b32.xlu0 %v741, 96
        %v2216 = vpop.permute.xlu0 %2215
        %v2217 = vsel %vm857, %v2196, 0
        %v2219 = vsel %vm857, %v2198, 0
        %v2221 = vsel %vm857, %v2200, 0
        %v2223 = vsel %vm857, %v2202, 0
        %v2225 = vsel %vm857, %v2204, 0
        %v2227 = vsel %vm857, %v2206, 0
        %v2229 = vsel %vm857, %v2208, 0
        %v2231 = vsel %vm857, %v2210, 0
        %v2233 = vsel %vm857, %v2212, 0
        %v2235 = vsel %vm857, %v2214, 0
        %v2237 = vsel %vm857, %v2216, 0
        %2239 = vmatprep.subr.mxu0 0.0
        %2240 = vmatpush1.xpose.msra.mxu0 0.0
        %2241 = vmatprep.subr.mxu0 0.0
        %2242 = vmatpush1.xpose.msra.mxu0 0.0
        %2243 = vmatprep.subr.mxu0 0.0
        %2244 = vmatpush1.xpose.msra.mxu0 0.0
        %2245 = vmatprep.subr.mxu0 0.0
        %2246 = vmatpush1.xpose.msra.mxu0 0.0
        %2247 = vmatprep.subr.mxu0 0.0
        %2248 = vmatpush1.xpose.msra.mxu0 0.0
        %2249 = vmatprep.subr.mxu0 0.0
        %2250 = vmatpush1.xpose.msra.mxu0 0.0
        %2251 = vmatprep.subr.mxu0 0.0
        %2252 = vmatpush1.xpose.msra.mxu0 0.0
        %2253 = vmatprep.subr.mxu0 0.0
        %2254 = vmatpush1.xpose.msra.mxu0 0.0
        %2255 = vmatprep.subr.mxu0 0.0
        %2256 = vmatpush1.xpose.msra.mxu0 %v2237
        %2257 = vmatprep.subr.mxu0 0.0
        %2258 = vmatpush1.xpose.msra.mxu0 %v2235
        %2259 = vmatprep.subr.mxu0 0.0
        %2260 = vmatpush1.xpose.msra.mxu0 %v2233
        %2261 = vmatprep.subr.mxu0 0.0
        %2262 = vmatpush1.xpose.msra.mxu0 %v2231
        %2263 = vmatprep.subr.mxu0 0.0
        %2264 = vmatpush1.xpose.msra.mxu0 %v2229
        %2265 = vmatprep.subr.mxu0 0.0
        %2266 = vmatpush1.xpose.msra.mxu0 %v2227
        %2267 = vmatprep.subr.mxu0 0.0
        %2268 = vmatpush1.xpose.msra.mxu0 %v2225
        %2269 = vmatprep.subr.mxu0 0.0
        %2270 = vmatpush1.xpose.msra.mxu0 %v2223
        %2271 = vmatprep.subr.mxu0 0.0
        %2272 = vmatpush2.xpose.msra.mxu0 0.0
        %2273 = vmatprep.subr.mxu0 0.0
        %2274 = vmatpush2.xpose.msra.mxu0 0.0
        %2275 = vmatprep.subr.mxu0 0.0
        %2276 = vmatpush2.xpose.msra.mxu0 0.0
        %2277 = vmatprep.subr.mxu0 0.0
        %2278 = vmatpush2.xpose.msra.mxu0 0.0
        %2279 = vmatprep.subr.mxu0 0.0
        %2280 = vmatpush2.xpose.msra.mxu0 0.0
        %2281 = vmatprep.subr.mxu0 0.0
        %2282 = vmatpush2.xpose.msra.mxu0 0.0
        %2283 = vmatprep.subr.mxu0 0.0
        %2284 = vmatpush2.xpose.msra.mxu0 0.0
        %2285 = vmatprep.subr.mxu0 0.0
        %2286 = vmatpush2.xpose.msra.mxu0 0.0
        %2287 = vmatprep.subr.mxu0 0.0
        %2288 = vmatpush2.xpose.msra.mxu0 0.0
        %2289 = vmatprep.subr.mxu0 0.0
        %2290 = vmatpush2.xpose.msra.mxu0 0.0
        %2291 = vmatprep.subr.mxu0 0.0
        %2292 = vmatpush2.xpose.msra.mxu0 0.0
        %2293 = vmatprep.subr.mxu0 0.0
        %2294 = vmatpush2.xpose.msra.mxu0 0.0
        %2295 = vmatprep.subr.mxu0 0.0
        %2296 = vmatpush2.xpose.msra.mxu0 0.0
        %2297 = vmatprep.subr.mxu0 0.0
        %2298 = vmatpush2.xpose.msra.mxu0 0.0
        %2299 = vmatprep.subr.mxu0 0.0
        %2300 = vmatpush2.xpose.msra.mxu0 0.0
        %2301 = vmatprep.subr.mxu0 0.0
        %2302 = vmatpush2.xpose.msra.mxu0 0.0
        %2303 = vmatprep.mubr.f32.mxu0 0.0
        %2304 = vmatmul.mubr.f32.gmra.mxu0 %v2217
        %v2305 = vpop.f32.mrf.mxu0
        %v2306 = vadd.f32 0.0, %v2305
        %v2307 = vpop.f32.mrf.mxu0
        %2308 = vmatprep.mubr.f32.mxu0 0.0
        %2309 = vmatmul.mubr.f32.gmra.mxu0 %v2219
        %v2310 = vpop.f32.mrf.mxu0
        %v2311 = vadd.f32 0.0, %v2310
        %v2312 = vpop.f32.mrf.mxu0
        %2313 = vmatprep.mubr.f32.mxu0 0.0
        %2314 = vmatmul.mubr.f32.gmra.mxu0 %v2221
        %v2315 = vpop.f32.mrf.mxu0
        %v2316 = vadd.f32 0.0, %v2315
        %v2317 = vpop.f32.mrf.mxu0
        %2318 = vdwg.mxu0
        %v2319 = vld [vmem:[#allocation7 + $0x400] sm:$0xff]
        %v2320 = vld [vmem:[#allocation7 + $0x408] sm:$0xff]
        %v2321 = vld [vmem:[#allocation7 + $0x410] sm:$0xff]
        %v2322 = vld [vmem:[#allocation7 + $0x418] sm:$0xff]
        %v2323 = vld [vmem:[#allocation7 + $0x420] sm:$0xff]
        %v2324 = vld [vmem:[#allocation7 + $0x428] sm:$0xff]
        %v2325 = vld [vmem:[#allocation7 + $0x430] sm:$0xff]
        %v2326 = vld [vmem:[#allocation7 + $0x438] sm:$0xff]
        %v2327 = vld [vmem:[#allocation7 + $0x440] sm:$0xff]
        %v2328 = vld [vmem:[#allocation7 + $0x448] sm:$0xff]
        %v2329 = vld [vmem:[#allocation7 + $0x450] sm:$0xff]
        %v2330 = vld [vmem:[#allocation7 + $0x458] sm:$0xff]
        %v2331 = vld [vmem:[#allocation7 + $0x460] sm:$0xff]
        %v2332 = vld [vmem:[#allocation7 + $0x468] sm:$0xff]
        %v2333 = vld [vmem:[#allocation7 + $0x470] sm:$0xff]
        %v2334 = vld [vmem:[#allocation7 + $0x478] sm:$0xff]
        %v2335 = vld [vmem:[#allocation7 + $0x480] sm:$0xff]
        %v2336 = vld [vmem:[#allocation7 + $0x488] sm:$0xff]
        %v2337 = vld [vmem:[#allocation7 + $0x490] sm:$0xff]
        %v2338 = vld [vmem:[#allocation7 + $0x498] sm:$0xff]
        %v2339 = vld [vmem:[#allocation7 + $0x4a0] sm:$0xff]
        %v2340 = vld [vmem:[#allocation7 + $0x4a8] sm:$0xff]
        %v2341 = vld [vmem:[#allocation7 + $0x4b0] sm:$0xff]
        %v2342 = vld [vmem:[#allocation7 + $0x4b8] sm:$0xff]
        %v2343 = vld [vmem:[#allocation7 + $0x4c0] sm:$0xff]
        %v2344 = vld [vmem:[#allocation7 + $0x4c8] sm:$0xff]
        %v2345 = vld [vmem:[#allocation7 + $0x4d0] sm:$0xff]
        %v2346 = vld [vmem:[#allocation7 + $0x4d8] sm:$0xff]
        %v2347 = vld [vmem:[#allocation7 + $0x4e0] sm:$0xff]
        %v2348 = vld [vmem:[#allocation7 + $0x4e8] sm:$0xff]
        %v2349 = vld [vmem:[#allocation7 + $0x4f0] sm:$0xff]
        %v2350 = vld [vmem:[#allocation7 + $0x4f8] sm:$0xff]
        %v2352 = vsel %vm517, %v2306, 0
        %v2355 = vsel %vm517, %v2311, 0
        %v2358 = vsel %vm517, %v2316, 0
        %2360 = vmatprep.subr.mxu0 0.0
        %2361 = vmatpush1.msra.mxu0 0.0
        %2362 = vmatprep.subr.mxu0 0.0
        %2363 = vmatpush1.msra.mxu0 0.0
        %2364 = vmatprep.subr.mxu0 0.0
        %2365 = vmatpush1.msra.mxu0 0.0
        %2366 = vmatprep.subr.mxu0 0.0
        %2367 = vmatpush1.msra.mxu0 0.0
        %2368 = vmatprep.subr.mxu0 0.0
        %2369 = vmatpush1.msra.mxu0 0.0
        %2370 = vmatprep.subr.mxu0 0.0
        %2371 = vmatpush1.msra.mxu0 0.0
        %2372 = vmatprep.subr.mxu0 0.0
        %2373 = vmatpush1.msra.mxu0 0.0
        %2374 = vmatprep.subr.mxu0 0.0
        %2375 = vmatpush1.msra.mxu0 0.0
        %2376 = vmatprep.subr.mxu0 %v2348
        %2377 = vmatpush1.msra.mxu0 %v2347
        %2378 = vmatprep.subr.mxu0 %v2344
        %2379 = vmatpush1.msra.mxu0 %v2343
        %2380 = vmatprep.subr.mxu0 %v2340
        %2381 = vmatpush1.msra.mxu0 %v2339
        %2382 = vmatprep.subr.mxu0 %v2336
        %2383 = vmatpush1.msra.mxu0 %v2335
        %2384 = vmatprep.subr.mxu0 %v2332
        %2385 = vmatpush1.msra.mxu0 %v2331
        %2386 = vmatprep.subr.mxu0 %v2328
        %2387 = vmatpush1.msra.mxu0 %v2327
        %2388 = vmatprep.subr.mxu0 %v2324
        %2389 = vmatpush1.msra.mxu0 %v2323
        %2390 = vmatprep.subr.mxu0 %v2320
        %2391 = vmatpush1.msra.mxu0 %v2319
        %2392 = vmatprep.subr.mxu0 0.0
        %2393 = vmatpush2.msra.mxu0 0.0
        %2394 = vmatprep.subr.mxu0 0.0
        %2395 = vmatpush2.msra.mxu0 0.0
        %2396 = vmatprep.subr.mxu0 0.0
        %2397 = vmatpush2.msra.mxu0 0.0
        %2398 = vmatprep.subr.mxu0 0.0
        %2399 = vmatpush2.msra.mxu0 0.0
        %2400 = vmatprep.subr.mxu0 0.0
        %2401 = vmatpush2.msra.mxu0 0.0
        %2402 = vmatprep.subr.mxu0 0.0
        %2403 = vmatpush2.msra.mxu0 0.0
        %2404 = vmatprep.subr.mxu0 0.0
        %2405 = vmatpush2.msra.mxu0 0.0
        %2406 = vmatprep.subr.mxu0 0.0
        %2407 = vmatpush2.msra.mxu0 0.0
        %2408 = vmatprep.subr.mxu0 0.0
        %2409 = vmatpush2.msra.mxu0 0.0
        %2410 = vmatprep.subr.mxu0 0.0
        %2411 = vmatpush2.msra.mxu0 0.0
        %2412 = vmatprep.subr.mxu0 0.0
        %2413 = vmatpush2.msra.mxu0 0.0
        %2414 = vmatprep.subr.mxu0 0.0
        %2415 = vmatpush2.msra.mxu0 0.0
        %2416 = vmatprep.subr.mxu0 0.0
        %2417 = vmatpush2.msra.mxu0 0.0
        %2418 = vmatprep.subr.mxu0 0.0
        %2419 = vmatpush2.msra.mxu0 0.0
        %2420 = vmatprep.subr.mxu0 0.0
        %2421 = vmatpush2.msra.mxu0 0.0
        %2422 = vmatprep.subr.mxu0 0.0
        %2423 = vmatpush2.msra.mxu0 0.0
        %2424 = vmatprep.mubr.f32.mxu0 0.0
        %2425 = vmatmul.mubr.f32.gmra.mxu0 %v2352
        %v2426 = vpop.f32.mrf.mxu0
        %v2427 = vadd.f32 0.0, %v2426
        %v2428 = vpop.f32.mrf.mxu0
        %v2429 = vadd.f32 0.0, %v2428
        %2430 = vmatprep.mubr.f32.mxu0 0.0
        %2431 = vmatmul.mubr.f32.gmra.mxu0 %v2355
        %v2432 = vpop.f32.mrf.mxu0
        %v2433 = vadd.f32 0.0, %v2432
        %v2434 = vpop.f32.mrf.mxu0
        %v2435 = vadd.f32 0.0, %v2434
        %2436 = vmatprep.mubr.f32.mxu0 0.0
        %2437 = vmatmul.mubr.f32.gmra.mxu0 %v2358
        %v2438 = vpop.f32.mrf.mxu0
        %v2439 = vadd.f32 0.0, %v2438
        %v2440 = vpop.f32.mrf.mxu0
        %v2441 = vadd.f32 0.0, %v2440
        %2442 = vdwg.mxu0
        %2443 = vmatprep.subr.mxu0 0.0
        %2444 = vmatpush1.msra.mxu0 0.0
        %2445 = vmatprep.subr.mxu0 0.0
        %2446 = vmatpush1.msra.mxu0 0.0
        %2447 = vmatprep.subr.mxu0 0.0
        %2448 = vmatpush1.msra.mxu0 0.0
        %2449 = vmatprep.subr.mxu0 0.0
        %2450 = vmatpush1.msra.mxu0 0.0
        %2451 = vmatprep.subr.mxu0 0.0
        %2452 = vmatpush1.msra.mxu0 0.0
        %2453 = vmatprep.subr.mxu0 0.0
        %2454 = vmatpush1.msra.mxu0 0.0
        %2455 = vmatprep.subr.mxu0 0.0
        %2456 = vmatpush1.msra.mxu0 0.0
        %2457 = vmatprep.subr.mxu0 0.0
        %2458 = vmatpush1.msra.mxu0 0.0
        %2459 = vmatprep.subr.mxu0 %v2350
        %2460 = vmatpush1.msra.mxu0 %v2349
        %2461 = vmatprep.subr.mxu0 %v2346
        %2462 = vmatpush1.msra.mxu0 %v2345
        %2463 = vmatprep.subr.mxu0 %v2342
        %2464 = vmatpush1.msra.mxu0 %v2341
        %2465 = vmatprep.subr.mxu0 %v2338
        %2466 = vmatpush1.msra.mxu0 %v2337
        %2467 = vmatprep.subr.mxu0 %v2334
        %2468 = vmatpush1.msra.mxu0 %v2333
        %2469 = vmatprep.subr.mxu0 %v2330
        %2470 = vmatpush1.msra.mxu0 %v2329
        %2471 = vmatprep.subr.mxu0 %v2326
        %2472 = vmatpush1.msra.mxu0 %v2325
        %2473 = vmatprep.subr.mxu0 %v2322
        %2474 = vmatpush1.msra.mxu0 %v2321
        %2475 = vmatprep.subr.mxu0 0.0
        %2476 = vmatpush2.msra.mxu0 0.0
        %2477 = vmatprep.subr.mxu0 0.0
        %2478 = vmatpush2.msra.mxu0 0.0
        %2479 = vmatprep.subr.mxu0 0.0
        %2480 = vmatpush2.msra.mxu0 0.0
        %2481 = vmatprep.subr.mxu0 0.0
        %2482 = vmatpush2.msra.mxu0 0.0
        %2483 = vmatprep.subr.mxu0 0.0
        %2484 = vmatpush2.msra.mxu0 0.0
        %2485 = vmatprep.subr.mxu0 0.0
        %2486 = vmatpush2.msra.mxu0 0.0
        %2487 = vmatprep.subr.mxu0 0.0
        %2488 = vmatpush2.msra.mxu0 0.0
        %2489 = vmatprep.subr.mxu0 0.0
        %2490 = vmatpush2.msra.mxu0 0.0
        %2491 = vmatprep.subr.mxu0 0.0
        %2492 = vmatpush2.msra.mxu0 0.0
        %2493 = vmatprep.subr.mxu0 0.0
        %2494 = vmatpush2.msra.mxu0 0.0
        %2495 = vmatprep.subr.mxu0 0.0
        %2496 = vmatpush2.msra.mxu0 0.0
        %2497 = vmatprep.subr.mxu0 0.0
        %2498 = vmatpush2.msra.mxu0 0.0
        %2499 = vmatprep.subr.mxu0 0.0
        %2500 = vmatpush2.msra.mxu0 0.0
        %2501 = vmatprep.subr.mxu0 0.0
        %2502 = vmatpush2.msra.mxu0 0.0
        %2503 = vmatprep.subr.mxu0 0.0
        %2504 = vmatpush2.msra.mxu0 0.0
        %2505 = vmatprep.subr.mxu0 0.0
        %2506 = vmatpush2.msra.mxu0 0.0
        %2507 = vmatprep.mubr.f32.mxu0 0.0
        %2508 = vmatmul.mubr.f32.gmra.mxu0 %v2352
        %v2509 = vpop.f32.mrf.mxu0
        %v2510 = vadd.f32 0.0, %v2509
        %v2511 = vpop.f32.mrf.mxu0
        %v2512 = vadd.f32 0.0, %v2511
        %2513 = vmatprep.mubr.f32.mxu0 0.0
        %2514 = vmatmul.mubr.f32.gmra.mxu0 %v2355
        %v2515 = vpop.f32.mrf.mxu0
        %v2516 = vadd.f32 0.0, %v2515
        %v2517 = vpop.f32.mrf.mxu0
        %v2518 = vadd.f32 0.0, %v2517
        %2519 = vmatprep.mubr.f32.mxu0 0.0
        %2520 = vmatmul.mubr.f32.gmra.mxu0 %v2358
        %v2521 = vpop.f32.mrf.mxu0
        %v2522 = vadd.f32 0.0, %v2521
        %v2523 = vpop.f32.mrf.mxu0
        %v2524 = vadd.f32 0.0, %v2523
        %2525 = vdwg.mxu0
        %v2526 = vadd.f32 %v2183, %v2427
        %v2527 = vadd.f32 %v2184, %v2429
        %v2528 = vadd.f32 %v2185, %v2510
        %v2529 = vadd.f32 %v2186, %v2512
        %v2530 = vadd.f32 %v2187, %v2433
        %v2531 = vadd.f32 %v2188, %v2435
        %v2532 = vadd.f32 %v2189, %v2516
        %v2533 = vadd.f32 %v2190, %v2518
        %v2534 = vadd.f32 %v2191, %v2439
        %v2535 = vadd.f32 %v2192, %v2441
        %v2536 = vadd.f32 %v2193, %v2522
        %v2537 = vadd.f32 %v2194, %v2524
        %2538 = vrot.lane.b32.xlu0 %v594, 88
        %v2539 = vpop.permute.xlu0 %2538
        %2540 = vrot.lane.b32.xlu0 %v599, 88
        %v2541 = vpop.permute.xlu0 %2540
        %2542 = vrot.lane.b32.xlu0 %v604, 88
        %v2543 = vpop.permute.xlu0 %2542
        %2544 = vrot.lane.b32.xlu0 %v706, 88
        %v2545 = vpop.permute.xlu0 %2544
        %2546 = vrot.lane.b32.xlu0 %v711, 88
        %v2547 = vpop.permute.xlu0 %2546
        %2548 = vrot.lane.b32.xlu0 %v716, 88
        %v2549 = vpop.permute.xlu0 %2548
        %2550 = vrot.lane.b32.xlu0 %v721, 88
        %v2551 = vpop.permute.xlu0 %2550
        %2552 = vrot.lane.b32.xlu0 %v726, 88
        %v2553 = vpop.permute.xlu0 %2552
        %2554 = vrot.lane.b32.xlu0 %v731, 88
        %v2555 = vpop.permute.xlu0 %2554
        %2556 = vrot.lane.b32.xlu0 %v736, 88
        %v2557 = vpop.permute.xlu0 %2556
        %2558 = vrot.lane.b32.xlu0 %v741, 88
        %v2559 = vpop.permute.xlu0 %2558
        %v2560 = vsel %vm857, %v2539, 0
        %v2562 = vsel %vm857, %v2541, 0
        %v2564 = vsel %vm857, %v2543, 0
        %v2566 = vsel %vm857, %v2545, 0
        %v2568 = vsel %vm857, %v2547, 0
        %v2570 = vsel %vm857, %v2549, 0
        %v2572 = vsel %vm857, %v2551, 0
        %v2574 = vsel %vm857, %v2553, 0
        %v2576 = vsel %vm857, %v2555, 0
        %v2578 = vsel %vm857, %v2557, 0
        %v2580 = vsel %vm857, %v2559, 0
        %2582 = vmatprep.subr.mxu0 0.0
        %2583 = vmatpush1.xpose.msra.mxu0 0.0
        %2584 = vmatprep.subr.mxu0 0.0
        %2585 = vmatpush1.xpose.msra.mxu0 0.0
        %2586 = vmatprep.subr.mxu0 0.0
        %2587 = vmatpush1.xpose.msra.mxu0 0.0
        %2588 = vmatprep.subr.mxu0 0.0
        %2589 = vmatpush1.xpose.msra.mxu0 0.0
        %2590 = vmatprep.subr.mxu0 0.0
        %2591 = vmatpush1.xpose.msra.mxu0 0.0
        %2592 = vmatprep.subr.mxu0 0.0
        %2593 = vmatpush1.xpose.msra.mxu0 0.0
        %2594 = vmatprep.subr.mxu0 0.0
        %2595 = vmatpush1.xpose.msra.mxu0 0.0
        %2596 = vmatprep.subr.mxu0 0.0
        %2597 = vmatpush1.xpose.msra.mxu0 0.0
        %2598 = vmatprep.subr.mxu0 0.0
        %2599 = vmatpush1.xpose.msra.mxu0 %v2580
        %2600 = vmatprep.subr.mxu0 0.0
        %2601 = vmatpush1.xpose.msra.mxu0 %v2578
        %2602 = vmatprep.subr.mxu0 0.0
        %2603 = vmatpush1.xpose.msra.mxu0 %v2576
        %2604 = vmatprep.subr.mxu0 0.0
        %2605 = vmatpush1.xpose.msra.mxu0 %v2574
        %2606 = vmatprep.subr.mxu0 0.0
        %2607 = vmatpush1.xpose.msra.mxu0 %v2572
        %2608 = vmatprep.subr.mxu0 0.0
        %2609 = vmatpush1.xpose.msra.mxu0 %v2570
        %2610 = vmatprep.subr.mxu0 0.0
        %2611 = vmatpush1.xpose.msra.mxu0 %v2568
        %2612 = vmatprep.subr.mxu0 0.0
        %2613 = vmatpush1.xpose.msra.mxu0 %v2566
        %2614 = vmatprep.subr.mxu0 0.0
        %2615 = vmatpush2.xpose.msra.mxu0 0.0
        %2616 = vmatprep.subr.mxu0 0.0
        %2617 = vmatpush2.xpose.msra.mxu0 0.0
        %2618 = vmatprep.subr.mxu0 0.0
        %2619 = vmatpush2.xpose.msra.mxu0 0.0
        %2620 = vmatprep.subr.mxu0 0.0
        %2621 = vmatpush2.xpose.msra.mxu0 0.0
        %2622 = vmatprep.subr.mxu0 0.0
        %2623 = vmatpush2.xpose.msra.mxu0 0.0
        %2624 = vmatprep.subr.mxu0 0.0
        %2625 = vmatpush2.xpose.msra.mxu0 0.0
        %2626 = vmatprep.subr.mxu0 0.0
        %2627 = vmatpush2.xpose.msra.mxu0 0.0
        %2628 = vmatprep.subr.mxu0 0.0
        %2629 = vmatpush2.xpose.msra.mxu0 0.0
        %2630 = vmatprep.subr.mxu0 0.0
        %2631 = vmatpush2.xpose.msra.mxu0 0.0
        %2632 = vmatprep.subr.mxu0 0.0
        %2633 = vmatpush2.xpose.msra.mxu0 0.0
        %2634 = vmatprep.subr.mxu0 0.0
        %2635 = vmatpush2.xpose.msra.mxu0 0.0
        %2636 = vmatprep.subr.mxu0 0.0
        %2637 = vmatpush2.xpose.msra.mxu0 0.0
        %2638 = vmatprep.subr.mxu0 0.0
        %2639 = vmatpush2.xpose.msra.mxu0 0.0
        %2640 = vmatprep.subr.mxu0 0.0
        %2641 = vmatpush2.xpose.msra.mxu0 0.0
        %2642 = vmatprep.subr.mxu0 0.0
        %2643 = vmatpush2.xpose.msra.mxu0 0.0
        %2644 = vmatprep.subr.mxu0 0.0
        %2645 = vmatpush2.xpose.msra.mxu0 0.0
        %2646 = vmatprep.mubr.f32.mxu0 0.0
        %2647 = vmatmul.mubr.f32.gmra.mxu0 %v2560
        %v2648 = vpop.f32.mrf.mxu0
        %v2649 = vadd.f32 0.0, %v2648
        %v2650 = vpop.f32.mrf.mxu0
        %2651 = vmatprep.mubr.f32.mxu0 0.0
        %2652 = vmatmul.mubr.f32.gmra.mxu0 %v2562
        %v2653 = vpop.f32.mrf.mxu0
        %v2654 = vadd.f32 0.0, %v2653
        %v2655 = vpop.f32.mrf.mxu0
        %2656 = vmatprep.mubr.f32.mxu0 0.0
        %2657 = vmatmul.mubr.f32.gmra.mxu0 %v2564
        %v2658 = vpop.f32.mrf.mxu0
        %v2659 = vadd.f32 0.0, %v2658
        %v2660 = vpop.f32.mrf.mxu0
        %2661 = vdwg.mxu0
        %v2662 = vld [vmem:[#allocation7 + $0x500] sm:$0xff]
        %v2663 = vld [vmem:[#allocation7 + $0x508] sm:$0xff]
        %v2664 = vld [vmem:[#allocation7 + $0x510] sm:$0xff]
        %v2665 = vld [vmem:[#allocation7 + $0x518] sm:$0xff]
        %v2666 = vld [vmem:[#allocation7 + $0x520] sm:$0xff]
        %v2667 = vld [vmem:[#allocation7 + $0x528] sm:$0xff]
        %v2668 = vld [vmem:[#allocation7 + $0x530] sm:$0xff]
        %v2669 = vld [vmem:[#allocation7 + $0x538] sm:$0xff]
        %v2670 = vld [vmem:[#allocation7 + $0x540] sm:$0xff]
        %v2671 = vld [vmem:[#allocation7 + $0x548] sm:$0xff]
        %v2672 = vld [vmem:[#allocation7 + $0x550] sm:$0xff]
        %v2673 = vld [vmem:[#allocation7 + $0x558] sm:$0xff]
        %v2674 = vld [vmem:[#allocation7 + $0x560] sm:$0xff]
        %v2675 = vld [vmem:[#allocation7 + $0x568] sm:$0xff]
        %v2676 = vld [vmem:[#allocation7 + $0x570] sm:$0xff]
        %v2677 = vld [vmem:[#allocation7 + $0x578] sm:$0xff]
        %v2678 = vld [vmem:[#allocation7 + $0x580] sm:$0xff]
        %v2679 = vld [vmem:[#allocation7 + $0x588] sm:$0xff]
        %v2680 = vld [vmem:[#allocation7 + $0x590] sm:$0xff]
        %v2681 = vld [vmem:[#allocation7 + $0x598] sm:$0xff]
        %v2682 = vld [vmem:[#allocation7 + $0x5a0] sm:$0xff]
        %v2683 = vld [vmem:[#allocation7 + $0x5a8] sm:$0xff]
        %v2684 = vld [vmem:[#allocation7 + $0x5b0] sm:$0xff]
        %v2685 = vld [vmem:[#allocation7 + $0x5b8] sm:$0xff]
        %v2686 = vld [vmem:[#allocation7 + $0x5c0] sm:$0xff]
        %v2687 = vld [vmem:[#allocation7 + $0x5c8] sm:$0xff]
        %v2688 = vld [vmem:[#allocation7 + $0x5d0] sm:$0xff]
        %v2689 = vld [vmem:[#allocation7 + $0x5d8] sm:$0xff]
        %v2690 = vld [vmem:[#allocation7 + $0x5e0] sm:$0xff]
        %v2691 = vld [vmem:[#allocation7 + $0x5e8] sm:$0xff]
        %v2692 = vld [vmem:[#allocation7 + $0x5f0] sm:$0xff]
        %v2693 = vld [vmem:[#allocation7 + $0x5f8] sm:$0xff]
        %v2695 = vsel %vm517, %v2649, 0
        %v2698 = vsel %vm517, %v2654, 0
        %v2701 = vsel %vm517, %v2659, 0
        %2703 = vmatprep.subr.mxu0 0.0
        %2704 = vmatpush1.msra.mxu0 0.0
        %2705 = vmatprep.subr.mxu0 0.0
        %2706 = vmatpush1.msra.mxu0 0.0
        %2707 = vmatprep.subr.mxu0 0.0
        %2708 = vmatpush1.msra.mxu0 0.0
        %2709 = vmatprep.subr.mxu0 0.0
        %2710 = vmatpush1.msra.mxu0 0.0
        %2711 = vmatprep.subr.mxu0 0.0
        %2712 = vmatpush1.msra.mxu0 0.0
        %2713 = vmatprep.subr.mxu0 0.0
        %2714 = vmatpush1.msra.mxu0 0.0
        %2715 = vmatprep.subr.mxu0 0.0
        %2716 = vmatpush1.msra.mxu0 0.0
        %2717 = vmatprep.subr.mxu0 0.0
        %2718 = vmatpush1.msra.mxu0 0.0
        %2719 = vmatprep.subr.mxu0 %v2691
        %2720 = vmatpush1.msra.mxu0 %v2690
        %2721 = vmatprep.subr.mxu0 %v2687
        %2722 = vmatpush1.msra.mxu0 %v2686
        %2723 = vmatprep.subr.mxu0 %v2683
        %2724 = vmatpush1.msra.mxu0 %v2682
        %2725 = vmatprep.subr.mxu0 %v2679
        %2726 = vmatpush1.msra.mxu0 %v2678
        %2727 = vmatprep.subr.mxu0 %v2675
        %2728 = vmatpush1.msra.mxu0 %v2674
        %2729 = vmatprep.subr.mxu0 %v2671
        %2730 = vmatpush1.msra.mxu0 %v2670
        %2731 = vmatprep.subr.mxu0 %v2667
        %2732 = vmatpush1.msra.mxu0 %v2666
        %2733 = vmatprep.subr.mxu0 %v2663
        %2734 = vmatpush1.msra.mxu0 %v2662
        %2735 = vmatprep.subr.mxu0 0.0
        %2736 = vmatpush2.msra.mxu0 0.0
        %2737 = vmatprep.subr.mxu0 0.0
        %2738 = vmatpush2.msra.mxu0 0.0
        %2739 = vmatprep.subr.mxu0 0.0
        %2740 = vmatpush2.msra.mxu0 0.0
        %2741 = vmatprep.subr.mxu0 0.0
        %2742 = vmatpush2.msra.mxu0 0.0
        %2743 = vmatprep.subr.mxu0 0.0
        %2744 = vmatpush2.msra.mxu0 0.0
        %2745 = vmatprep.subr.mxu0 0.0
        %2746 = vmatpush2.msra.mxu0 0.0
        %2747 = vmatprep.subr.mxu0 0.0
        %2748 = vmatpush2.msra.mxu0 0.0
        %2749 = vmatprep.subr.mxu0 0.0
        %2750 = vmatpush2.msra.mxu0 0.0
        %2751 = vmatprep.subr.mxu0 0.0
        %2752 = vmatpush2.msra.mxu0 0.0
        %2753 = vmatprep.subr.mxu0 0.0
        %2754 = vmatpush2.msra.mxu0 0.0
        %2755 = vmatprep.subr.mxu0 0.0
        %2756 = vmatpush2.msra.mxu0 0.0
        %2757 = vmatprep.subr.mxu0 0.0
        %2758 = vmatpush2.msra.mxu0 0.0
        %2759 = vmatprep.subr.mxu0 0.0
        %2760 = vmatpush2.msra.mxu0 0.0
        %2761 = vmatprep.subr.mxu0 0.0
        %2762 = vmatpush2.msra.mxu0 0.0
        %2763 = vmatprep.subr.mxu0 0.0
        %2764 = vmatpush2.msra.mxu0 0.0
        %2765 = vmatprep.subr.mxu0 0.0
        %2766 = vmatpush2.msra.mxu0 0.0
        %2767 = vmatprep.mubr.f32.mxu0 0.0
        %2768 = vmatmul.mubr.f32.gmra.mxu0 %v2695
        %v2769 = vpop.f32.mrf.mxu0
        %v2770 = vadd.f32 0.0, %v2769
        %v2771 = vpop.f32.mrf.mxu0
        %v2772 = vadd.f32 0.0, %v2771
        %2773 = vmatprep.mubr.f32.mxu0 0.0
        %2774 = vmatmul.mubr.f32.gmra.mxu0 %v2698
        %v2775 = vpop.f32.mrf.mxu0
        %v2776 = vadd.f32 0.0, %v2775
        %v2777 = vpop.f32.mrf.mxu0
        %v2778 = vadd.f32 0.0, %v2777
        %2779 = vmatprep.mubr.f32.mxu0 0.0
        %2780 = vmatmul.mubr.f32.gmra.mxu0 %v2701
        %v2781 = vpop.f32.mrf.mxu0
        %v2782 = vadd.f32 0.0, %v2781
        %v2783 = vpop.f32.mrf.mxu0
        %v2784 = vadd.f32 0.0, %v2783
        %2785 = vdwg.mxu0
        %2786 = vmatprep.subr.mxu0 0.0
        %2787 = vmatpush1.msra.mxu0 0.0
        %2788 = vmatprep.subr.mxu0 0.0
        %2789 = vmatpush1.msra.mxu0 0.0
        %2790 = vmatprep.subr.mxu0 0.0
        %2791 = vmatpush1.msra.mxu0 0.0
        %2792 = vmatprep.subr.mxu0 0.0
        %2793 = vmatpush1.msra.mxu0 0.0
        %2794 = vmatprep.subr.mxu0 0.0
        %2795 = vmatpush1.msra.mxu0 0.0
        %2796 = vmatprep.subr.mxu0 0.0
        %2797 = vmatpush1.msra.mxu0 0.0
        %2798 = vmatprep.subr.mxu0 0.0
        %2799 = vmatpush1.msra.mxu0 0.0
        %2800 = vmatprep.subr.mxu0 0.0
        %2801 = vmatpush1.msra.mxu0 0.0
        %2802 = vmatprep.subr.mxu0 %v2693
        %2803 = vmatpush1.msra.mxu0 %v2692
        %2804 = vmatprep.subr.mxu0 %v2689
        %2805 = vmatpush1.msra.mxu0 %v2688
        %2806 = vmatprep.subr.mxu0 %v2685
        %2807 = vmatpush1.msra.mxu0 %v2684
        %2808 = vmatprep.subr.mxu0 %v2681
        %2809 = vmatpush1.msra.mxu0 %v2680
        %2810 = vmatprep.subr.mxu0 %v2677
        %2811 = vmatpush1.msra.mxu0 %v2676
        %2812 = vmatprep.subr.mxu0 %v2673
        %2813 = vmatpush1.msra.mxu0 %v2672
        %2814 = vmatprep.subr.mxu0 %v2669
        %2815 = vmatpush1.msra.mxu0 %v2668
        %2816 = vmatprep.subr.mxu0 %v2665
        %2817 = vmatpush1.msra.mxu0 %v2664
        %2818 = vmatprep.subr.mxu0 0.0
        %2819 = vmatpush2.msra.mxu0 0.0
        %2820 = vmatprep.subr.mxu0 0.0
        %2821 = vmatpush2.msra.mxu0 0.0
        %2822 = vmatprep.subr.mxu0 0.0
        %2823 = vmatpush2.msra.mxu0 0.0
        %2824 = vmatprep.subr.mxu0 0.0
        %2825 = vmatpush2.msra.mxu0 0.0
        %2826 = vmatprep.subr.mxu0 0.0
        %2827 = vmatpush2.msra.mxu0 0.0
        %2828 = vmatprep.subr.mxu0 0.0
        %2829 = vmatpush2.msra.mxu0 0.0
        %2830 = vmatprep.subr.mxu0 0.0
        %2831 = vmatpush2.msra.mxu0 0.0
        %2832 = vmatprep.subr.mxu0 0.0
        %2833 = vmatpush2.msra.mxu0 0.0
        %2834 = vmatprep.subr.mxu0 0.0
        %2835 = vmatpush2.msra.mxu0 0.0
        %2836 = vmatprep.subr.mxu0 0.0
        %2837 = vmatpush2.msra.mxu0 0.0
        %2838 = vmatprep.subr.mxu0 0.0
        %2839 = vmatpush2.msra.mxu0 0.0
        %2840 = vmatprep.subr.mxu0 0.0
        %2841 = vmatpush2.msra.mxu0 0.0
        %2842 = vmatprep.subr.mxu0 0.0
        %2843 = vmatpush2.msra.mxu0 0.0
        %2844 = vmatprep.subr.mxu0 0.0
        %2845 = vmatpush2.msra.mxu0 0.0
        %2846 = vmatprep.subr.mxu0 0.0
        %2847 = vmatpush2.msra.mxu0 0.0
        %2848 = vmatprep.subr.mxu0 0.0
        %2849 = vmatpush2.msra.mxu0 0.0
        %2850 = vmatprep.mubr.f32.mxu0 0.0
        %2851 = vmatmul.mubr.f32.gmra.mxu0 %v2695
        %v2852 = vpop.f32.mrf.mxu0
        %v2853 = vadd.f32 0.0, %v2852
        %v2854 = vpop.f32.mrf.mxu0
        %v2855 = vadd.f32 0.0, %v2854
        %2856 = vmatprep.mubr.f32.mxu0 0.0
        %2857 = vmatmul.mubr.f32.gmra.mxu0 %v2698
        %v2858 = vpop.f32.mrf.mxu0
        %v2859 = vadd.f32 0.0, %v2858
        %v2860 = vpop.f32.mrf.mxu0
        %v2861 = vadd.f32 0.0, %v2860
        %2862 = vmatprep.mubr.f32.mxu0 0.0
        %2863 = vmatmul.mubr.f32.gmra.mxu0 %v2701
        %v2864 = vpop.f32.mrf.mxu0
        %v2865 = vadd.f32 0.0, %v2864
        %v2866 = vpop.f32.mrf.mxu0
        %v2867 = vadd.f32 0.0, %v2866
        %2868 = vdwg.mxu0
        %v2869 = vadd.f32 %v2526, %v2770
        %v2870 = vadd.f32 %v2527, %v2772
        %v2871 = vadd.f32 %v2528, %v2853
        %v2872 = vadd.f32 %v2529, %v2855
        %v2873 = vadd.f32 %v2530, %v2776
        %v2874 = vadd.f32 %v2531, %v2778
        %v2875 = vadd.f32 %v2532, %v2859
        %v2876 = vadd.f32 %v2533, %v2861
        %v2877 = vadd.f32 %v2534, %v2782
        %v2878 = vadd.f32 %v2535, %v2784
        %v2879 = vadd.f32 %v2536, %v2865
        %v2880 = vadd.f32 %v2537, %v2867
        %2881 = vrot.lane.b32.xlu0 %v594, 80
        %v2882 = vpop.permute.xlu0 %2881
        %2883 = vrot.lane.b32.xlu0 %v599, 80
        %v2884 = vpop.permute.xlu0 %2883
        %2885 = vrot.lane.b32.xlu0 %v604, 80
        %v2886 = vpop.permute.xlu0 %2885
        %2887 = vrot.lane.b32.xlu0 %v706, 80
        %v2888 = vpop.permute.xlu0 %2887
        %2889 = vrot.lane.b32.xlu0 %v711, 80
        %v2890 = vpop.permute.xlu0 %2889
        %2891 = vrot.lane.b32.xlu0 %v716, 80
        %v2892 = vpop.permute.xlu0 %2891
        %2893 = vrot.lane.b32.xlu0 %v721, 80
        %v2894 = vpop.permute.xlu0 %2893
        %2895 = vrot.lane.b32.xlu0 %v726, 80
        %v2896 = vpop.permute.xlu0 %2895
        %2897 = vrot.lane.b32.xlu0 %v731, 80
        %v2898 = vpop.permute.xlu0 %2897
        %2899 = vrot.lane.b32.xlu0 %v736, 80
        %v2900 = vpop.permute.xlu0 %2899
        %2901 = vrot.lane.b32.xlu0 %v741, 80
        %v2902 = vpop.permute.xlu0 %2901
        %v2903 = vsel %vm857, %v2882, 0
        %v2905 = vsel %vm857, %v2884, 0
        %v2907 = vsel %vm857, %v2886, 0
        %v2909 = vsel %vm857, %v2888, 0
        %v2911 = vsel %vm857, %v2890, 0
        %v2913 = vsel %vm857, %v2892, 0
        %v2915 = vsel %vm857, %v2894, 0
        %v2917 = vsel %vm857, %v2896, 0
        %v2919 = vsel %vm857, %v2898, 0
        %v2921 = vsel %vm857, %v2900, 0
        %v2923 = vsel %vm857, %v2902, 0
        %2925 = vmatprep.subr.mxu0 0.0
        %2926 = vmatpush1.xpose.msra.mxu0 0.0
        %2927 = vmatprep.subr.mxu0 0.0
        %2928 = vmatpush1.xpose.msra.mxu0 0.0
        %2929 = vmatprep.subr.mxu0 0.0
        %2930 = vmatpush1.xpose.msra.mxu0 0.0
        %2931 = vmatprep.subr.mxu0 0.0
        %2932 = vmatpush1.xpose.msra.mxu0 0.0
        %2933 = vmatprep.subr.mxu0 0.0
        %2934 = vmatpush1.xpose.msra.mxu0 0.0
        %2935 = vmatprep.subr.mxu0 0.0
        %2936 = vmatpush1.xpose.msra.mxu0 0.0
        %2937 = vmatprep.subr.mxu0 0.0
        %2938 = vmatpush1.xpose.msra.mxu0 0.0
        %2939 = vmatprep.subr.mxu0 0.0
        %2940 = vmatpush1.xpose.msra.mxu0 0.0
        %2941 = vmatprep.subr.mxu0 0.0
        %2942 = vmatpush1.xpose.msra.mxu0 %v2923
        %2943 = vmatprep.subr.mxu0 0.0
        %2944 = vmatpush1.xpose.msra.mxu0 %v2921
        %2945 = vmatprep.subr.mxu0 0.0
        %2946 = vmatpush1.xpose.msra.mxu0 %v2919
        %2947 = vmatprep.subr.mxu0 0.0
        %2948 = vmatpush1.xpose.msra.mxu0 %v2917
        %2949 = vmatprep.subr.mxu0 0.0
        %2950 = vmatpush1.xpose.msra.mxu0 %v2915
        %2951 = vmatprep.subr.mxu0 0.0
        %2952 = vmatpush1.xpose.msra.mxu0 %v2913
        %2953 = vmatprep.subr.mxu0 0.0
        %2954 = vmatpush1.xpose.msra.mxu0 %v2911
        %2955 = vmatprep.subr.mxu0 0.0
        %2956 = vmatpush1.xpose.msra.mxu0 %v2909
        %2957 = vmatprep.subr.mxu0 0.0
        %2958 = vmatpush2.xpose.msra.mxu0 0.0
        %2959 = vmatprep.subr.mxu0 0.0
        %2960 = vmatpush2.xpose.msra.mxu0 0.0
        %2961 = vmatprep.subr.mxu0 0.0
        %2962 = vmatpush2.xpose.msra.mxu0 0.0
        %2963 = vmatprep.subr.mxu0 0.0
        %2964 = vmatpush2.xpose.msra.mxu0 0.0
        %2965 = vmatprep.subr.mxu0 0.0
        %2966 = vmatpush2.xpose.msra.mxu0 0.0
        %2967 = vmatprep.subr.mxu0 0.0
        %2968 = vmatpush2.xpose.msra.mxu0 0.0
        %2969 = vmatprep.subr.mxu0 0.0
        %2970 = vmatpush2.xpose.msra.mxu0 0.0
        %2971 = vmatprep.subr.mxu0 0.0
        %2972 = vmatpush2.xpose.msra.mxu0 0.0
        %2973 = vmatprep.subr.mxu0 0.0
        %2974 = vmatpush2.xpose.msra.mxu0 0.0
        %2975 = vmatprep.subr.mxu0 0.0
        %2976 = vmatpush2.xpose.msra.mxu0 0.0
        %2977 = vmatprep.subr.mxu0 0.0
        %2978 = vmatpush2.xpose.msra.mxu0 0.0
        %2979 = vmatprep.subr.mxu0 0.0
        %2980 = vmatpush2.xpose.msra.mxu0 0.0
        %2981 = vmatprep.subr.mxu0 0.0
        %2982 = vmatpush2.xpose.msra.mxu0 0.0
        %2983 = vmatprep.subr.mxu0 0.0
        %2984 = vmatpush2.xpose.msra.mxu0 0.0
        %2985 = vmatprep.subr.mxu0 0.0
        %2986 = vmatpush2.xpose.msra.mxu0 0.0
        %2987 = vmatprep.subr.mxu0 0.0
        %2988 = vmatpush2.xpose.msra.mxu0 0.0
        %2989 = vmatprep.mubr.f32.mxu0 0.0
        %2990 = vmatmul.mubr.f32.gmra.mxu0 %v2903
        %v2991 = vpop.f32.mrf.mxu0
        %v2992 = vadd.f32 0.0, %v2991
        %v2993 = vpop.f32.mrf.mxu0
        %2994 = vmatprep.mubr.f32.mxu0 0.0
        %2995 = vmatmul.mubr.f32.gmra.mxu0 %v2905
        %v2996 = vpop.f32.mrf.mxu0
        %v2997 = vadd.f32 0.0, %v2996
        %v2998 = vpop.f32.mrf.mxu0
        %2999 = vmatprep.mubr.f32.mxu0 0.0
        %3000 = vmatmul.mubr.f32.gmra.mxu0 %v2907
        %v3001 = vpop.f32.mrf.mxu0
        %v3002 = vadd.f32 0.0, %v3001
        %v3003 = vpop.f32.mrf.mxu0
        %3004 = vdwg.mxu0
        %v3005 = vld [vmem:[#allocation7 + $0x600] sm:$0xff]
        %v3006 = vld [vmem:[#allocation7 + $0x608] sm:$0xff]
        %v3007 = vld [vmem:[#allocation7 + $0x610] sm:$0xff]
        %v3008 = vld [vmem:[#allocation7 + $0x618] sm:$0xff]
        %v3009 = vld [vmem:[#allocation7 + $0x620] sm:$0xff]
        %v3010 = vld [vmem:[#allocation7 + $0x628] sm:$0xff]
        %v3011 = vld [vmem:[#allocation7 + $0x630] sm:$0xff]
        %v3012 = vld [vmem:[#allocation7 + $0x638] sm:$0xff]
        %v3013 = vld [vmem:[#allocation7 + $0x640] sm:$0xff]
        %v3014 = vld [vmem:[#allocation7 + $0x648] sm:$0xff]
        %v3015 = vld [vmem:[#allocation7 + $0x650] sm:$0xff]
        %v3016 = vld [vmem:[#allocation7 + $0x658] sm:$0xff]
        %v3017 = vld [vmem:[#allocation7 + $0x660] sm:$0xff]
        %v3018 = vld [vmem:[#allocation7 + $0x668] sm:$0xff]
        %v3019 = vld [vmem:[#allocation7 + $0x670] sm:$0xff]
        %v3020 = vld [vmem:[#allocation7 + $0x678] sm:$0xff]
        %v3021 = vld [vmem:[#allocation7 + $0x680] sm:$0xff]
        %v3022 = vld [vmem:[#allocation7 + $0x688] sm:$0xff]
        %v3023 = vld [vmem:[#allocation7 + $0x690] sm:$0xff]
        %v3024 = vld [vmem:[#allocation7 + $0x698] sm:$0xff]
        %v3025 = vld [vmem:[#allocation7 + $0x6a0] sm:$0xff]
        %v3026 = vld [vmem:[#allocation7 + $0x6a8] sm:$0xff]
        %v3027 = vld [vmem:[#allocation7 + $0x6b0] sm:$0xff]
        %v3028 = vld [vmem:[#allocation7 + $0x6b8] sm:$0xff]
        %v3029 = vld [vmem:[#allocation7 + $0x6c0] sm:$0xff]
        %v3030 = vld [vmem:[#allocation7 + $0x6c8] sm:$0xff]
        %v3031 = vld [vmem:[#allocation7 + $0x6d0] sm:$0xff]
        %v3032 = vld [vmem:[#allocation7 + $0x6d8] sm:$0xff]
        %v3033 = vld [vmem:[#allocation7 + $0x6e0] sm:$0xff]
        %v3034 = vld [vmem:[#allocation7 + $0x6e8] sm:$0xff]
        %v3035 = vld [vmem:[#allocation7 + $0x6f0] sm:$0xff]
        %v3036 = vld [vmem:[#allocation7 + $0x6f8] sm:$0xff]
        %v3038 = vsel %vm517, %v2992, 0
        %v3041 = vsel %vm517, %v2997, 0
        %v3044 = vsel %vm517, %v3002, 0
        %3046 = vmatprep.subr.mxu0 0.0
        %3047 = vmatpush1.msra.mxu0 0.0
        %3048 = vmatprep.subr.mxu0 0.0
        %3049 = vmatpush1.msra.mxu0 0.0
        %3050 = vmatprep.subr.mxu0 0.0
        %3051 = vmatpush1.msra.mxu0 0.0
        %3052 = vmatprep.subr.mxu0 0.0
        %3053 = vmatpush1.msra.mxu0 0.0
        %3054 = vmatprep.subr.mxu0 0.0
        %3055 = vmatpush1.msra.mxu0 0.0
        %3056 = vmatprep.subr.mxu0 0.0
        %3057 = vmatpush1.msra.mxu0 0.0
        %3058 = vmatprep.subr.mxu0 0.0
        %3059 = vmatpush1.msra.mxu0 0.0
        %3060 = vmatprep.subr.mxu0 0.0
        %3061 = vmatpush1.msra.mxu0 0.0
        %3062 = vmatprep.subr.mxu0 %v3034
        %3063 = vmatpush1.msra.mxu0 %v3033
        %3064 = vmatprep.subr.mxu0 %v3030
        %3065 = vmatpush1.msra.mxu0 %v3029
        %3066 = vmatprep.subr.mxu0 %v3026
        %3067 = vmatpush1.msra.mxu0 %v3025
        %3068 = vmatprep.subr.mxu0 %v3022
        %3069 = vmatpush1.msra.mxu0 %v3021
        %3070 = vmatprep.subr.mxu0 %v3018
        %3071 = vmatpush1.msra.mxu0 %v3017
        %3072 = vmatprep.subr.mxu0 %v3014
        %3073 = vmatpush1.msra.mxu0 %v3013
        %3074 = vmatprep.subr.mxu0 %v3010
        %3075 = vmatpush1.msra.mxu0 %v3009
        %3076 = vmatprep.subr.mxu0 %v3006
        %3077 = vmatpush1.msra.mxu0 %v3005
        %3078 = vmatprep.subr.mxu0 0.0
        %3079 = vmatpush2.msra.mxu0 0.0
        %3080 = vmatprep.subr.mxu0 0.0
        %3081 = vmatpush2.msra.mxu0 0.0
        %3082 = vmatprep.subr.mxu0 0.0
        %3083 = vmatpush2.msra.mxu0 0.0
        %3084 = vmatprep.subr.mxu0 0.0
        %3085 = vmatpush2.msra.mxu0 0.0
        %3086 = vmatprep.subr.mxu0 0.0
        %3087 = vmatpush2.msra.mxu0 0.0
        %3088 = vmatprep.subr.mxu0 0.0
        %3089 = vmatpush2.msra.mxu0 0.0
        %3090 = vmatprep.subr.mxu0 0.0
        %3091 = vmatpush2.msra.mxu0 0.0
        %3092 = vmatprep.subr.mxu0 0.0
        %3093 = vmatpush2.msra.mxu0 0.0
        %3094 = vmatprep.subr.mxu0 0.0
        %3095 = vmatpush2.msra.mxu0 0.0
        %3096 = vmatprep.subr.mxu0 0.0
        %3097 = vmatpush2.msra.mxu0 0.0
        %3098 = vmatprep.subr.mxu0 0.0
        %3099 = vmatpush2.msra.mxu0 0.0
        %3100 = vmatprep.subr.mxu0 0.0
        %3101 = vmatpush2.msra.mxu0 0.0
        %3102 = vmatprep.subr.mxu0 0.0
        %3103 = vmatpush2.msra.mxu0 0.0
        %3104 = vmatprep.subr.mxu0 0.0
        %3105 = vmatpush2.msra.mxu0 0.0
        %3106 = vmatprep.subr.mxu0 0.0
        %3107 = vmatpush2.msra.mxu0 0.0
        %3108 = vmatprep.subr.mxu0 0.0
        %3109 = vmatpush2.msra.mxu0 0.0
        %3110 = vmatprep.mubr.f32.mxu0 0.0
        %3111 = vmatmul.mubr.f32.gmra.mxu0 %v3038
        %v3112 = vpop.f32.mrf.mxu0
        %v3113 = vadd.f32 0.0, %v3112
        %v3114 = vpop.f32.mrf.mxu0
        %v3115 = vadd.f32 0.0, %v3114
        %3116 = vmatprep.mubr.f32.mxu0 0.0
        %3117 = vmatmul.mubr.f32.gmra.mxu0 %v3041
        %v3118 = vpop.f32.mrf.mxu0
        %v3119 = vadd.f32 0.0, %v3118
        %v3120 = vpop.f32.mrf.mxu0
        %v3121 = vadd.f32 0.0, %v3120
        %3122 = vmatprep.mubr.f32.mxu0 0.0
        %3123 = vmatmul.mubr.f32.gmra.mxu0 %v3044
        %v3124 = vpop.f32.mrf.mxu0
        %v3125 = vadd.f32 0.0, %v3124
        %v3126 = vpop.f32.mrf.mxu0
        %v3127 = vadd.f32 0.0, %v3126
        %3128 = vdwg.mxu0
        %3129 = vmatprep.subr.mxu0 0.0
        %3130 = vmatpush1.msra.mxu0 0.0
        %3131 = vmatprep.subr.mxu0 0.0
        %3132 = vmatpush1.msra.mxu0 0.0
        %3133 = vmatprep.subr.mxu0 0.0
        %3134 = vmatpush1.msra.mxu0 0.0
        %3135 = vmatprep.subr.mxu0 0.0
        %3136 = vmatpush1.msra.mxu0 0.0
        %3137 = vmatprep.subr.mxu0 0.0
        %3138 = vmatpush1.msra.mxu0 0.0
        %3139 = vmatprep.subr.mxu0 0.0
        %3140 = vmatpush1.msra.mxu0 0.0
        %3141 = vmatprep.subr.mxu0 0.0
        %3142 = vmatpush1.msra.mxu0 0.0
        %3143 = vmatprep.subr.mxu0 0.0
        %3144 = vmatpush1.msra.mxu0 0.0
        %3145 = vmatprep.subr.mxu0 %v3036
        %3146 = vmatpush1.msra.mxu0 %v3035
        %3147 = vmatprep.subr.mxu0 %v3032
        %3148 = vmatpush1.msra.mxu0 %v3031
        %3149 = vmatprep.subr.mxu0 %v3028
        %3150 = vmatpush1.msra.mxu0 %v3027
        %3151 = vmatprep.subr.mxu0 %v3024
        %3152 = vmatpush1.msra.mxu0 %v3023
        %3153 = vmatprep.subr.mxu0 %v3020
        %3154 = vmatpush1.msra.mxu0 %v3019
        %3155 = vmatprep.subr.mxu0 %v3016
        %3156 = vmatpush1.msra.mxu0 %v3015
        %3157 = vmatprep.subr.mxu0 %v3012
        %3158 = vmatpush1.msra.mxu0 %v3011
        %3159 = vmatprep.subr.mxu0 %v3008
        %3160 = vmatpush1.msra.mxu0 %v3007
        %3161 = vmatprep.subr.mxu0 0.0
        %3162 = vmatpush2.msra.mxu0 0.0
        %3163 = vmatprep.subr.mxu0 0.0
        %3164 = vmatpush2.msra.mxu0 0.0
        %3165 = vmatprep.subr.mxu0 0.0
        %3166 = vmatpush2.msra.mxu0 0.0
        %3167 = vmatprep.subr.mxu0 0.0
        %3168 = vmatpush2.msra.mxu0 0.0
        %3169 = vmatprep.subr.mxu0 0.0
        %3170 = vmatpush2.msra.mxu0 0.0
        %3171 = vmatprep.subr.mxu0 0.0
        %3172 = vmatpush2.msra.mxu0 0.0
        %3173 = vmatprep.subr.mxu0 0.0
        %3174 = vmatpush2.msra.mxu0 0.0
        %3175 = vmatprep.subr.mxu0 0.0
        %3176 = vmatpush2.msra.mxu0 0.0
        %3177 = vmatprep.subr.mxu0 0.0
        %3178 = vmatpush2.msra.mxu0 0.0
        %3179 = vmatprep.subr.mxu0 0.0
        %3180 = vmatpush2.msra.mxu0 0.0
        %3181 = vmatprep.subr.mxu0 0.0
        %3182 = vmatpush2.msra.mxu0 0.0
        %3183 = vmatprep.subr.mxu0 0.0
        %3184 = vmatpush2.msra.mxu0 0.0
        %3185 = vmatprep.subr.mxu0 0.0
        %3186 = vmatpush2.msra.mxu0 0.0
        %3187 = vmatprep.subr.mxu0 0.0
        %3188 = vmatpush2.msra.mxu0 0.0
        %3189 = vmatprep.subr.mxu0 0.0
        %3190 = vmatpush2.msra.mxu0 0.0
        %3191 = vmatprep.subr.mxu0 0.0
        %3192 = vmatpush2.msra.mxu0 0.0
        %3193 = vmatprep.mubr.f32.mxu0 0.0
        %3194 = vmatmul.mubr.f32.gmra.mxu0 %v3038
        %v3195 = vpop.f32.mrf.mxu0
        %v3196 = vadd.f32 0.0, %v3195
        %v3197 = vpop.f32.mrf.mxu0
        %v3198 = vadd.f32 0.0, %v3197
        %3199 = vmatprep.mubr.f32.mxu0 0.0
        %3200 = vmatmul.mubr.f32.gmra.mxu0 %v3041
        %v3201 = vpop.f32.mrf.mxu0
        %v3202 = vadd.f32 0.0, %v3201
        %v3203 = vpop.f32.mrf.mxu0
        %v3204 = vadd.f32 0.0, %v3203
        %3205 = vmatprep.mubr.f32.mxu0 0.0
        %3206 = vmatmul.mubr.f32.gmra.mxu0 %v3044
        %v3207 = vpop.f32.mrf.mxu0
        %v3208 = vadd.f32 0.0, %v3207
        %v3209 = vpop.f32.mrf.mxu0
        %v3210 = vadd.f32 0.0, %v3209
        %3211 = vdwg.mxu0
        %v3212 = vadd.f32 %v2869, %v3113
        %v3213 = vadd.f32 %v2870, %v3115
        %v3214 = vadd.f32 %v2871, %v3196
        %v3215 = vadd.f32 %v2872, %v3198
        %v3216 = vadd.f32 %v2873, %v3119
        %v3217 = vadd.f32 %v2874, %v3121
        %v3218 = vadd.f32 %v2875, %v3202
        %v3219 = vadd.f32 %v2876, %v3204
        %v3220 = vadd.f32 %v2877, %v3125
        %v3221 = vadd.f32 %v2878, %v3127
        %v3222 = vadd.f32 %v2879, %v3208
        %v3223 = vadd.f32 %v2880, %v3210
        %3224 = vrot.lane.b32.xlu0 %v594, 72
        %v3225 = vpop.permute.xlu0 %3224
        %3226 = vrot.lane.b32.xlu0 %v599, 72
        %v3227 = vpop.permute.xlu0 %3226
        %3228 = vrot.lane.b32.xlu0 %v604, 72
        %v3229 = vpop.permute.xlu0 %3228
        %3230 = vrot.lane.b32.xlu0 %v706, 72
        %v3231 = vpop.permute.xlu0 %3230
        %3232 = vrot.lane.b32.xlu0 %v711, 72
        %v3233 = vpop.permute.xlu0 %3232
        %3234 = vrot.lane.b32.xlu0 %v716, 72
        %v3235 = vpop.permute.xlu0 %3234
        %3236 = vrot.lane.b32.xlu0 %v721, 72
        %v3237 = vpop.permute.xlu0 %3236
        %3238 = vrot.lane.b32.xlu0 %v726, 72
        %v3239 = vpop.permute.xlu0 %3238
        %3240 = vrot.lane.b32.xlu0 %v731, 72
        %v3241 = vpop.permute.xlu0 %3240
        %3242 = vrot.lane.b32.xlu0 %v736, 72
        %v3243 = vpop.permute.xlu0 %3242
        %3244 = vrot.lane.b32.xlu0 %v741, 72
        %v3245 = vpop.permute.xlu0 %3244
        %v3246 = vsel %vm857, %v3225, 0
        %v3248 = vsel %vm857, %v3227, 0
        %v3250 = vsel %vm857, %v3229, 0
        %v3252 = vsel %vm857, %v3231, 0
        %v3254 = vsel %vm857, %v3233, 0
        %v3256 = vsel %vm857, %v3235, 0
        %v3258 = vsel %vm857, %v3237, 0
        %v3260 = vsel %vm857, %v3239, 0
        %v3262 = vsel %vm857, %v3241, 0
        %v3264 = vsel %vm857, %v3243, 0
        %v3266 = vsel %vm857, %v3245, 0
        %3268 = vmatprep.subr.mxu0 0.0
        %3269 = vmatpush1.xpose.msra.mxu0 0.0
        %3270 = vmatprep.subr.mxu0 0.0
        %3271 = vmatpush1.xpose.msra.mxu0 0.0
        %3272 = vmatprep.subr.mxu0 0.0
        %3273 = vmatpush1.xpose.msra.mxu0 0.0
        %3274 = vmatprep.subr.mxu0 0.0
        %3275 = vmatpush1.xpose.msra.mxu0 0.0
        %3276 = vmatprep.subr.mxu0 0.0
        %3277 = vmatpush1.xpose.msra.mxu0 0.0
        %3278 = vmatprep.subr.mxu0 0.0
        %3279 = vmatpush1.xpose.msra.mxu0 0.0
        %3280 = vmatprep.subr.mxu0 0.0
        %3281 = vmatpush1.xpose.msra.mxu0 0.0
        %3282 = vmatprep.subr.mxu0 0.0
        %3283 = vmatpush1.xpose.msra.mxu0 0.0
        %3284 = vmatprep.subr.mxu0 0.0
        %3285 = vmatpush1.xpose.msra.mxu0 %v3266
        %3286 = vmatprep.subr.mxu0 0.0
        %3287 = vmatpush1.xpose.msra.mxu0 %v3264
        %3288 = vmatprep.subr.mxu0 0.0
        %3289 = vmatpush1.xpose.msra.mxu0 %v3262
        %3290 = vmatprep.subr.mxu0 0.0
        %3291 = vmatpush1.xpose.msra.mxu0 %v3260
        %3292 = vmatprep.subr.mxu0 0.0
        %3293 = vmatpush1.xpose.msra.mxu0 %v3258
        %3294 = vmatprep.subr.mxu0 0.0
        %3295 = vmatpush1.xpose.msra.mxu0 %v3256
        %3296 = vmatprep.subr.mxu0 0.0
        %3297 = vmatpush1.xpose.msra.mxu0 %v3254
        %3298 = vmatprep.subr.mxu0 0.0
        %3299 = vmatpush1.xpose.msra.mxu0 %v3252
        %3300 = vmatprep.subr.mxu0 0.0
        %3301 = vmatpush2.xpose.msra.mxu0 0.0
        %3302 = vmatprep.subr.mxu0 0.0
        %3303 = vmatpush2.xpose.msra.mxu0 0.0
        %3304 = vmatprep.subr.mxu0 0.0
        %3305 = vmatpush2.xpose.msra.mxu0 0.0
        %3306 = vmatprep.subr.mxu0 0.0
        %3307 = vmatpush2.xpose.msra.mxu0 0.0
        %3308 = vmatprep.subr.mxu0 0.0
        %3309 = vmatpush2.xpose.msra.mxu0 0.0
        %3310 = vmatprep.subr.mxu0 0.0
        %3311 = vmatpush2.xpose.msra.mxu0 0.0
        %3312 = vmatprep.subr.mxu0 0.0
        %3313 = vmatpush2.xpose.msra.mxu0 0.0
        %3314 = vmatprep.subr.mxu0 0.0
        %3315 = vmatpush2.xpose.msra.mxu0 0.0
        %3316 = vmatprep.subr.mxu0 0.0
        %3317 = vmatpush2.xpose.msra.mxu0 0.0
        %3318 = vmatprep.subr.mxu0 0.0
        %3319 = vmatpush2.xpose.msra.mxu0 0.0
        %3320 = vmatprep.subr.mxu0 0.0
        %3321 = vmatpush2.xpose.msra.mxu0 0.0
        %3322 = vmatprep.subr.mxu0 0.0
        %3323 = vmatpush2.xpose.msra.mxu0 0.0
        %3324 = vmatprep.subr.mxu0 0.0
        %3325 = vmatpush2.xpose.msra.mxu0 0.0
        %3326 = vmatprep.subr.mxu0 0.0
        %3327 = vmatpush2.xpose.msra.mxu0 0.0
        %3328 = vmatprep.subr.mxu0 0.0
        %3329 = vmatpush2.xpose.msra.mxu0 0.0
        %3330 = vmatprep.subr.mxu0 0.0
        %3331 = vmatpush2.xpose.msra.mxu0 0.0
        %3332 = vmatprep.mubr.f32.mxu0 0.0
        %3333 = vmatmul.mubr.f32.gmra.mxu0 %v3246
        %v3334 = vpop.f32.mrf.mxu0
        %v3335 = vadd.f32 0.0, %v3334
        %v3336 = vpop.f32.mrf.mxu0
        %3337 = vmatprep.mubr.f32.mxu0 0.0
        %3338 = vmatmul.mubr.f32.gmra.mxu0 %v3248
        %v3339 = vpop.f32.mrf.mxu0
        %v3340 = vadd.f32 0.0, %v3339
        %v3341 = vpop.f32.mrf.mxu0
        %3342 = vmatprep.mubr.f32.mxu0 0.0
        %3343 = vmatmul.mubr.f32.gmra.mxu0 %v3250
        %v3344 = vpop.f32.mrf.mxu0
        %v3345 = vadd.f32 0.0, %v3344
        %v3346 = vpop.f32.mrf.mxu0
        %3347 = vdwg.mxu0
        %v3348 = vld [vmem:[#allocation7 + $0x700] sm:$0xff]
        %v3349 = vld [vmem:[#allocation7 + $0x708] sm:$0xff]
        %v3350 = vld [vmem:[#allocation7 + $0x710] sm:$0xff]
        %v3351 = vld [vmem:[#allocation7 + $0x718] sm:$0xff]
        %v3352 = vld [vmem:[#allocation7 + $0x720] sm:$0xff]
        %v3353 = vld [vmem:[#allocation7 + $0x728] sm:$0xff]
        %v3354 = vld [vmem:[#allocation7 + $0x730] sm:$0xff]
        %v3355 = vld [vmem:[#allocation7 + $0x738] sm:$0xff]
        %v3356 = vld [vmem:[#allocation7 + $0x740] sm:$0xff]
        %v3357 = vld [vmem:[#allocation7 + $0x748] sm:$0xff]
        %v3358 = vld [vmem:[#allocation7 + $0x750] sm:$0xff]
        %v3359 = vld [vmem:[#allocation7 + $0x758] sm:$0xff]
        %v3360 = vld [vmem:[#allocation7 + $0x760] sm:$0xff]
        %v3361 = vld [vmem:[#allocation7 + $0x768] sm:$0xff]
        %v3362 = vld [vmem:[#allocation7 + $0x770] sm:$0xff]
        %v3363 = vld [vmem:[#allocation7 + $0x778] sm:$0xff]
        %v3364 = vld [vmem:[#allocation7 + $0x780] sm:$0xff]
        %v3365 = vld [vmem:[#allocation7 + $0x788] sm:$0xff]
        %v3366 = vld [vmem:[#allocation7 + $0x790] sm:$0xff]
        %v3367 = vld [vmem:[#allocation7 + $0x798] sm:$0xff]
        %v3368 = vld [vmem:[#allocation7 + $0x7a0] sm:$0xff]
        %v3369 = vld [vmem:[#allocation7 + $0x7a8] sm:$0xff]
        %v3370 = vld [vmem:[#allocation7 + $0x7b0] sm:$0xff]
        %v3371 = vld [vmem:[#allocation7 + $0x7b8] sm:$0xff]
        %v3372 = vld [vmem:[#allocation7 + $0x7c0] sm:$0xff]
        %v3373 = vld [vmem:[#allocation7 + $0x7c8] sm:$0xff]
        %v3374 = vld [vmem:[#allocation7 + $0x7d0] sm:$0xff]
        %v3375 = vld [vmem:[#allocation7 + $0x7d8] sm:$0xff]
        %v3376 = vld [vmem:[#allocation7 + $0x7e0] sm:$0xff]
        %v3377 = vld [vmem:[#allocation7 + $0x7e8] sm:$0xff]
        %v3378 = vld [vmem:[#allocation7 + $0x7f0] sm:$0xff]
        %v3379 = vld [vmem:[#allocation7 + $0x7f8] sm:$0xff]
        %v3381 = vsel %vm517, %v3335, 0
        %v3384 = vsel %vm517, %v3340, 0
        %v3387 = vsel %vm517, %v3345, 0
        %3389 = vmatprep.subr.mxu0 0.0
        %3390 = vmatpush1.msra.mxu0 0.0
        %3391 = vmatprep.subr.mxu0 0.0
        %3392 = vmatpush1.msra.mxu0 0.0
        %3393 = vmatprep.subr.mxu0 0.0
        %3394 = vmatpush1.msra.mxu0 0.0
        %3395 = vmatprep.subr.mxu0 0.0
        %3396 = vmatpush1.msra.mxu0 0.0
        %3397 = vmatprep.subr.mxu0 0.0
        %3398 = vmatpush1.msra.mxu0 0.0
        %3399 = vmatprep.subr.mxu0 0.0
        %3400 = vmatpush1.msra.mxu0 0.0
        %3401 = vmatprep.subr.mxu0 0.0
        %3402 = vmatpush1.msra.mxu0 0.0
        %3403 = vmatprep.subr.mxu0 0.0
        %3404 = vmatpush1.msra.mxu0 0.0
        %3405 = vmatprep.subr.mxu0 %v3377
        %3406 = vmatpush1.msra.mxu0 %v3376
        %3407 = vmatprep.subr.mxu0 %v3373
        %3408 = vmatpush1.msra.mxu0 %v3372
        %3409 = vmatprep.subr.mxu0 %v3369
        %3410 = vmatpush1.msra.mxu0 %v3368
        %3411 = vmatprep.subr.mxu0 %v3365
        %3412 = vmatpush1.msra.mxu0 %v3364
        %3413 = vmatprep.subr.mxu0 %v3361
        %3414 = vmatpush1.msra.mxu0 %v3360
        %3415 = vmatprep.subr.mxu0 %v3357
        %3416 = vmatpush1.msra.mxu0 %v3356
        %3417 = vmatprep.subr.mxu0 %v3353
        %3418 = vmatpush1.msra.mxu0 %v3352
        %3419 = vmatprep.subr.mxu0 %v3349
        %3420 = vmatpush1.msra.mxu0 %v3348
        %3421 = vmatprep.subr.mxu0 0.0
        %3422 = vmatpush2.msra.mxu0 0.0
        %3423 = vmatprep.subr.mxu0 0.0
        %3424 = vmatpush2.msra.mxu0 0.0
        %3425 = vmatprep.subr.mxu0 0.0
        %3426 = vmatpush2.msra.mxu0 0.0
        %3427 = vmatprep.subr.mxu0 0.0
        %3428 = vmatpush2.msra.mxu0 0.0
        %3429 = vmatprep.subr.mxu0 0.0
        %3430 = vmatpush2.msra.mxu0 0.0
        %3431 = vmatprep.subr.mxu0 0.0
        %3432 = vmatpush2.msra.mxu0 0.0
        %3433 = vmatprep.subr.mxu0 0.0
        %3434 = vmatpush2.msra.mxu0 0.0
        %3435 = vmatprep.subr.mxu0 0.0
        %3436 = vmatpush2.msra.mxu0 0.0
        %3437 = vmatprep.subr.mxu0 0.0
        %3438 = vmatpush2.msra.mxu0 0.0
        %3439 = vmatprep.subr.mxu0 0.0
        %3440 = vmatpush2.msra.mxu0 0.0
        %3441 = vmatprep.subr.mxu0 0.0
        %3442 = vmatpush2.msra.mxu0 0.0
        %3443 = vmatprep.subr.mxu0 0.0
        %3444 = vmatpush2.msra.mxu0 0.0
        %3445 = vmatprep.subr.mxu0 0.0
        %3446 = vmatpush2.msra.mxu0 0.0
        %3447 = vmatprep.subr.mxu0 0.0
        %3448 = vmatpush2.msra.mxu0 0.0
        %3449 = vmatprep.subr.mxu0 0.0
        %3450 = vmatpush2.msra.mxu0 0.0
        %3451 = vmatprep.subr.mxu0 0.0
        %3452 = vmatpush2.msra.mxu0 0.0
        %3453 = vmatprep.mubr.f32.mxu0 0.0
        %3454 = vmatmul.mubr.f32.gmra.mxu0 %v3381
        %v3455 = vpop.f32.mrf.mxu0
        %v3456 = vadd.f32 0.0, %v3455
        %v3457 = vpop.f32.mrf.mxu0
        %v3458 = vadd.f32 0.0, %v3457
        %3459 = vmatprep.mubr.f32.mxu0 0.0
        %3460 = vmatmul.mubr.f32.gmra.mxu0 %v3384
        %v3461 = vpop.f32.mrf.mxu0
        %v3462 = vadd.f32 0.0, %v3461
        %v3463 = vpop.f32.mrf.mxu0
        %v3464 = vadd.f32 0.0, %v3463
        %3465 = vmatprep.mubr.f32.mxu0 0.0
        %3466 = vmatmul.mubr.f32.gmra.mxu0 %v3387
        %v3467 = vpop.f32.mrf.mxu0
        %v3468 = vadd.f32 0.0, %v3467
        %v3469 = vpop.f32.mrf.mxu0
        %v3470 = vadd.f32 0.0, %v3469
        %3471 = vdwg.mxu0
        %3472 = vmatprep.subr.mxu0 0.0
        %3473 = vmatpush1.msra.mxu0 0.0
        %3474 = vmatprep.subr.mxu0 0.0
        %3475 = vmatpush1.msra.mxu0 0.0
        %3476 = vmatprep.subr.mxu0 0.0
        %3477 = vmatpush1.msra.mxu0 0.0
        %3478 = vmatprep.subr.mxu0 0.0
        %3479 = vmatpush1.msra.mxu0 0.0
        %3480 = vmatprep.subr.mxu0 0.0
        %3481 = vmatpush1.msra.mxu0 0.0
        %3482 = vmatprep.subr.mxu0 0.0
        %3483 = vmatpush1.msra.mxu0 0.0
        %3484 = vmatprep.subr.mxu0 0.0
        %3485 = vmatpush1.msra.mxu0 0.0
        %3486 = vmatprep.subr.mxu0 0.0
        %3487 = vmatpush1.msra.mxu0 0.0
        %3488 = vmatprep.subr.mxu0 %v3379
        %3489 = vmatpush1.msra.mxu0 %v3378
        %3490 = vmatprep.subr.mxu0 %v3375
        %3491 = vmatpush1.msra.mxu0 %v3374
        %3492 = vmatprep.subr.mxu0 %v3371
        %3493 = vmatpush1.msra.mxu0 %v3370
        %3494 = vmatprep.subr.mxu0 %v3367
        %3495 = vmatpush1.msra.mxu0 %v3366
        %3496 = vmatprep.subr.mxu0 %v3363
        %3497 = vmatpush1.msra.mxu0 %v3362
        %3498 = vmatprep.subr.mxu0 %v3359
        %3499 = vmatpush1.msra.mxu0 %v3358
        %3500 = vmatprep.subr.mxu0 %v3355
        %3501 = vmatpush1.msra.mxu0 %v3354
        %3502 = vmatprep.subr.mxu0 %v3351
        %3503 = vmatpush1.msra.mxu0 %v3350
        %3504 = vmatprep.subr.mxu0 0.0
        %3505 = vmatpush2.msra.mxu0 0.0
        %3506 = vmatprep.subr.mxu0 0.0
        %3507 = vmatpush2.msra.mxu0 0.0
        %3508 = vmatprep.subr.mxu0 0.0
        %3509 = vmatpush2.msra.mxu0 0.0
        %3510 = vmatprep.subr.mxu0 0.0
        %3511 = vmatpush2.msra.mxu0 0.0
        %3512 = vmatprep.subr.mxu0 0.0
        %3513 = vmatpush2.msra.mxu0 0.0
        %3514 = vmatprep.subr.mxu0 0.0
        %3515 = vmatpush2.msra.mxu0 0.0
        %3516 = vmatprep.subr.mxu0 0.0
        %3517 = vmatpush2.msra.mxu0 0.0
        %3518 = vmatprep.subr.mxu0 0.0
        %3519 = vmatpush2.msra.mxu0 0.0
        %3520 = vmatprep.subr.mxu0 0.0
        %3521 = vmatpush2.msra.mxu0 0.0
        %3522 = vmatprep.subr.mxu0 0.0
        %3523 = vmatpush2.msra.mxu0 0.0
        %3524 = vmatprep.subr.mxu0 0.0
        %3525 = vmatpush2.msra.mxu0 0.0
        %3526 = vmatprep.subr.mxu0 0.0
        %3527 = vmatpush2.msra.mxu0 0.0
        %3528 = vmatprep.subr.mxu0 0.0
        %3529 = vmatpush2.msra.mxu0 0.0
        %3530 = vmatprep.subr.mxu0 0.0
        %3531 = vmatpush2.msra.mxu0 0.0
        %3532 = vmatprep.subr.mxu0 0.0
        %3533 = vmatpush2.msra.mxu0 0.0
        %3534 = vmatprep.subr.mxu0 0.0
        %3535 = vmatpush2.msra.mxu0 0.0
        %3536 = vmatprep.mubr.f32.mxu0 0.0
        %3537 = vmatmul.mubr.f32.gmra.mxu0 %v3381
        %v3538 = vpop.f32.mrf.mxu0
        %v3539 = vadd.f32 0.0, %v3538
        %v3540 = vpop.f32.mrf.mxu0
        %v3541 = vadd.f32 0.0, %v3540
        %3542 = vmatprep.mubr.f32.mxu0 0.0
        %3543 = vmatmul.mubr.f32.gmra.mxu0 %v3384
        %v3544 = vpop.f32.mrf.mxu0
        %v3545 = vadd.f32 0.0, %v3544
        %v3546 = vpop.f32.mrf.mxu0
        %v3547 = vadd.f32 0.0, %v3546
        %3548 = vmatprep.mubr.f32.mxu0 0.0
        %3549 = vmatmul.mubr.f32.gmra.mxu0 %v3387
        %v3550 = vpop.f32.mrf.mxu0
        %v3551 = vadd.f32 0.0, %v3550
        %v3552 = vpop.f32.mrf.mxu0
        %v3553 = vadd.f32 0.0, %v3552
        %3554 = vdwg.mxu0
        %v3555 = vadd.f32 %v3212, %v3456
        %v3556 = vadd.f32 %v3213, %v3458
        %v3557 = vadd.f32 %v3214, %v3539
        %v3558 = vadd.f32 %v3215, %v3541
        %v3559 = vadd.f32 %v3216, %v3462
        %v3560 = vadd.f32 %v3217, %v3464
        %v3561 = vadd.f32 %v3218, %v3545
        %v3562 = vadd.f32 %v3219, %v3547
        %v3563 = vadd.f32 %v3220, %v3468
        %v3564 = vadd.f32 %v3221, %v3470
        %v3565 = vadd.f32 %v3222, %v3551
        %v3566 = vadd.f32 %v3223, %v3553
        %v3567 = vmul.f32 %v3555, 0.35355338
        %v3568 = vmul.f32 %v3556, 0.35355338
        %v3569 = vmul.f32 %v3557, 0.35355338
        %v3570 = vmul.f32 %v3558, 0.35355338
        %v3571 = vmul.f32 %v3559, 0.35355338
        %v3572 = vmul.f32 %v3560, 0.35355338
        %v3573 = vmul.f32 %v3561, 0.35355338
        %v3574 = vmul.f32 %v3562, 0.35355338
        %v3575 = vmul.f32 %v3563, 0.35355338
        %v3576 = vmul.f32 %v3564, 0.35355338
        %v3577 = vmul.f32 %v3565, 0.35355338
        %v3578 = vmul.f32 %v3566, 0.35355338
        %v3579 = vld [vmem:[%s6] sm:$0xf]
        %v3581 = vlaneseq
        %v3582 = vshrl.u32 %v3581, 7
        %v3583 = vsub.s32 0, %v3582
        %v3584 = vrot.slane %v3579, %v3583
        %v3585 = vlaneseq
        %v3586 = vshrl.u32 %v3585, 7
        %v3587 = vsub.s32 1, %v3586
        %v3588 = vrot.slane %v3579, %v3587
        %v3589 = vlaneseq
        %v3590 = vshrl.u32 %v3589, 7
        %v3591 = vsub.s32 2, %v3590
        %v3592 = vrot.slane %v3579, %v3591
        %v3593 = vlaneseq
        %v3594 = vshrl.u32 %v3593, 7
        %v3595 = vsub.s32 3, %v3594
        %v3596 = vrot.slane %v3579, %v3595
        %v3601 = vmul.f32 %v3567, %v3584
        %v3602 = vmul.f32 %v3568, %v3588
        %v3603 = vmul.f32 %v3569, %v3592
        %v3604 = vmul.f32 %v3570, %v3596
        %v3605 = vmul.f32 %v3571, %v3584
        %v3606 = vmul.f32 %v3572, %v3588
        %v3607 = vmul.f32 %v3573, %v3592
        %v3608 = vmul.f32 %v3574, %v3596
        %v3609 = vmul.f32 %v3575, %v3584
        %v3610 = vmul.f32 %v3576, %v3588
        %v3611 = vmul.f32 %v3577, %v3592
        %v3612 = vmul.f32 %v3578, %v3596
        %v3613 = vld [vmem:[#allocation9] sm:$0xf]
        %v3615 = vlaneseq
        %v3616 = vshrl.u32 %v3615, 7
        %v3617 = vsub.s32 0, %v3616
        %v3618 = vrot.slane %v3613, %v3617
        %v3619 = vlaneseq
        %v3620 = vshrl.u32 %v3619, 7
        %v3621 = vsub.s32 1, %v3620
        %v3622 = vrot.slane %v3613, %v3621
        %v3623 = vlaneseq
        %v3624 = vshrl.u32 %v3623, 7
        %v3625 = vsub.s32 2, %v3624
        %v3626 = vrot.slane %v3613, %v3625
        %v3627 = vlaneseq
        %v3628 = vshrl.u32 %v3627, 7
        %v3629 = vsub.s32 3, %v3628
        %v3630 = vrot.slane %v3613, %v3629
        %v3635 = vadd.f32 %v3601, %v3618
        %v3636 = vadd.f32 %v3602, %v3622
        %v3637 = vadd.f32 %v3603, %v3626
        %v3638 = vadd.f32 %v3604, %v3630
        %v3639 = vadd.f32 %v3605, %v3618
        %v3640 = vadd.f32 %v3606, %v3622
        %v3641 = vadd.f32 %v3607, %v3626
        %v3642 = vadd.f32 %v3608, %v3630
        %v3643 = vadd.f32 %v3609, %v3618
        %v3644 = vadd.f32 %v3610, %v3622
        %v3645 = vadd.f32 %v3611, %v3626
        %v3646 = vadd.f32 %v3612, %v3630
        %v3647 = vld [vmem:[%s8] sm:$0xff]
        %v3648 = vld [vmem:[%s8 + $0x8] sm:$0xff]
        %v3649 = vld [vmem:[%s8 + $0x10] sm:$0x1]
        %vm3650 = vcmask 138240
        %v3652 = vsel %vm3650, %v3647, 0
        %v3655 = vsel %vm3650, %v3648, 0
        %v3658 = vsel %vm3650, %v3649, 0
        %vm3660 = vcmask 1040384
        %v3662 = vsel %vm3660, %v3643, 0
        %v3665 = vsel %vm3660, %v3644, 0
        %v3668 = vsel %vm3660, %v3645, 0
        %v3671 = vsel %vm3660, %v3646, 0
        %3673 = vmatprep.subr.mxu0 0.0
        %3674 = vmatpush1.msra.mxu0 0.0
        %3675 = vmatprep.subr.mxu0 0.0
        %3676 = vmatpush1.msra.mxu0 0.0
        %3677 = vmatprep.subr.mxu0 0.0
        %3678 = vmatpush1.msra.mxu0 0.0
        %3679 = vmatprep.subr.mxu0 0.0
        %3680 = vmatpush1.msra.mxu0 0.0
        %3681 = vmatprep.subr.mxu0 0.0
        %3682 = vmatpush1.msra.mxu0 0.0
        %3683 = vmatprep.subr.mxu0 0.0
        %3684 = vmatpush1.msra.mxu0 0.0
        %3685 = vmatprep.subr.mxu0 0.0
        %3686 = vmatpush1.msra.mxu0 0.0
        %3687 = vmatprep.subr.mxu0 0.0
        %3688 = vmatpush1.msra.mxu0 0.0
        %3689 = vmatprep.subr.mxu0 0.0
        %3690 = vmatpush1.msra.mxu0 0.0
        %3691 = vmatprep.subr.mxu0 0.0
        %3692 = vmatpush1.msra.mxu0 0.0
        %3693 = vmatprep.subr.mxu0 0.0
        %3694 = vmatpush1.msra.mxu0 0.0
        %3695 = vmatprep.subr.mxu0 0.0
        %3696 = vmatpush1.msra.mxu0 0.0
        %3697 = vmatprep.subr.mxu0 0.0
        %3698 = vmatpush1.msra.mxu0 0.0
        %3699 = vmatprep.subr.mxu0 %v3665
        %3700 = vmatpush1.msra.mxu0 %v3662
        %3701 = vmatprep.subr.mxu0 %v3640
        %3702 = vmatpush1.msra.mxu0 %v3639
        %3703 = vmatprep.subr.mxu0 %v3636
        %3704 = vmatpush1.msra.mxu0 %v3635
        %3705 = vmatprep.subr.mxu0 0.0
        %3706 = vmatpush2.msra.mxu0 0.0
        %3707 = vmatprep.subr.mxu0 0.0
        %3708 = vmatpush2.msra.mxu0 0.0
        %3709 = vmatprep.subr.mxu0 0.0
        %3710 = vmatpush2.msra.mxu0 0.0
        %3711 = vmatprep.subr.mxu0 0.0
        %3712 = vmatpush2.msra.mxu0 0.0
        %3713 = vmatprep.subr.mxu0 0.0
        %3714 = vmatpush2.msra.mxu0 0.0
        %3715 = vmatprep.subr.mxu0 0.0
        %3716 = vmatpush2.msra.mxu0 0.0
        %3717 = vmatprep.subr.mxu0 0.0
        %3718 = vmatpush2.msra.mxu0 0.0
        %3719 = vmatprep.subr.mxu0 0.0
        %3720 = vmatpush2.msra.mxu0 0.0
        %3721 = vmatprep.subr.mxu0 0.0
        %3722 = vmatpush2.msra.mxu0 0.0
        %3723 = vmatprep.subr.mxu0 0.0
        %3724 = vmatpush2.msra.mxu0 0.0
        %3725 = vmatprep.subr.mxu0 0.0
        %3726 = vmatpush2.msra.mxu0 0.0
        %3727 = vmatprep.subr.mxu0 0.0
        %3728 = vmatpush2.msra.mxu0 0.0
        %3729 = vmatprep.subr.mxu0 0.0
        %3730 = vmatpush2.msra.mxu0 0.0
        %3731 = vmatprep.subr.mxu0 0.0
        %3732 = vmatpush2.msra.mxu0 0.0
        %3733 = vmatprep.subr.mxu0 0.0
        %3734 = vmatpush2.msra.mxu0 0.0
        %3735 = vmatprep.subr.mxu0 0.0
        %3736 = vmatpush2.msra.mxu0 0.0
        %3737 = vmatprep.mubr.f32.mxu0 0.0
        %3738 = vmatmul.mubr.f32.gmra.mxu0 %v3652
        %v3739 = vpop.f32.mrf.mxu0
        %v3740 = vadd.f32 0.0, %v3739
        %v3741 = vpop.f32.mrf.mxu0
        %v3742 = vadd.f32 0.0, %v3741
        %3743 = vmatprep.mubr.f32.mxu0 0.0
        %3744 = vmatmul.mubr.f32.gmra.mxu0 %v3655
        %v3745 = vpop.f32.mrf.mxu0
        %v3746 = vadd.f32 0.0, %v3745
        %v3747 = vpop.f32.mrf.mxu0
        %v3748 = vadd.f32 0.0, %v3747
        %3749 = vmatprep.mubr.f32.mxu0 0.0
        %3750 = vmatmul.mubr.f32.gmra.mxu0 %v3658
        %v3751 = vpop.f32.mrf.mxu0
        %v3752 = vadd.f32 0.0, %v3751
        %v3753 = vpop.f32.mrf.mxu0
        %v3754 = vadd.f32 0.0, %v3753
        %3755 = vdwg.mxu0
        %3756 = vmatprep.subr.mxu0 0.0
        %3757 = vmatpush1.msra.mxu0 0.0
        %3758 = vmatprep.subr.mxu0 0.0
        %3759 = vmatpush1.msra.mxu0 0.0
        %3760 = vmatprep.subr.mxu0 0.0
        %3761 = vmatpush1.msra.mxu0 0.0
        %3762 = vmatprep.subr.mxu0 0.0
        %3763 = vmatpush1.msra.mxu0 0.0
        %3764 = vmatprep.subr.mxu0 0.0
        %3765 = vmatpush1.msra.mxu0 0.0
        %3766 = vmatprep.subr.mxu0 0.0
        %3767 = vmatpush1.msra.mxu0 0.0
        %3768 = vmatprep.subr.mxu0 0.0
        %3769 = vmatpush1.msra.mxu0 0.0
        %3770 = vmatprep.subr.mxu0 0.0
        %3771 = vmatpush1.msra.mxu0 0.0
        %3772 = vmatprep.subr.mxu0 0.0
        %3773 = vmatpush1.msra.mxu0 0.0
        %3774 = vmatprep.subr.mxu0 0.0
        %3775 = vmatpush1.msra.mxu0 0.0
        %3776 = vmatprep.subr.mxu0 0.0
        %3777 = vmatpush1.msra.mxu0 0.0
        %3778 = vmatprep.subr.mxu0 0.0
        %3779 = vmatpush1.msra.mxu0 0.0
        %3780 = vmatprep.subr.mxu0 0.0
        %3781 = vmatpush1.msra.mxu0 0.0
        %3782 = vmatprep.subr.mxu0 %v3671
        %3783 = vmatpush1.msra.mxu0 %v3668
        %3784 = vmatprep.subr.mxu0 %v3642
        %3785 = vmatpush1.msra.mxu0 %v3641
        %3786 = vmatprep.subr.mxu0 %v3638
        %3787 = vmatpush1.msra.mxu0 %v3637
        %3788 = vmatprep.subr.mxu0 0.0
        %3789 = vmatpush2.msra.mxu0 0.0
        %3790 = vmatprep.subr.mxu0 0.0
        %3791 = vmatpush2.msra.mxu0 0.0
        %3792 = vmatprep.subr.mxu0 0.0
        %3793 = vmatpush2.msra.mxu0 0.0
        %3794 = vmatprep.subr.mxu0 0.0
        %3795 = vmatpush2.msra.mxu0 0.0
        %3796 = vmatprep.subr.mxu0 0.0
        %3797 = vmatpush2.msra.mxu0 0.0
        %3798 = vmatprep.subr.mxu0 0.0
        %3799 = vmatpush2.msra.mxu0 0.0
        %3800 = vmatprep.subr.mxu0 0.0
        %3801 = vmatpush2.msra.mxu0 0.0
        %3802 = vmatprep.subr.mxu0 0.0
        %3803 = vmatpush2.msra.mxu0 0.0
        %3804 = vmatprep.subr.mxu0 0.0
        %3805 = vmatpush2.msra.mxu0 0.0
        %3806 = vmatprep.subr.mxu0 0.0
        %3807 = vmatpush2.msra.mxu0 0.0
        %3808 = vmatprep.subr.mxu0 0.0
        %3809 = vmatpush2.msra.mxu0 0.0
        %3810 = vmatprep.subr.mxu0 0.0
        %3811 = vmatpush2.msra.mxu0 0.0
        %3812 = vmatprep.subr.mxu0 0.0
        %3813 = vmatpush2.msra.mxu0 0.0
        %3814 = vmatprep.subr.mxu0 0.0
        %3815 = vmatpush2.msra.mxu0 0.0
        %3816 = vmatprep.subr.mxu0 0.0
        %3817 = vmatpush2.msra.mxu0 0.0
        %3818 = vmatprep.subr.mxu0 0.0
        %3819 = vmatpush2.msra.mxu0 0.0
        %3820 = vmatprep.mubr.f32.mxu0 0.0
        %3821 = vmatmul.mubr.f32.gmra.mxu0 %v3652
        %v3822 = vpop.f32.mrf.mxu0
        %v3823 = vadd.f32 0.0, %v3822
        %v3824 = vpop.f32.mrf.mxu0
        %v3825 = vadd.f32 0.0, %v3824
        %3826 = vmatprep.mubr.f32.mxu0 0.0
        %3827 = vmatmul.mubr.f32.gmra.mxu0 %v3655
        %v3828 = vpop.f32.mrf.mxu0
        %v3829 = vadd.f32 0.0, %v3828
        %v3830 = vpop.f32.mrf.mxu0
        %v3831 = vadd.f32 0.0, %v3830
        %3832 = vmatprep.mubr.f32.mxu0 0.0
        %3833 = vmatmul.mubr.f32.gmra.mxu0 %v3658
        %v3834 = vpop.f32.mrf.mxu0
        %v3835 = vadd.f32 0.0, %v3834
        %v3836 = vpop.f32.mrf.mxu0
        %v3837 = vadd.f32 0.0, %v3836
        %3838 = vdwg.mxu0
        %v3839 = vsel %vm517, %v3740, -inf
        %3840 = vmax.xlane.f32.xlu0 %v3839
        %v3841 = vpop.xlane.xlu0 %3840
        %v3842 = vsel %vm517, %v3746, -inf
        %3843 = vmax.xlane.f32.xlu0 %v3842
        %v3844 = vpop.xlane.xlu0 %3843
        %vm3845 = vcmask 516096
        %v3846 = vsel %vm3845, %v3752, -inf
        %3847 = vmax.xlane.f32.xlu0 %v3846
        %v3848 = vpop.xlane.xlu0 %3847
        %v3849 = vsub.f32 %v3740, %v3841
        %v3850 = vsub.f32 %v3746, %v3844
        %v3851 = vsub.f32 %v3752, %v3848
        %v3852 = vmul.f32 %v3849, 1.442695
        %v3853 = vpow.pop %v3852
        %v3854 = vmul.f32 %v3850, 1.442695
        %v3855 = vpow.pop %v3854
        %v3856 = vmul.f32 %v3851, 1.442695
        %v3857 = vpow.pop %v3856
        %v3858 = vsel %vm517, %v3853, 0.0
        %3859 = vadd.xlane.f32.xlu0 %v3858
        %v3860 = vpop.xlane.xlu0 %3859
        %v3861 = vsel %vm517, %v3855, 0.0
        %3862 = vadd.xlane.f32.xlu0 %v3861
        %v3863 = vpop.xlane.xlu0 %3862
        %v3864 = vsel %vm3845, %v3857, 0.0
        %3865 = vadd.xlane.f32.xlu0 %v3864
        %v3866 = vpop.xlane.xlu0 %3865
        %v3867 = vrcp.pop %v3860
        %v3868 = vrcp.pop %v3863
        %v3869 = vrcp.pop %v3866
        %v3870 = vmul.f32 %v3853, %v3867
        %v3871 = vmul.f32 %v3855, %v3868
        %v3872 = vmul.f32 %v3857, %v3869
        %v3874 = vsel %vm517, %v3870, 0
        %v3877 = vsel %vm517, %v3871, 0
        %v3880 = vsel %vm517, %v3872, 0
        %3882 = vmatprep.subr.mxu0 0.0
        %3883 = vmatpush1.msra.mxu0 0.0
        %3884 = vmatprep.subr.mxu0 0.0
        %3885 = vmatpush1.msra.mxu0 0.0
        %3886 = vmatprep.subr.mxu0 0.0
        %3887 = vmatpush1.msra.mxu0 0.0
        %3888 = vmatprep.subr.mxu0 0.0
        %3889 = vmatpush1.msra.mxu0 0.0
        %3890 = vmatprep.subr.mxu0 0.0
        %3891 = vmatpush1.msra.mxu0 0.0
        %3892 = vmatprep.subr.mxu0 0.0
        %3893 = vmatpush1.msra.mxu0 0.0
        %3894 = vmatprep.subr.mxu0 0.0
        %3895 = vmatpush1.msra.mxu0 0.0
        %3896 = vmatprep.subr.mxu0 0.0
        %3897 = vmatpush1.msra.mxu0 0.0
        %3898 = vmatprep.subr.mxu0 0.0
        %3899 = vmatpush1.msra.mxu0 %v854
        %3900 = vmatprep.subr.mxu0 0.0
        %3901 = vmatpush1.msra.mxu0 %v849
        %3902 = vmatprep.subr.mxu0 0.0
        %3903 = vmatpush1.msra.mxu0 %v844
        %3904 = vmatprep.subr.mxu0 0.0
        %3905 = vmatpush1.msra.mxu0 %v839
        %3906 = vmatprep.subr.mxu0 0.0
        %3907 = vmatpush1.msra.mxu0 %v834
        %3908 = vmatprep.subr.mxu0 0.0
        %3909 = vmatpush1.msra.mxu0 %v829
        %3910 = vmatprep.subr.mxu0 0.0
        %3911 = vmatpush1.msra.mxu0 %v824
        %3912 = vmatprep.subr.mxu0 0.0
        %3913 = vmatpush1.msra.mxu0 %v819
        %3914 = vmatprep.subr.mxu0 0.0
        %3915 = vmatpush2.msra.mxu0 0.0
        %3916 = vmatprep.subr.mxu0 0.0
        %3917 = vmatpush2.msra.mxu0 0.0
        %3918 = vmatprep.subr.mxu0 0.0
        %3919 = vmatpush2.msra.mxu0 0.0
        %3920 = vmatprep.subr.mxu0 0.0
        %3921 = vmatpush2.msra.mxu0 0.0
        %3922 = vmatprep.subr.mxu0 0.0
        %3923 = vmatpush2.msra.mxu0 0.0
        %3924 = vmatprep.subr.mxu0 0.0
        %3925 = vmatpush2.msra.mxu0 0.0
        %3926 = vmatprep.subr.mxu0 0.0
        %3927 = vmatpush2.msra.mxu0 0.0
        %3928 = vmatprep.subr.mxu0 0.0
        %3929 = vmatpush2.msra.mxu0 0.0
        %3930 = vmatprep.subr.mxu0 0.0
        %3931 = vmatpush2.msra.mxu0 0.0
        %3932 = vmatprep.subr.mxu0 0.0
        %3933 = vmatpush2.msra.mxu0 0.0
        %3934 = vmatprep.subr.mxu0 0.0
        %3935 = vmatpush2.msra.mxu0 0.0
        %3936 = vmatprep.subr.mxu0 0.0
        %3937 = vmatpush2.msra.mxu0 0.0
        %3938 = vmatprep.subr.mxu0 0.0
        %3939 = vmatpush2.msra.mxu0 0.0
        %3940 = vmatprep.subr.mxu0 0.0
        %3941 = vmatpush2.msra.mxu0 0.0
        %3942 = vmatprep.subr.mxu0 0.0
        %3943 = vmatpush2.msra.mxu0 0.0
        %3944 = vmatprep.subr.mxu0 0.0
        %3945 = vmatpush2.msra.mxu0 0.0
        %3946 = vmatprep.mubr.f32.mxu0 0.0
        %3947 = vmatmul.mubr.f32.gmra.mxu0 %v3874
        %v3948 = vpop.f32.mrf.mxu0
        %v3949 = vadd.f32 0.0, %v3948
        %v3950 = vpop.f32.mrf.mxu0
        %3951 = vmatprep.mubr.f32.mxu0 0.0
        %3952 = vmatmul.mubr.f32.gmra.mxu0 %v3877
        %v3953 = vpop.f32.mrf.mxu0
        %v3954 = vadd.f32 0.0, %v3953
        %v3955 = vpop.f32.mrf.mxu0
        %3956 = vmatprep.mubr.f32.mxu0 0.0
        %3957 = vmatmul.mubr.f32.gmra.mxu0 %v3880
        %v3958 = vpop.f32.mrf.mxu0
        %v3959 = vadd.f32 0.0, %v3958
        %v3960 = vpop.f32.mrf.mxu0
        %3961 = vdwg.mxu0
        %v3962 = vld [vmem:[#allocation10] sm:$0xff]
        %vm3963 = vcmask 1048064
        %v3964 = vsel %vm3963, %v3740, -inf
        %3965 = vmax.xlane.f32.xlu0 %v3964
        %v3966 = vpop.xlane.xlu0 %3965
        %v3967 = vsel %vm3963, %v3746, -inf
        %3968 = vmax.xlane.f32.xlu0 %v3967
        %v3969 = vpop.xlane.xlu0 %3968
        %vm3970 = vcmask 1040896
        %v3971 = vsel %vm3970, %v3752, -inf
        %3972 = vmax.xlane.f32.xlu0 %v3971
        %v3973 = vpop.xlane.xlu0 %3972
        %v3974 = vsub.f32 %v3740, %v3966
        %v3975 = vsub.f32 %v3746, %v3969
        %v3976 = vsub.f32 %v3752, %v3973
        %v3977 = vmul.f32 %v3974, 1.442695
        %v3978 = vpow.pop %v3977
        %v3979 = vmul.f32 %v3975, 1.442695
        %v3980 = vpow.pop %v3979
        %v3981 = vmul.f32 %v3976, 1.442695
        %v3982 = vpow.pop %v3981
        %3986 = vrot.lane.b32.xlu0 %v3978, 64
        %v3987 = vpop.permute.xlu0 %3986
        %3988 = vrot.lane.b32.xlu0 %v3980, 64
        %v3989 = vpop.permute.xlu0 %3988
        %3990 = vrot.lane.b32.xlu0 %v3982, 64
        %v3991 = vpop.permute.xlu0 %3990
        %v3995 = vsel %vm517, %v3987, 0.0
        %3996 = vadd.xlane.f32.xlu0 %v3995
        %v3997 = vpop.xlane.xlu0 %3996
        %v3998 = vsel %vm517, %v3989, 0.0
        %3999 = vadd.xlane.f32.xlu0 %v3998
        %v4000 = vpop.xlane.xlu0 %3999
        %v4001 = vsel %vm3845, %v3991, 0.0
        %4002 = vadd.xlane.f32.xlu0 %v4001
        %v4003 = vpop.xlane.xlu0 %4002
        %v4004 = vrcp.pop %v3997
        %v4005 = vrcp.pop %v4000
        %v4006 = vrcp.pop %v4003
        %v4007 = vmul.f32 %v3978, %v4004
        %v4008 = vmul.f32 %v3980, %v4005
        %v4009 = vmul.f32 %v3982, %v4006
        %4013 = vrot.lane.b32.xlu0 %v4007, 64
        %v4014 = vpop.permute.xlu0 %4013
        %4015 = vrot.lane.b32.xlu0 %v4008, 64
        %v4016 = vpop.permute.xlu0 %4015
        %4017 = vrot.lane.b32.xlu0 %v4009, 64
        %v4018 = vpop.permute.xlu0 %4017
        %4027 = vrot.lane.b32.xlu0 %v819, 120
        %v4028 = vpop.permute.xlu0 %4027
        %4029 = vrot.lane.b32.xlu0 %v824, 120
        %v4030 = vpop.permute.xlu0 %4029
        %4031 = vrot.lane.b32.xlu0 %v829, 120
        %v4032 = vpop.permute.xlu0 %4031
        %4033 = vrot.lane.b32.xlu0 %v834, 120
        %v4034 = vpop.permute.xlu0 %4033
        %4035 = vrot.lane.b32.xlu0 %v839, 120
        %v4036 = vpop.permute.xlu0 %4035
        %4037 = vrot.lane.b32.xlu0 %v844, 120
        %v4038 = vpop.permute.xlu0 %4037
        %4039 = vrot.lane.b32.xlu0 %v849, 120
        %v4040 = vpop.permute.xlu0 %4039
        %4041 = vrot.lane.b32.xlu0 %v854, 120
        %v4042 = vpop.permute.xlu0 %4041
        %v4051 = vsel %vm517, %v4014, 0
        %v4053 = vsel %vm517, %v4016, 0
        %v4055 = vsel %vm517, %v4018, 0
        %4057 = vmatprep.subr.mxu0 0.0
        %4058 = vmatpush1.msra.mxu0 0.0
        %4059 = vmatprep.subr.mxu0 0.0
        %4060 = vmatpush1.msra.mxu0 0.0
        %4061 = vmatprep.subr.mxu0 0.0
        %4062 = vmatpush1.msra.mxu0 0.0
        %4063 = vmatprep.subr.mxu0 0.0
        %4064 = vmatpush1.msra.mxu0 0.0
        %4065 = vmatprep.subr.mxu0 0.0
        %4066 = vmatpush1.msra.mxu0 0.0
        %4067 = vmatprep.subr.mxu0 0.0
        %4068 = vmatpush1.msra.mxu0 0.0
        %4069 = vmatprep.subr.mxu0 0.0
        %4070 = vmatpush1.msra.mxu0 0.0
        %4071 = vmatprep.subr.mxu0 0.0
        %4072 = vmatpush1.msra.mxu0 0.0
        %4073 = vmatprep.subr.mxu0 0.0
        %4074 = vmatpush1.msra.mxu0 %v4042
        %4075 = vmatprep.subr.mxu0 0.0
        %4076 = vmatpush1.msra.mxu0 %v4040
        %4077 = vmatprep.subr.mxu0 0.0
        %4078 = vmatpush1.msra.mxu0 %v4038
        %4079 = vmatprep.subr.mxu0 0.0
        %4080 = vmatpush1.msra.mxu0 %v4036
        %4081 = vmatprep.subr.mxu0 0.0
        %4082 = vmatpush1.msra.mxu0 %v4034
        %4083 = vmatprep.subr.mxu0 0.0
        %4084 = vmatpush1.msra.mxu0 %v4032
        %4085 = vmatprep.subr.mxu0 0.0
        %4086 = vmatpush1.msra.mxu0 %v4030
        %4087 = vmatprep.subr.mxu0 0.0
        %4088 = vmatpush1.msra.mxu0 %v4028
        %4089 = vmatprep.subr.mxu0 0.0
        %4090 = vmatpush2.msra.mxu0 0.0
        %4091 = vmatprep.subr.mxu0 0.0
        %4092 = vmatpush2.msra.mxu0 0.0
        %4093 = vmatprep.subr.mxu0 0.0
        %4094 = vmatpush2.msra.mxu0 0.0
        %4095 = vmatprep.subr.mxu0 0.0
        %4096 = vmatpush2.msra.mxu0 0.0
        %4097 = vmatprep.subr.mxu0 0.0
        %4098 = vmatpush2.msra.mxu0 0.0
        %4099 = vmatprep.subr.mxu0 0.0
        %4100 = vmatpush2.msra.mxu0 0.0
        %4101 = vmatprep.subr.mxu0 0.0
        %4102 = vmatpush2.msra.mxu0 0.0
        %4103 = vmatprep.subr.mxu0 0.0
        %4104 = vmatpush2.msra.mxu0 0.0
        %4105 = vmatprep.subr.mxu0 0.0
        %4106 = vmatpush2.msra.mxu0 0.0
        %4107 = vmatprep.subr.mxu0 0.0
        %4108 = vmatpush2.msra.mxu0 0.0
        %4109 = vmatprep.subr.mxu0 0.0
        %4110 = vmatpush2.msra.mxu0 0.0
        %4111 = vmatprep.subr.mxu0 0.0
        %4112 = vmatpush2.msra.mxu0 0.0
        %4113 = vmatprep.subr.mxu0 0.0
        %4114 = vmatpush2.msra.mxu0 0.0
        %4115 = vmatprep.subr.mxu0 0.0
        %4116 = vmatpush2.msra.mxu0 0.0
        %4117 = vmatprep.subr.mxu0 0.0
        %4118 = vmatpush2.msra.mxu0 0.0
        %4119 = vmatprep.subr.mxu0 0.0
        %4120 = vmatpush2.msra.mxu0 0.0
        %4121 = vmatprep.mubr.f32.mxu0 0.0
        %4122 = vmatmul.mubr.f32.gmra.mxu0 %v4051
        %v4123 = vpop.f32.mrf.mxu0
        %v4124 = vadd.f32 0.0, %v4123
        %v4125 = vpop.f32.mrf.mxu0
        %4126 = vmatprep.mubr.f32.mxu0 0.0
        %4127 = vmatmul.mubr.f32.gmra.mxu0 %v4053
        %v4128 = vpop.f32.mrf.mxu0
        %v4129 = vadd.f32 0.0, %v4128
        %v4130 = vpop.f32.mrf.mxu0
        %4131 = vmatprep.mubr.f32.mxu0 0.0
        %4132 = vmatmul.mubr.f32.gmra.mxu0 %v4055
        %v4133 = vpop.f32.mrf.mxu0
        %v4134 = vadd.f32 0.0, %v4133
        %v4135 = vpop.f32.mrf.mxu0
        %4136 = vdwg.mxu0
        %v4137 = vld [vmem:[#allocation10 + $0x8] sm:$0xff]
        %v4139 = vsel %vm857, %v4124, 0
        %v4142 = vsel %vm857, %v4129, 0
        %v4145 = vsel %vm857, %v4134, 0
        %4147 = vmatprep.subr.mxu0 0.0
        %4148 = vmatpush1.msra.mxu0 0.0
        %4149 = vmatprep.subr.mxu0 0.0
        %4150 = vmatpush1.msra.mxu0 0.0
        %4151 = vmatprep.subr.mxu0 0.0
        %4152 = vmatpush1.msra.mxu0 0.0
        %4153 = vmatprep.subr.mxu0 0.0
        %4154 = vmatpush1.msra.mxu0 0.0
        %4155 = vmatprep.subr.mxu0 0.0
        %4156 = vmatpush1.msra.mxu0 0.0
        %4157 = vmatprep.subr.mxu0 0.0
        %4158 = vmatpush1.msra.mxu0 0.0
        %4159 = vmatprep.subr.mxu0 0.0
        %4160 = vmatpush1.msra.mxu0 0.0
        %4161 = vmatprep.subr.mxu0 0.0
        %4162 = vmatpush1.msra.mxu0 0.0
        %4163 = vmatprep.subr.mxu0 0.0
        %4164 = vmatpush1.msra.mxu0 0.0
        %4165 = vmatprep.subr.mxu0 0.0
        %4166 = vmatpush1.msra.mxu0 0.0
        %4167 = vmatprep.subr.mxu0 0.0
        %4168 = vmatpush1.msra.mxu0 0.0
        %4169 = vmatprep.subr.mxu0 0.0
        %4170 = vmatpush1.msra.mxu0 0.0
        %4171 = vmatprep.subr.mxu0 0.0
        %4172 = vmatpush1.msra.mxu0 0.0
        %4173 = vmatprep.subr.mxu0 0.0
        %4174 = vmatpush1.msra.mxu0 0.0
        %4175 = vmatprep.subr.mxu0 0.0
        %4176 = vmatpush1.msra.mxu0 0.0
        %4177 = vmatprep.subr.mxu0 0.0
        %4178 = vmatpush1.msra.mxu0 %v4137
        %4179 = vmatprep.subr.mxu0 0.0
        %4180 = vmatpush2.msra.mxu0 0.0
        %4181 = vmatprep.subr.mxu0 0.0
        %4182 = vmatpush2.msra.mxu0 0.0
        %4183 = vmatprep.subr.mxu0 0.0
        %4184 = vmatpush2.msra.mxu0 0.0
        %4185 = vmatprep.subr.mxu0 0.0
        %4186 = vmatpush2.msra.mxu0 0.0
        %4187 = vmatprep.subr.mxu0 0.0
        %4188 = vmatpush2.msra.mxu0 0.0
        %4189 = vmatprep.subr.mxu0 0.0
        %4190 = vmatpush2.msra.mxu0 0.0
        %4191 = vmatprep.subr.mxu0 0.0
        %4192 = vmatpush2.msra.mxu0 0.0
        %4193 = vmatprep.subr.mxu0 0.0
        %4194 = vmatpush2.msra.mxu0 0.0
        %4195 = vmatprep.subr.mxu0 0.0
        %4196 = vmatpush2.msra.mxu0 0.0
        %4197 = vmatprep.subr.mxu0 0.0
        %4198 = vmatpush2.msra.mxu0 0.0
        %4199 = vmatprep.subr.mxu0 0.0
        %4200 = vmatpush2.msra.mxu0 0.0
        %4201 = vmatprep.subr.mxu0 0.0
        %4202 = vmatpush2.msra.mxu0 0.0
        %4203 = vmatprep.subr.mxu0 0.0
        %4204 = vmatpush2.msra.mxu0 0.0
        %4205 = vmatprep.subr.mxu0 0.0
        %4206 = vmatpush2.msra.mxu0 0.0
        %4207 = vmatprep.subr.mxu0 0.0
        %4208 = vmatpush2.msra.mxu0 0.0
        %4209 = vmatprep.subr.mxu0 0.0
        %4210 = vmatpush2.msra.mxu0 0.0
        %4211 = vmatprep.mubr.f32.mxu0 0.0
        %4212 = vmatmul.mubr.f32.gmra.mxu0 %v4139
        %v4213 = vpop.f32.mrf.mxu0
        %v4214 = vadd.f32 0.0, %v4213
        %v4215 = vpop.f32.mrf.mxu0
        %4216 = vmatprep.mubr.f32.mxu0 0.0
        %4217 = vmatmul.mubr.f32.gmra.mxu0 %v4142
        %v4218 = vpop.f32.mrf.mxu0
        %v4219 = vadd.f32 0.0, %v4218
        %v4220 = vpop.f32.mrf.mxu0
        %4221 = vmatprep.mubr.f32.mxu0 0.0
        %4222 = vmatmul.mubr.f32.gmra.mxu0 %v4145
        %v4223 = vpop.f32.mrf.mxu0
        %v4224 = vadd.f32 0.0, %v4223
        %v4225 = vpop.f32.mrf.mxu0
        %4226 = vdwg.mxu0
        %v4228 = vsel %vm857, %v3949, 0
        %v4231 = vsel %vm857, %v3954, 0
        %v4234 = vsel %vm857, %v3959, 0
        %4236 = vmatprep.subr.mxu0 0.0
        %4237 = vmatpush1.msra.mxu0 0.0
        %4238 = vmatprep.subr.mxu0 0.0
        %4239 = vmatpush1.msra.mxu0 0.0
        %4240 = vmatprep.subr.mxu0 0.0
        %4241 = vmatpush1.msra.mxu0 0.0
        %4242 = vmatprep.subr.mxu0 0.0
        %4243 = vmatpush1.msra.mxu0 0.0
        %4244 = vmatprep.subr.mxu0 0.0
        %4245 = vmatpush1.msra.mxu0 0.0
        %4246 = vmatprep.subr.mxu0 0.0
        %4247 = vmatpush1.msra.mxu0 0.0
        %4248 = vmatprep.subr.mxu0 0.0
        %4249 = vmatpush1.msra.mxu0 0.0
        %4250 = vmatprep.subr.mxu0 0.0
        %4251 = vmatpush1.msra.mxu0 0.0
        %4252 = vmatprep.subr.mxu0 0.0
        %4253 = vmatpush1.msra.mxu0 0.0
        %4254 = vmatprep.subr.mxu0 0.0
        %4255 = vmatpush1.msra.mxu0 0.0
        %4256 = vmatprep.subr.mxu0 0.0
        %4257 = vmatpush1.msra.mxu0 0.0
        %4258 = vmatprep.subr.mxu0 0.0
        %4259 = vmatpush1.msra.mxu0 0.0
        %4260 = vmatprep.subr.mxu0 0.0
        %4261 = vmatpush1.msra.mxu0 0.0
        %4262 = vmatprep.subr.mxu0 0.0
        %4263 = vmatpush1.msra.mxu0 0.0
        %4264 = vmatprep.subr.mxu0 0.0
        %4265 = vmatpush1.msra.mxu0 0.0
        %4266 = vmatprep.subr.mxu0 0.0
        %4267 = vmatpush1.msra.mxu0 %v3962
        %4268 = vmatprep.subr.mxu0 0.0
        %4269 = vmatpush2.msra.mxu0 0.0
        %4270 = vmatprep.subr.mxu0 0.0
        %4271 = vmatpush2.msra.mxu0 0.0
        %4272 = vmatprep.subr.mxu0 0.0
        %4273 = vmatpush2.msra.mxu0 0.0
        %4274 = vmatprep.subr.mxu0 0.0
        %4275 = vmatpush2.msra.mxu0 0.0
        %4276 = vmatprep.subr.mxu0 0.0
        %4277 = vmatpush2.msra.mxu0 0.0
        %4278 = vmatprep.subr.mxu0 0.0
        %4279 = vmatpush2.msra.mxu0 0.0
        %4280 = vmatprep.subr.mxu0 0.0
        %4281 = vmatpush2.msra.mxu0 0.0
        %4282 = vmatprep.subr.mxu0 0.0
        %4283 = vmatpush2.msra.mxu0 0.0
        %4284 = vmatprep.subr.mxu0 0.0
        %4285 = vmatpush2.msra.mxu0 0.0
        %4286 = vmatprep.subr.mxu0 0.0
        %4287 = vmatpush2.msra.mxu0 0.0
        %4288 = vmatprep.subr.mxu0 0.0
        %4289 = vmatpush2.msra.mxu0 0.0
        %4290 = vmatprep.subr.mxu0 0.0
        %4291 = vmatpush2.msra.mxu0 0.0
        %4292 = vmatprep.subr.mxu0 0.0
        %4293 = vmatpush2.msra.mxu0 0.0
        %4294 = vmatprep.subr.mxu0 0.0
        %4295 = vmatpush2.msra.mxu0 0.0
        %4296 = vmatprep.subr.mxu0 0.0
        %4297 = vmatpush2.msra.mxu0 0.0
        %4298 = vmatprep.subr.mxu0 0.0
        %4299 = vmatpush2.msra.mxu0 0.0
        %4300 = vmatprep.mubr.f32.mxu0 0.0
        %4301 = vmatmul.mubr.f32.gmra.mxu0 %v4228
        %v4302 = vpop.f32.mrf.mxu0
        %v4303 = vadd.f32 %v4214, %v4302
        %v4304 = vpop.f32.mrf.mxu0
        %4305 = vmatprep.mubr.f32.mxu0 0.0
        %4306 = vmatmul.mubr.f32.gmra.mxu0 %v4231
        %v4307 = vpop.f32.mrf.mxu0
        %v4308 = vadd.f32 %v4219, %v4307
        %v4309 = vpop.f32.mrf.mxu0
        %4310 = vmatprep.mubr.f32.mxu0 0.0
        %4311 = vmatmul.mubr.f32.gmra.mxu0 %v4234
        %v4312 = vpop.f32.mrf.mxu0
        %v4313 = vadd.f32 %v4224, %v4312
        %v4314 = vpop.f32.mrf.mxu0
        %4315 = vdwg.mxu0
        %v4316 = vsel %vm517, %v3742, -inf
        %4317 = vmax.xlane.f32.xlu0 %v4316
        %v4318 = vpop.xlane.xlu0 %4317
        %v4319 = vsel %vm517, %v3748, -inf
        %4320 = vmax.xlane.f32.xlu0 %v4319
        %v4321 = vpop.xlane.xlu0 %4320
        %v4322 = vsel %vm3845, %v3754, -inf
        %4323 = vmax.xlane.f32.xlu0 %v4322
        %v4324 = vpop.xlane.xlu0 %4323
        %v4325 = vsub.f32 %v3742, %v4318
        %v4326 = vsub.f32 %v3748, %v4321
        %v4327 = vsub.f32 %v3754, %v4324
        %v4328 = vmul.f32 %v4325, 1.442695
        %v4329 = vpow.pop %v4328
        %v4330 = vmul.f32 %v4326, 1.442695
        %v4331 = vpow.pop %v4330
        %v4332 = vmul.f32 %v4327, 1.442695
        %v4333 = vpow.pop %v4332
        %v4334 = vsel %vm517, %v4329, 0.0
        %4335 = vadd.xlane.f32.xlu0 %v4334
        %v4336 = vpop.xlane.xlu0 %4335
        %v4337 = vsel %vm517, %v4331, 0.0
        %4338 = vadd.xlane.f32.xlu0 %v4337
        %v4339 = vpop.xlane.xlu0 %4338
        %v4340 = vsel %vm3845, %v4333, 0.0
        %4341 = vadd.xlane.f32.xlu0 %v4340
        %v4342 = vpop.xlane.xlu0 %4341
        %v4343 = vrcp.pop %v4336
        %v4344 = vrcp.pop %v4339
        %v4345 = vrcp.pop %v4342
        %v4346 = vmul.f32 %v4329, %v4343
        %v4347 = vmul.f32 %v4331, %v4344
        %v4348 = vmul.f32 %v4333, %v4345
        %4349 = vrot.lane.b32.xlu0 %v819, 112
        %v4350 = vpop.permute.xlu0 %4349
        %4351 = vrot.lane.b32.xlu0 %v824, 112
        %v4352 = vpop.permute.xlu0 %4351
        %4353 = vrot.lane.b32.xlu0 %v829, 112
        %v4354 = vpop.permute.xlu0 %4353
        %4355 = vrot.lane.b32.xlu0 %v834, 112
        %v4356 = vpop.permute.xlu0 %4355
        %4357 = vrot.lane.b32.xlu0 %v839, 112
        %v4358 = vpop.permute.xlu0 %4357
        %4359 = vrot.lane.b32.xlu0 %v844, 112
        %v4360 = vpop.permute.xlu0 %4359
        %4361 = vrot.lane.b32.xlu0 %v849, 112
        %v4362 = vpop.permute.xlu0 %4361
        %4363 = vrot.lane.b32.xlu0 %v854, 112
        %v4364 = vpop.permute.xlu0 %4363
        %v4374 = vsel %vm517, %v4346, 0
        %v4377 = vsel %vm517, %v4347, 0
        %v4380 = vsel %vm517, %v4348, 0
        %4382 = vmatprep.subr.mxu0 0.0
        %4383 = vmatpush1.msra.mxu0 0.0
        %4384 = vmatprep.subr.mxu0 0.0
        %4385 = vmatpush1.msra.mxu0 0.0
        %4386 = vmatprep.subr.mxu0 0.0
        %4387 = vmatpush1.msra.mxu0 0.0
        %4388 = vmatprep.subr.mxu0 0.0
        %4389 = vmatpush1.msra.mxu0 0.0
        %4390 = vmatprep.subr.mxu0 0.0
        %4391 = vmatpush1.msra.mxu0 0.0
        %4392 = vmatprep.subr.mxu0 0.0
        %4393 = vmatpush1.msra.mxu0 0.0
        %4394 = vmatprep.subr.mxu0 0.0
        %4395 = vmatpush1.msra.mxu0 0.0
        %4396 = vmatprep.subr.mxu0 0.0
        %4397 = vmatpush1.msra.mxu0 0.0
        %4398 = vmatprep.subr.mxu0 0.0
        %4399 = vmatpush1.msra.mxu0 %v4364
        %4400 = vmatprep.subr.mxu0 0.0
        %4401 = vmatpush1.msra.mxu0 %v4362
        %4402 = vmatprep.subr.mxu0 0.0
        %4403 = vmatpush1.msra.mxu0 %v4360
        %4404 = vmatprep.subr.mxu0 0.0
        %4405 = vmatpush1.msra.mxu0 %v4358
        %4406 = vmatprep.subr.mxu0 0.0
        %4407 = vmatpush1.msra.mxu0 %v4356
        %4408 = vmatprep.subr.mxu0 0.0
        %4409 = vmatpush1.msra.mxu0 %v4354
        %4410 = vmatprep.subr.mxu0 0.0
        %4411 = vmatpush1.msra.mxu0 %v4352
        %4412 = vmatprep.subr.mxu0 0.0
        %4413 = vmatpush1.msra.mxu0 %v4350
        %4414 = vmatprep.subr.mxu0 0.0
        %4415 = vmatpush2.msra.mxu0 0.0
        %4416 = vmatprep.subr.mxu0 0.0
        %4417 = vmatpush2.msra.mxu0 0.0
        %4418 = vmatprep.subr.mxu0 0.0
        %4419 = vmatpush2.msra.mxu0 0.0
        %4420 = vmatprep.subr.mxu0 0.0
        %4421 = vmatpush2.msra.mxu0 0.0
        %4422 = vmatprep.subr.mxu0 0.0
        %4423 = vmatpush2.msra.mxu0 0.0
        %4424 = vmatprep.subr.mxu0 0.0
        %4425 = vmatpush2.msra.mxu0 0.0
        %4426 = vmatprep.subr.mxu0 0.0
        %4427 = vmatpush2.msra.mxu0 0.0
        %4428 = vmatprep.subr.mxu0 0.0
        %4429 = vmatpush2.msra.mxu0 0.0
        %4430 = vmatprep.subr.mxu0 0.0
        %4431 = vmatpush2.msra.mxu0 0.0
        %4432 = vmatprep.subr.mxu0 0.0
        %4433 = vmatpush2.msra.mxu0 0.0
        %4434 = vmatprep.subr.mxu0 0.0
        %4435 = vmatpush2.msra.mxu0 0.0
        %4436 = vmatprep.subr.mxu0 0.0
        %4437 = vmatpush2.msra.mxu0 0.0
        %4438 = vmatprep.subr.mxu0 0.0
        %4439 = vmatpush2.msra.mxu0 0.0
        %4440 = vmatprep.subr.mxu0 0.0
        %4441 = vmatpush2.msra.mxu0 0.0
        %4442 = vmatprep.subr.mxu0 0.0
        %4443 = vmatpush2.msra.mxu0 0.0
        %4444 = vmatprep.subr.mxu0 0.0
        %4445 = vmatpush2.msra.mxu0 0.0
        %4446 = vmatprep.mubr.f32.mxu0 0.0
        %4447 = vmatmul.mubr.f32.gmra.mxu0 %v4374
        %v4448 = vpop.f32.mrf.mxu0
        %v4449 = vadd.f32 0.0, %v4448
        %v4450 = vpop.f32.mrf.mxu0
        %4451 = vmatprep.mubr.f32.mxu0 0.0
        %4452 = vmatmul.mubr.f32.gmra.mxu0 %v4377
        %v4453 = vpop.f32.mrf.mxu0
        %v4454 = vadd.f32 0.0, %v4453
        %v4455 = vpop.f32.mrf.mxu0
        %4456 = vmatprep.mubr.f32.mxu0 0.0
        %4457 = vmatmul.mubr.f32.gmra.mxu0 %v4380
        %v4458 = vpop.f32.mrf.mxu0
        %v4459 = vadd.f32 0.0, %v4458
        %v4460 = vpop.f32.mrf.mxu0
        %4461 = vdwg.mxu0
        %v4462 = vld [vmem:[#allocation10 + $0x10] sm:$0xff]
        %v4464 = vsel %vm857, %v4449, 0
        %v4467 = vsel %vm857, %v4454, 0
        %v4470 = vsel %vm857, %v4459, 0
        %4472 = vmatprep.subr.mxu0 0.0
        %4473 = vmatpush1.msra.mxu0 0.0
        %4474 = vmatprep.subr.mxu0 0.0
        %4475 = vmatpush1.msra.mxu0 0.0
        %4476 = vmatprep.subr.mxu0 0.0
        %4477 = vmatpush1.msra.mxu0 0.0
        %4478 = vmatprep.subr.mxu0 0.0
        %4479 = vmatpush1.msra.mxu0 0.0
        %4480 = vmatprep.subr.mxu0 0.0
        %4481 = vmatpush1.msra.mxu0 0.0
        %4482 = vmatprep.subr.mxu0 0.0
        %4483 = vmatpush1.msra.mxu0 0.0
        %4484 = vmatprep.subr.mxu0 0.0
        %4485 = vmatpush1.msra.mxu0 0.0
        %4486 = vmatprep.subr.mxu0 0.0
        %4487 = vmatpush1.msra.mxu0 0.0
        %4488 = vmatprep.subr.mxu0 0.0
        %4489 = vmatpush1.msra.mxu0 0.0
        %4490 = vmatprep.subr.mxu0 0.0
        %4491 = vmatpush1.msra.mxu0 0.0
        %4492 = vmatprep.subr.mxu0 0.0
        %4493 = vmatpush1.msra.mxu0 0.0
        %4494 = vmatprep.subr.mxu0 0.0
        %4495 = vmatpush1.msra.mxu0 0.0
        %4496 = vmatprep.subr.mxu0 0.0
        %4497 = vmatpush1.msra.mxu0 0.0
        %4498 = vmatprep.subr.mxu0 0.0
        %4499 = vmatpush1.msra.mxu0 0.0
        %4500 = vmatprep.subr.mxu0 0.0
        %4501 = vmatpush1.msra.mxu0 0.0
        %4502 = vmatprep.subr.mxu0 0.0
        %4503 = vmatpush1.msra.mxu0 %v4462
        %4504 = vmatprep.subr.mxu0 0.0
        %4505 = vmatpush2.msra.mxu0 0.0
        %4506 = vmatprep.subr.mxu0 0.0
        %4507 = vmatpush2.msra.mxu0 0.0
        %4508 = vmatprep.subr.mxu0 0.0
        %4509 = vmatpush2.msra.mxu0 0.0
        %4510 = vmatprep.subr.mxu0 0.0
        %4511 = vmatpush2.msra.mxu0 0.0
        %4512 = vmatprep.subr.mxu0 0.0
        %4513 = vmatpush2.msra.mxu0 0.0
        %4514 = vmatprep.subr.mxu0 0.0
        %4515 = vmatpush2.msra.mxu0 0.0
        %4516 = vmatprep.subr.mxu0 0.0
        %4517 = vmatpush2.msra.mxu0 0.0
        %4518 = vmatprep.subr.mxu0 0.0
        %4519 = vmatpush2.msra.mxu0 0.0
        %4520 = vmatprep.subr.mxu0 0.0
        %4521 = vmatpush2.msra.mxu0 0.0
        %4522 = vmatprep.subr.mxu0 0.0
        %4523 = vmatpush2.msra.mxu0 0.0
        %4524 = vmatprep.subr.mxu0 0.0
        %4525 = vmatpush2.msra.mxu0 0.0
        %4526 = vmatprep.subr.mxu0 0.0
        %4527 = vmatpush2.msra.mxu0 0.0
        %4528 = vmatprep.subr.mxu0 0.0
        %4529 = vmatpush2.msra.mxu0 0.0
        %4530 = vmatprep.subr.mxu0 0.0
        %4531 = vmatpush2.msra.mxu0 0.0
        %4532 = vmatprep.subr.mxu0 0.0
        %4533 = vmatpush2.msra.mxu0 0.0
        %4534 = vmatprep.subr.mxu0 0.0
        %4535 = vmatpush2.msra.mxu0 0.0
        %4536 = vmatprep.mubr.f32.mxu0 0.0
        %4537 = vmatmul.mubr.f32.gmra.mxu0 %v4464
        %v4538 = vpop.f32.mrf.mxu0
        %v4539 = vadd.f32 0.0, %v4538
        %v4540 = vpop.f32.mrf.mxu0
        %4541 = vmatprep.mubr.f32.mxu0 0.0
        %4542 = vmatmul.mubr.f32.gmra.mxu0 %v4467
        %v4543 = vpop.f32.mrf.mxu0
        %v4544 = vadd.f32 0.0, %v4543
        %v4545 = vpop.f32.mrf.mxu0
        %4546 = vmatprep.mubr.f32.mxu0 0.0
        %4547 = vmatmul.mubr.f32.gmra.mxu0 %v4470
        %v4548 = vpop.f32.mrf.mxu0
        %v4549 = vadd.f32 0.0, %v4548
        %v4550 = vpop.f32.mrf.mxu0
        %4551 = vdwg.mxu0
        %v4552 = vadd.f32 %v4303, %v4539
        %v4553 = vadd.f32 %v4308, %v4544
        %v4554 = vadd.f32 %v4313, %v4549
        %v4555 = vsel %vm3963, %v3742, -inf
        %4556 = vmax.xlane.f32.xlu0 %v4555
        %v4557 = vpop.xlane.xlu0 %4556
        %v4558 = vsel %vm3963, %v3748, -inf
        %4559 = vmax.xlane.f32.xlu0 %v4558
        %v4560 = vpop.xlane.xlu0 %4559
        %v4561 = vsel %vm3970, %v3754, -inf
        %4562 = vmax.xlane.f32.xlu0 %v4561
        %v4563 = vpop.xlane.xlu0 %4562
        %v4564 = vsub.f32 %v3742, %v4557
        %v4565 = vsub.f32 %v3748, %v4560
        %v4566 = vsub.f32 %v3754, %v4563
        %v4567 = vmul.f32 %v4564, 1.442695
        %v4568 = vpow.pop %v4567
        %v4569 = vmul.f32 %v4565, 1.442695
        %v4570 = vpow.pop %v4569
        %v4571 = vmul.f32 %v4566, 1.442695
        %v4572 = vpow.pop %v4571
        %4576 = vrot.lane.b32.xlu0 %v4568, 64
        %v4577 = vpop.permute.xlu0 %4576
        %4578 = vrot.lane.b32.xlu0 %v4570, 64
        %v4579 = vpop.permute.xlu0 %4578
        %4580 = vrot.lane.b32.xlu0 %v4572, 64
        %v4581 = vpop.permute.xlu0 %4580
        %v4585 = vsel %vm517, %v4577, 0.0
        %4586 = vadd.xlane.f32.xlu0 %v4585
        %v4587 = vpop.xlane.xlu0 %4586
        %v4588 = vsel %vm517, %v4579, 0.0
        %4589 = vadd.xlane.f32.xlu0 %v4588
        %v4590 = vpop.xlane.xlu0 %4589
        %v4591 = vsel %vm3845, %v4581, 0.0
        %4592 = vadd.xlane.f32.xlu0 %v4591
        %v4593 = vpop.xlane.xlu0 %4592
        %v4594 = vrcp.pop %v4587
        %v4595 = vrcp.pop %v4590
        %v4596 = vrcp.pop %v4593
        %v4597 = vmul.f32 %v4568, %v4594
        %v4598 = vmul.f32 %v4570, %v4595
        %v4599 = vmul.f32 %v4572, %v4596
        %4603 = vrot.lane.b32.xlu0 %v4597, 64
        %v4604 = vpop.permute.xlu0 %4603
        %4605 = vrot.lane.b32.xlu0 %v4598, 64
        %v4606 = vpop.permute.xlu0 %4605
        %4607 = vrot.lane.b32.xlu0 %v4599, 64
        %v4608 = vpop.permute.xlu0 %4607
        %4609 = vrot.lane.b32.xlu0 %v819, 104
        %v4610 = vpop.permute.xlu0 %4609
        %4611 = vrot.lane.b32.xlu0 %v824, 104
        %v4612 = vpop.permute.xlu0 %4611
        %4613 = vrot.lane.b32.xlu0 %v829, 104
        %v4614 = vpop.permute.xlu0 %4613
        %4615 = vrot.lane.b32.xlu0 %v834, 104
        %v4616 = vpop.permute.xlu0 %4615
        %4617 = vrot.lane.b32.xlu0 %v839, 104
        %v4618 = vpop.permute.xlu0 %4617
        %4619 = vrot.lane.b32.xlu0 %v844, 104
        %v4620 = vpop.permute.xlu0 %4619
        %4621 = vrot.lane.b32.xlu0 %v849, 104
        %v4622 = vpop.permute.xlu0 %4621
        %4623 = vrot.lane.b32.xlu0 %v854, 104
        %v4624 = vpop.permute.xlu0 %4623
        %v4633 = vsel %vm517, %v4604, 0
        %v4635 = vsel %vm517, %v4606, 0
        %v4637 = vsel %vm517, %v4608, 0
        %4639 = vmatprep.subr.mxu0 0.0
        %4640 = vmatpush1.msra.mxu0 0.0
        %4641 = vmatprep.subr.mxu0 0.0
        %4642 = vmatpush1.msra.mxu0 0.0
        %4643 = vmatprep.subr.mxu0 0.0
        %4644 = vmatpush1.msra.mxu0 0.0
        %4645 = vmatprep.subr.mxu0 0.0
        %4646 = vmatpush1.msra.mxu0 0.0
        %4647 = vmatprep.subr.mxu0 0.0
        %4648 = vmatpush1.msra.mxu0 0.0
        %4649 = vmatprep.subr.mxu0 0.0
        %4650 = vmatpush1.msra.mxu0 0.0
        %4651 = vmatprep.subr.mxu0 0.0
        %4652 = vmatpush1.msra.mxu0 0.0
        %4653 = vmatprep.subr.mxu0 0.0
        %4654 = vmatpush1.msra.mxu0 0.0
        %4655 = vmatprep.subr.mxu0 0.0
        %4656 = vmatpush1.msra.mxu0 %v4624
        %4657 = vmatprep.subr.mxu0 0.0
        %4658 = vmatpush1.msra.mxu0 %v4622
        %4659 = vmatprep.subr.mxu0 0.0
        %4660 = vmatpush1.msra.mxu0 %v4620
        %4661 = vmatprep.subr.mxu0 0.0
        %4662 = vmatpush1.msra.mxu0 %v4618
        %4663 = vmatprep.subr.mxu0 0.0
        %4664 = vmatpush1.msra.mxu0 %v4616
        %4665 = vmatprep.subr.mxu0 0.0
        %4666 = vmatpush1.msra.mxu0 %v4614
        %4667 = vmatprep.subr.mxu0 0.0
        %4668 = vmatpush1.msra.mxu0 %v4612
        %4669 = vmatprep.subr.mxu0 0.0
        %4670 = vmatpush1.msra.mxu0 %v4610
        %4671 = vmatprep.subr.mxu0 0.0
        %4672 = vmatpush2.msra.mxu0 0.0
        %4673 = vmatprep.subr.mxu0 0.0
        %4674 = vmatpush2.msra.mxu0 0.0
        %4675 = vmatprep.subr.mxu0 0.0
        %4676 = vmatpush2.msra.mxu0 0.0
        %4677 = vmatprep.subr.mxu0 0.0
        %4678 = vmatpush2.msra.mxu0 0.0
        %4679 = vmatprep.subr.mxu0 0.0
        %4680 = vmatpush2.msra.mxu0 0.0
        %4681 = vmatprep.subr.mxu0 0.0
        %4682 = vmatpush2.msra.mxu0 0.0
        %4683 = vmatprep.subr.mxu0 0.0
        %4684 = vmatpush2.msra.mxu0 0.0
        %4685 = vmatprep.subr.mxu0 0.0
        %4686 = vmatpush2.msra.mxu0 0.0
        %4687 = vmatprep.subr.mxu0 0.0
        %4688 = vmatpush2.msra.mxu0 0.0
        %4689 = vmatprep.subr.mxu0 0.0
        %4690 = vmatpush2.msra.mxu0 0.0
        %4691 = vmatprep.subr.mxu0 0.0
        %4692 = vmatpush2.msra.mxu0 0.0
        %4693 = vmatprep.subr.mxu0 0.0
        %4694 = vmatpush2.msra.mxu0 0.0
        %4695 = vmatprep.subr.mxu0 0.0
        %4696 = vmatpush2.msra.mxu0 0.0
        %4697 = vmatprep.subr.mxu0 0.0
        %4698 = vmatpush2.msra.mxu0 0.0
        %4699 = vmatprep.subr.mxu0 0.0
        %4700 = vmatpush2.msra.mxu0 0.0
        %4701 = vmatprep.subr.mxu0 0.0
        %4702 = vmatpush2.msra.mxu0 0.0
        %4703 = vmatprep.mubr.f32.mxu0 0.0
        %4704 = vmatmul.mubr.f32.gmra.mxu0 %v4633
        %v4705 = vpop.f32.mrf.mxu0
        %v4706 = vadd.f32 0.0, %v4705
        %v4707 = vpop.f32.mrf.mxu0
        %4708 = vmatprep.mubr.f32.mxu0 0.0
        %4709 = vmatmul.mubr.f32.gmra.mxu0 %v4635
        %v4710 = vpop.f32.mrf.mxu0
        %v4711 = vadd.f32 0.0, %v4710
        %v4712 = vpop.f32.mrf.mxu0
        %4713 = vmatprep.mubr.f32.mxu0 0.0
        %4714 = vmatmul.mubr.f32.gmra.mxu0 %v4637
        %v4715 = vpop.f32.mrf.mxu0
        %v4716 = vadd.f32 0.0, %v4715
        %v4717 = vpop.f32.mrf.mxu0
        %4718 = vdwg.mxu0
        %v4719 = vld [vmem:[#allocation10 + $0x18] sm:$0xff]
        %v4721 = vsel %vm857, %v4706, 0
        %v4724 = vsel %vm857, %v4711, 0
        %v4727 = vsel %vm857, %v4716, 0
        %4729 = vmatprep.subr.mxu0 0.0
        %4730 = vmatpush1.msra.mxu0 0.0
        %4731 = vmatprep.subr.mxu0 0.0
        %4732 = vmatpush1.msra.mxu0 0.0
        %4733 = vmatprep.subr.mxu0 0.0
        %4734 = vmatpush1.msra.mxu0 0.0
        %4735 = vmatprep.subr.mxu0 0.0
        %4736 = vmatpush1.msra.mxu0 0.0
        %4737 = vmatprep.subr.mxu0 0.0
        %4738 = vmatpush1.msra.mxu0 0.0
        %4739 = vmatprep.subr.mxu0 0.0
        %4740 = vmatpush1.msra.mxu0 0.0
        %4741 = vmatprep.subr.mxu0 0.0
        %4742 = vmatpush1.msra.mxu0 0.0
        %4743 = vmatprep.subr.mxu0 0.0
        %4744 = vmatpush1.msra.mxu0 0.0
        %4745 = vmatprep.subr.mxu0 0.0
        %4746 = vmatpush1.msra.mxu0 0.0
        %4747 = vmatprep.subr.mxu0 0.0
        %4748 = vmatpush1.msra.mxu0 0.0
        %4749 = vmatprep.subr.mxu0 0.0
        %4750 = vmatpush1.msra.mxu0 0.0
        %4751 = vmatprep.subr.mxu0 0.0
        %4752 = vmatpush1.msra.mxu0 0.0
        %4753 = vmatprep.subr.mxu0 0.0
        %4754 = vmatpush1.msra.mxu0 0.0
        %4755 = vmatprep.subr.mxu0 0.0
        %4756 = vmatpush1.msra.mxu0 0.0
        %4757 = vmatprep.subr.mxu0 0.0
        %4758 = vmatpush1.msra.mxu0 0.0
        %4759 = vmatprep.subr.mxu0 0.0
        %4760 = vmatpush1.msra.mxu0 %v4719
        %4761 = vmatprep.subr.mxu0 0.0
        %4762 = vmatpush2.msra.mxu0 0.0
        %4763 = vmatprep.subr.mxu0 0.0
        %4764 = vmatpush2.msra.mxu0 0.0
        %4765 = vmatprep.subr.mxu0 0.0
        %4766 = vmatpush2.msra.mxu0 0.0
        %4767 = vmatprep.subr.mxu0 0.0
        %4768 = vmatpush2.msra.mxu0 0.0
        %4769 = vmatprep.subr.mxu0 0.0
        %4770 = vmatpush2.msra.mxu0 0.0
        %4771 = vmatprep.subr.mxu0 0.0
        %4772 = vmatpush2.msra.mxu0 0.0
        %4773 = vmatprep.subr.mxu0 0.0
        %4774 = vmatpush2.msra.mxu0 0.0
        %4775 = vmatprep.subr.mxu0 0.0
        %4776 = vmatpush2.msra.mxu0 0.0
        %4777 = vmatprep.subr.mxu0 0.0
        %4778 = vmatpush2.msra.mxu0 0.0
        %4779 = vmatprep.subr.mxu0 0.0
        %4780 = vmatpush2.msra.mxu0 0.0
        %4781 = vmatprep.subr.mxu0 0.0
        %4782 = vmatpush2.msra.mxu0 0.0
        %4783 = vmatprep.subr.mxu0 0.0
        %4784 = vmatpush2.msra.mxu0 0.0
        %4785 = vmatprep.subr.mxu0 0.0
        %4786 = vmatpush2.msra.mxu0 0.0
        %4787 = vmatprep.subr.mxu0 0.0
        %4788 = vmatpush2.msra.mxu0 0.0
        %4789 = vmatprep.subr.mxu0 0.0
        %4790 = vmatpush2.msra.mxu0 0.0
        %4791 = vmatprep.subr.mxu0 0.0
        %4792 = vmatpush2.msra.mxu0 0.0
        %4793 = vmatprep.mubr.f32.mxu0 0.0
        %4794 = vmatmul.mubr.f32.gmra.mxu0 %v4721
        %v4795 = vpop.f32.mrf.mxu0
        %v4796 = vadd.f32 0.0, %v4795
        %v4797 = vpop.f32.mrf.mxu0
        %4798 = vmatprep.mubr.f32.mxu0 0.0
        %4799 = vmatmul.mubr.f32.gmra.mxu0 %v4724
        %v4800 = vpop.f32.mrf.mxu0
        %v4801 = vadd.f32 0.0, %v4800
        %v4802 = vpop.f32.mrf.mxu0
        %4803 = vmatprep.mubr.f32.mxu0 0.0
        %4804 = vmatmul.mubr.f32.gmra.mxu0 %v4727
        %v4805 = vpop.f32.mrf.mxu0
        %v4806 = vadd.f32 0.0, %v4805
        %v4807 = vpop.f32.mrf.mxu0
        %4808 = vdwg.mxu0
        %v4809 = vadd.f32 %v4552, %v4796
        %v4810 = vadd.f32 %v4553, %v4801
        %v4811 = vadd.f32 %v4554, %v4806
        %v4812 = vsel %vm517, %v3823, -inf
        %4813 = vmax.xlane.f32.xlu0 %v4812
        %v4814 = vpop.xlane.xlu0 %4813
        %v4815 = vsel %vm517, %v3829, -inf
        %4816 = vmax.xlane.f32.xlu0 %v4815
        %v4817 = vpop.xlane.xlu0 %4816
        %v4818 = vsel %vm3845, %v3835, -inf
        %4819 = vmax.xlane.f32.xlu0 %v4818
        %v4820 = vpop.xlane.xlu0 %4819
        %v4821 = vsub.f32 %v3823, %v4814
        %v4822 = vsub.f32 %v3829, %v4817
        %v4823 = vsub.f32 %v3835, %v4820
        %v4824 = vmul.f32 %v4821, 1.442695
        %v4825 = vpow.pop %v4824
        %v4826 = vmul.f32 %v4822, 1.442695
        %v4827 = vpow.pop %v4826
        %v4828 = vmul.f32 %v4823, 1.442695
        %v4829 = vpow.pop %v4828
        %v4830 = vsel %vm517, %v4825, 0.0
        %4831 = vadd.xlane.f32.xlu0 %v4830
        %v4832 = vpop.xlane.xlu0 %4831
        %v4833 = vsel %vm517, %v4827, 0.0
        %4834 = vadd.xlane.f32.xlu0 %v4833
        %v4835 = vpop.xlane.xlu0 %4834
        %v4836 = vsel %vm3845, %v4829, 0.0
        %4837 = vadd.xlane.f32.xlu0 %v4836
        %v4838 = vpop.xlane.xlu0 %4837
        %v4839 = vrcp.pop %v4832
        %v4840 = vrcp.pop %v4835
        %v4841 = vrcp.pop %v4838
        %v4842 = vmul.f32 %v4825, %v4839
        %v4843 = vmul.f32 %v4827, %v4840
        %v4844 = vmul.f32 %v4829, %v4841
        %4845 = vrot.lane.b32.xlu0 %v819, 96
        %v4846 = vpop.permute.xlu0 %4845
        %4847 = vrot.lane.b32.xlu0 %v824, 96
        %v4848 = vpop.permute.xlu0 %4847
        %4849 = vrot.lane.b32.xlu0 %v829, 96
        %v4850 = vpop.permute.xlu0 %4849
        %4851 = vrot.lane.b32.xlu0 %v834, 96
        %v4852 = vpop.permute.xlu0 %4851
        %4853 = vrot.lane.b32.xlu0 %v839, 96
        %v4854 = vpop.permute.xlu0 %4853
        %4855 = vrot.lane.b32.xlu0 %v844, 96
        %v4856 = vpop.permute.xlu0 %4855
        %4857 = vrot.lane.b32.xlu0 %v849, 96
        %v4858 = vpop.permute.xlu0 %4857
        %4859 = vrot.lane.b32.xlu0 %v854, 96
        %v4860 = vpop.permute.xlu0 %4859
        %v4870 = vsel %vm517, %v4842, 0
        %v4873 = vsel %vm517, %v4843, 0
        %v4876 = vsel %vm517, %v4844, 0
        %4878 = vmatprep.subr.mxu0 0.0
        %4879 = vmatpush1.msra.mxu0 0.0
        %4880 = vmatprep.subr.mxu0 0.0
        %4881 = vmatpush1.msra.mxu0 0.0
        %4882 = vmatprep.subr.mxu0 0.0
        %4883 = vmatpush1.msra.mxu0 0.0
        %4884 = vmatprep.subr.mxu0 0.0
        %4885 = vmatpush1.msra.mxu0 0.0
        %4886 = vmatprep.subr.mxu0 0.0
        %4887 = vmatpush1.msra.mxu0 0.0
        %4888 = vmatprep.subr.mxu0 0.0
        %4889 = vmatpush1.msra.mxu0 0.0
        %4890 = vmatprep.subr.mxu0 0.0
        %4891 = vmatpush1.msra.mxu0 0.0
        %4892 = vmatprep.subr.mxu0 0.0
        %4893 = vmatpush1.msra.mxu0 0.0
        %4894 = vmatprep.subr.mxu0 0.0
        %4895 = vmatpush1.msra.mxu0 %v4860
        %4896 = vmatprep.subr.mxu0 0.0
        %4897 = vmatpush1.msra.mxu0 %v4858
        %4898 = vmatprep.subr.mxu0 0.0
        %4899 = vmatpush1.msra.mxu0 %v4856
        %4900 = vmatprep.subr.mxu0 0.0
        %4901 = vmatpush1.msra.mxu0 %v4854
        %4902 = vmatprep.subr.mxu0 0.0
        %4903 = vmatpush1.msra.mxu0 %v4852
        %4904 = vmatprep.subr.mxu0 0.0
        %4905 = vmatpush1.msra.mxu0 %v4850
        %4906 = vmatprep.subr.mxu0 0.0
        %4907 = vmatpush1.msra.mxu0 %v4848
        %4908 = vmatprep.subr.mxu0 0.0
        %4909 = vmatpush1.msra.mxu0 %v4846
        %4910 = vmatprep.subr.mxu0 0.0
        %4911 = vmatpush2.msra.mxu0 0.0
        %4912 = vmatprep.subr.mxu0 0.0
        %4913 = vmatpush2.msra.mxu0 0.0
        %4914 = vmatprep.subr.mxu0 0.0
        %4915 = vmatpush2.msra.mxu0 0.0
        %4916 = vmatprep.subr.mxu0 0.0
        %4917 = vmatpush2.msra.mxu0 0.0
        %4918 = vmatprep.subr.mxu0 0.0
        %4919 = vmatpush2.msra.mxu0 0.0
        %4920 = vmatprep.subr.mxu0 0.0
        %4921 = vmatpush2.msra.mxu0 0.0
        %4922 = vmatprep.subr.mxu0 0.0
        %4923 = vmatpush2.msra.mxu0 0.0
        %4924 = vmatprep.subr.mxu0 0.0
        %4925 = vmatpush2.msra.mxu0 0.0
        %4926 = vmatprep.subr.mxu0 0.0
        %4927 = vmatpush2.msra.mxu0 0.0
        %4928 = vmatprep.subr.mxu0 0.0
        %4929 = vmatpush2.msra.mxu0 0.0
        %4930 = vmatprep.subr.mxu0 0.0
        %4931 = vmatpush2.msra.mxu0 0.0
        %4932 = vmatprep.subr.mxu0 0.0
        %4933 = vmatpush2.msra.mxu0 0.0
        %4934 = vmatprep.subr.mxu0 0.0
        %4935 = vmatpush2.msra.mxu0 0.0
        %4936 = vmatprep.subr.mxu0 0.0
        %4937 = vmatpush2.msra.mxu0 0.0
        %4938 = vmatprep.subr.mxu0 0.0
        %4939 = vmatpush2.msra.mxu0 0.0
        %4940 = vmatprep.subr.mxu0 0.0
        %4941 = vmatpush2.msra.mxu0 0.0
        %4942 = vmatprep.mubr.f32.mxu0 0.0
        %4943 = vmatmul.mubr.f32.gmra.mxu0 %v4870
        %v4944 = vpop.f32.mrf.mxu0
        %v4945 = vadd.f32 0.0, %v4944
        %v4946 = vpop.f32.mrf.mxu0
        %4947 = vmatprep.mubr.f32.mxu0 0.0
        %4948 = vmatmul.mubr.f32.gmra.mxu0 %v4873
        %v4949 = vpop.f32.mrf.mxu0
        %v4950 = vadd.f32 0.0, %v4949
        %v4951 = vpop.f32.mrf.mxu0
        %4952 = vmatprep.mubr.f32.mxu0 0.0
        %4953 = vmatmul.mubr.f32.gmra.mxu0 %v4876
        %v4954 = vpop.f32.mrf.mxu0
        %v4955 = vadd.f32 0.0, %v4954
        %v4956 = vpop.f32.mrf.mxu0
        %4957 = vdwg.mxu0
        %v4958 = vld [vmem:[#allocation10 + $0x20] sm:$0xff]
        %v4960 = vsel %vm857, %v4945, 0
        %v4963 = vsel %vm857, %v4950, 0
        %v4966 = vsel %vm857, %v4955, 0
        %4968 = vmatprep.subr.mxu0 0.0
        %4969 = vmatpush1.msra.mxu0 0.0
        %4970 = vmatprep.subr.mxu0 0.0
        %4971 = vmatpush1.msra.mxu0 0.0
        %4972 = vmatprep.subr.mxu0 0.0
        %4973 = vmatpush1.msra.mxu0 0.0
        %4974 = vmatprep.subr.mxu0 0.0
        %4975 = vmatpush1.msra.mxu0 0.0
        %4976 = vmatprep.subr.mxu0 0.0
        %4977 = vmatpush1.msra.mxu0 0.0
        %4978 = vmatprep.subr.mxu0 0.0
        %4979 = vmatpush1.msra.mxu0 0.0
        %4980 = vmatprep.subr.mxu0 0.0
        %4981 = vmatpush1.msra.mxu0 0.0
        %4982 = vmatprep.subr.mxu0 0.0
        %4983 = vmatpush1.msra.mxu0 0.0
        %4984 = vmatprep.subr.mxu0 0.0
        %4985 = vmatpush1.msra.mxu0 0.0
        %4986 = vmatprep.subr.mxu0 0.0
        %4987 = vmatpush1.msra.mxu0 0.0
        %4988 = vmatprep.subr.mxu0 0.0
        %4989 = vmatpush1.msra.mxu0 0.0
        %4990 = vmatprep.subr.mxu0 0.0
        %4991 = vmatpush1.msra.mxu0 0.0
        %4992 = vmatprep.subr.mxu0 0.0
        %4993 = vmatpush1.msra.mxu0 0.0
        %4994 = vmatprep.subr.mxu0 0.0
        %4995 = vmatpush1.msra.mxu0 0.0
        %4996 = vmatprep.subr.mxu0 0.0
        %4997 = vmatpush1.msra.mxu0 0.0
        %4998 = vmatprep.subr.mxu0 0.0
        %4999 = vmatpush1.msra.mxu0 %v4958
        %5000 = vmatprep.subr.mxu0 0.0
        %5001 = vmatpush2.msra.mxu0 0.0
        %5002 = vmatprep.subr.mxu0 0.0
        %5003 = vmatpush2.msra.mxu0 0.0
        %5004 = vmatprep.subr.mxu0 0.0
        %5005 = vmatpush2.msra.mxu0 0.0
        %5006 = vmatprep.subr.mxu0 0.0
        %5007 = vmatpush2.msra.mxu0 0.0
        %5008 = vmatprep.subr.mxu0 0.0
        %5009 = vmatpush2.msra.mxu0 0.0
        %5010 = vmatprep.subr.mxu0 0.0
        %5011 = vmatpush2.msra.mxu0 0.0
        %5012 = vmatprep.subr.mxu0 0.0
        %5013 = vmatpush2.msra.mxu0 0.0
        %5014 = vmatprep.subr.mxu0 0.0
        %5015 = vmatpush2.msra.mxu0 0.0
        %5016 = vmatprep.subr.mxu0 0.0
        %5017 = vmatpush2.msra.mxu0 0.0
        %5018 = vmatprep.subr.mxu0 0.0
        %5019 = vmatpush2.msra.mxu0 0.0
        %5020 = vmatprep.subr.mxu0 0.0
        %5021 = vmatpush2.msra.mxu0 0.0
        %5022 = vmatprep.subr.mxu0 0.0
        %5023 = vmatpush2.msra.mxu0 0.0
        %5024 = vmatprep.subr.mxu0 0.0
        %5025 = vmatpush2.msra.mxu0 0.0
        %5026 = vmatprep.subr.mxu0 0.0
        %5027 = vmatpush2.msra.mxu0 0.0
        %5028 = vmatprep.subr.mxu0 0.0
        %5029 = vmatpush2.msra.mxu0 0.0
        %5030 = vmatprep.subr.mxu0 0.0
        %5031 = vmatpush2.msra.mxu0 0.0
        %5032 = vmatprep.mubr.f32.mxu0 0.0
        %5033 = vmatmul.mubr.f32.gmra.mxu0 %v4960
        %v5034 = vpop.f32.mrf.mxu0
        %v5035 = vadd.f32 0.0, %v5034
        %v5036 = vpop.f32.mrf.mxu0
        %5037 = vmatprep.mubr.f32.mxu0 0.0
        %5038 = vmatmul.mubr.f32.gmra.mxu0 %v4963
        %v5039 = vpop.f32.mrf.mxu0
        %v5040 = vadd.f32 0.0, %v5039
        %v5041 = vpop.f32.mrf.mxu0
        %5042 = vmatprep.mubr.f32.mxu0 0.0
        %5043 = vmatmul.mubr.f32.gmra.mxu0 %v4966
        %v5044 = vpop.f32.mrf.mxu0
        %v5045 = vadd.f32 0.0, %v5044
        %v5046 = vpop.f32.mrf.mxu0
        %5047 = vdwg.mxu0
        %v5048 = vadd.f32 %v4809, %v5035
        %v5049 = vadd.f32 %v4810, %v5040
        %v5050 = vadd.f32 %v4811, %v5045
        %v5051 = vsel %vm3963, %v3823, -inf
        %5052 = vmax.xlane.f32.xlu0 %v5051
        %v5053 = vpop.xlane.xlu0 %5052
        %v5054 = vsel %vm3963, %v3829, -inf
        %5055 = vmax.xlane.f32.xlu0 %v5054
        %v5056 = vpop.xlane.xlu0 %5055
        %v5057 = vsel %vm3970, %v3835, -inf
        %5058 = vmax.xlane.f32.xlu0 %v5057
        %v5059 = vpop.xlane.xlu0 %5058
        %v5060 = vsub.f32 %v3823, %v5053
        %v5061 = vsub.f32 %v3829, %v5056
        %v5062 = vsub.f32 %v3835, %v5059
        %v5063 = vmul.f32 %v5060, 1.442695
        %v5064 = vpow.pop %v5063
        %v5065 = vmul.f32 %v5061, 1.442695
        %v5066 = vpow.pop %v5065
        %v5067 = vmul.f32 %v5062, 1.442695
        %v5068 = vpow.pop %v5067
        %5072 = vrot.lane.b32.xlu0 %v5064, 64
        %v5073 = vpop.permute.xlu0 %5072
        %5074 = vrot.lane.b32.xlu0 %v5066, 64
        %v5075 = vpop.permute.xlu0 %5074
        %5076 = vrot.lane.b32.xlu0 %v5068, 64
        %v5077 = vpop.permute.xlu0 %5076
        %v5081 = vsel %vm517, %v5073, 0.0
        %5082 = vadd.xlane.f32.xlu0 %v5081
        %v5083 = vpop.xlane.xlu0 %5082
        %v5084 = vsel %vm517, %v5075, 0.0
        %5085 = vadd.xlane.f32.xlu0 %v5084
        %v5086 = vpop.xlane.xlu0 %5085
        %v5087 = vsel %vm3845, %v5077, 0.0
        %5088 = vadd.xlane.f32.xlu0 %v5087
        %v5089 = vpop.xlane.xlu0 %5088
        %v5090 = vrcp.pop %v5083
        %v5091 = vrcp.pop %v5086
        %v5092 = vrcp.pop %v5089
        %v5093 = vmul.f32 %v5064, %v5090
        %v5094 = vmul.f32 %v5066, %v5091
        %v5095 = vmul.f32 %v5068, %v5092
        %5099 = vrot.lane.b32.xlu0 %v5093, 64
        %v5100 = vpop.permute.xlu0 %5099
        %5101 = vrot.lane.b32.xlu0 %v5094, 64
        %v5102 = vpop.permute.xlu0 %5101
        %5103 = vrot.lane.b32.xlu0 %v5095, 64
        %v5104 = vpop.permute.xlu0 %5103
        %5105 = vrot.lane.b32.xlu0 %v819, 88
        %v5106 = vpop.permute.xlu0 %5105
        %5107 = vrot.lane.b32.xlu0 %v824, 88
        %v5108 = vpop.permute.xlu0 %5107
        %5109 = vrot.lane.b32.xlu0 %v829, 88
        %v5110 = vpop.permute.xlu0 %5109
        %5111 = vrot.lane.b32.xlu0 %v834, 88
        %v5112 = vpop.permute.xlu0 %5111
        %5113 = vrot.lane.b32.xlu0 %v839, 88
        %v5114 = vpop.permute.xlu0 %5113
        %5115 = vrot.lane.b32.xlu0 %v844, 88
        %v5116 = vpop.permute.xlu0 %5115
        %5117 = vrot.lane.b32.xlu0 %v849, 88
        %v5118 = vpop.permute.xlu0 %5117
        %5119 = vrot.lane.b32.xlu0 %v854, 88
        %v5120 = vpop.permute.xlu0 %5119
        %v5129 = vsel %vm517, %v5100, 0
        %v5131 = vsel %vm517, %v5102, 0
        %v5133 = vsel %vm517, %v5104, 0
        %5135 = vmatprep.subr.mxu0 0.0
        %5136 = vmatpush1.msra.mxu0 0.0
        %5137 = vmatprep.subr.mxu0 0.0
        %5138 = vmatpush1.msra.mxu0 0.0
        %5139 = vmatprep.subr.mxu0 0.0
        %5140 = vmatpush1.msra.mxu0 0.0
        %5141 = vmatprep.subr.mxu0 0.0
        %5142 = vmatpush1.msra.mxu0 0.0
        %5143 = vmatprep.subr.mxu0 0.0
        %5144 = vmatpush1.msra.mxu0 0.0
        %5145 = vmatprep.subr.mxu0 0.0
        %5146 = vmatpush1.msra.mxu0 0.0
        %5147 = vmatprep.subr.mxu0 0.0
        %5148 = vmatpush1.msra.mxu0 0.0
        %5149 = vmatprep.subr.mxu0 0.0
        %5150 = vmatpush1.msra.mxu0 0.0
        %5151 = vmatprep.subr.mxu0 0.0
        %5152 = vmatpush1.msra.mxu0 %v5120
        %5153 = vmatprep.subr.mxu0 0.0
        %5154 = vmatpush1.msra.mxu0 %v5118
        %5155 = vmatprep.subr.mxu0 0.0
        %5156 = vmatpush1.msra.mxu0 %v5116
        %5157 = vmatprep.subr.mxu0 0.0
        %5158 = vmatpush1.msra.mxu0 %v5114
        %5159 = vmatprep.subr.mxu0 0.0
        %5160 = vmatpush1.msra.mxu0 %v5112
        %5161 = vmatprep.subr.mxu0 0.0
        %5162 = vmatpush1.msra.mxu0 %v5110
        %5163 = vmatprep.subr.mxu0 0.0
        %5164 = vmatpush1.msra.mxu0 %v5108
        %5165 = vmatprep.subr.mxu0 0.0
        %5166 = vmatpush1.msra.mxu0 %v5106
        %5167 = vmatprep.subr.mxu0 0.0
        %5168 = vmatpush2.msra.mxu0 0.0
        %5169 = vmatprep.subr.mxu0 0.0
        %5170 = vmatpush2.msra.mxu0 0.0
        %5171 = vmatprep.subr.mxu0 0.0
        %5172 = vmatpush2.msra.mxu0 0.0
        %5173 = vmatprep.subr.mxu0 0.0
        %5174 = vmatpush2.msra.mxu0 0.0
        %5175 = vmatprep.subr.mxu0 0.0
        %5176 = vmatpush2.msra.mxu0 0.0
        %5177 = vmatprep.subr.mxu0 0.0
        %5178 = vmatpush2.msra.mxu0 0.0
        %5179 = vmatprep.subr.mxu0 0.0
        %5180 = vmatpush2.msra.mxu0 0.0
        %5181 = vmatprep.subr.mxu0 0.0
        %5182 = vmatpush2.msra.mxu0 0.0
        %5183 = vmatprep.subr.mxu0 0.0
        %5184 = vmatpush2.msra.mxu0 0.0
        %5185 = vmatprep.subr.mxu0 0.0
        %5186 = vmatpush2.msra.mxu0 0.0
        %5187 = vmatprep.subr.mxu0 0.0
        %5188 = vmatpush2.msra.mxu0 0.0
        %5189 = vmatprep.subr.mxu0 0.0
        %5190 = vmatpush2.msra.mxu0 0.0
        %5191 = vmatprep.subr.mxu0 0.0
        %5192 = vmatpush2.msra.mxu0 0.0
        %5193 = vmatprep.subr.mxu0 0.0
        %5194 = vmatpush2.msra.mxu0 0.0
        %5195 = vmatprep.subr.mxu0 0.0
        %5196 = vmatpush2.msra.mxu0 0.0
        %5197 = vmatprep.subr.mxu0 0.0
        %5198 = vmatpush2.msra.mxu0 0.0
        %5199 = vmatprep.mubr.f32.mxu0 0.0
        %5200 = vmatmul.mubr.f32.gmra.mxu0 %v5129
        %v5201 = vpop.f32.mrf.mxu0
        %v5202 = vadd.f32 0.0, %v5201
        %v5203 = vpop.f32.mrf.mxu0
        %5204 = vmatprep.mubr.f32.mxu0 0.0
        %5205 = vmatmul.mubr.f32.gmra.mxu0 %v5131
        %v5206 = vpop.f32.mrf.mxu0
        %v5207 = vadd.f32 0.0, %v5206
        %v5208 = vpop.f32.mrf.mxu0
        %5209 = vmatprep.mubr.f32.mxu0 0.0
        %5210 = vmatmul.mubr.f32.gmra.mxu0 %v5133
        %v5211 = vpop.f32.mrf.mxu0
        %v5212 = vadd.f32 0.0, %v5211
        %v5213 = vpop.f32.mrf.mxu0
        %5214 = vdwg.mxu0
        %v5215 = vld [vmem:[#allocation10 + $0x28] sm:$0xff]
        %v5217 = vsel %vm857, %v5202, 0
        %v5220 = vsel %vm857, %v5207, 0
        %v5223 = vsel %vm857, %v5212, 0
        %5225 = vmatprep.subr.mxu0 0.0
        %5226 = vmatpush1.msra.mxu0 0.0
        %5227 = vmatprep.subr.mxu0 0.0
        %5228 = vmatpush1.msra.mxu0 0.0
        %5229 = vmatprep.subr.mxu0 0.0
        %5230 = vmatpush1.msra.mxu0 0.0
        %5231 = vmatprep.subr.mxu0 0.0
        %5232 = vmatpush1.msra.mxu0 0.0
        %5233 = vmatprep.subr.mxu0 0.0
        %5234 = vmatpush1.msra.mxu0 0.0
        %5235 = vmatprep.subr.mxu0 0.0
        %5236 = vmatpush1.msra.mxu0 0.0
        %5237 = vmatprep.subr.mxu0 0.0
        %5238 = vmatpush1.msra.mxu0 0.0
        %5239 = vmatprep.subr.mxu0 0.0
        %5240 = vmatpush1.msra.mxu0 0.0
        %5241 = vmatprep.subr.mxu0 0.0
        %5242 = vmatpush1.msra.mxu0 0.0
        %5243 = vmatprep.subr.mxu0 0.0
        %5244 = vmatpush1.msra.mxu0 0.0
        %5245 = vmatprep.subr.mxu0 0.0
        %5246 = vmatpush1.msra.mxu0 0.0
        %5247 = vmatprep.subr.mxu0 0.0
        %5248 = vmatpush1.msra.mxu0 0.0
        %5249 = vmatprep.subr.mxu0 0.0
        %5250 = vmatpush1.msra.mxu0 0.0
        %5251 = vmatprep.subr.mxu0 0.0
        %5252 = vmatpush1.msra.mxu0 0.0
        %5253 = vmatprep.subr.mxu0 0.0
        %5254 = vmatpush1.msra.mxu0 0.0
        %5255 = vmatprep.subr.mxu0 0.0
        %5256 = vmatpush1.msra.mxu0 %v5215
        %5257 = vmatprep.subr.mxu0 0.0
        %5258 = vmatpush2.msra.mxu0 0.0
        %5259 = vmatprep.subr.mxu0 0.0
        %5260 = vmatpush2.msra.mxu0 0.0
        %5261 = vmatprep.subr.mxu0 0.0
        %5262 = vmatpush2.msra.mxu0 0.0
        %5263 = vmatprep.subr.mxu0 0.0
        %5264 = vmatpush2.msra.mxu0 0.0
        %5265 = vmatprep.subr.mxu0 0.0
        %5266 = vmatpush2.msra.mxu0 0.0
        %5267 = vmatprep.subr.mxu0 0.0
        %5268 = vmatpush2.msra.mxu0 0.0
        %5269 = vmatprep.subr.mxu0 0.0
        %5270 = vmatpush2.msra.mxu0 0.0
        %5271 = vmatprep.subr.mxu0 0.0
        %5272 = vmatpush2.msra.mxu0 0.0
        %5273 = vmatprep.subr.mxu0 0.0
        %5274 = vmatpush2.msra.mxu0 0.0
        %5275 = vmatprep.subr.mxu0 0.0
        %5276 = vmatpush2.msra.mxu0 0.0
        %5277 = vmatprep.subr.mxu0 0.0
        %5278 = vmatpush2.msra.mxu0 0.0
        %5279 = vmatprep.subr.mxu0 0.0
        %5280 = vmatpush2.msra.mxu0 0.0
        %5281 = vmatprep.subr.mxu0 0.0
        %5282 = vmatpush2.msra.mxu0 0.0
        %5283 = vmatprep.subr.mxu0 0.0
        %5284 = vmatpush2.msra.mxu0 0.0
        %5285 = vmatprep.subr.mxu0 0.0
        %5286 = vmatpush2.msra.mxu0 0.0
        %5287 = vmatprep.subr.mxu0 0.0
        %5288 = vmatpush2.msra.mxu0 0.0
        %5289 = vmatprep.mubr.f32.mxu0 0.0
        %5290 = vmatmul.mubr.f32.gmra.mxu0 %v5217
        %v5291 = vpop.f32.mrf.mxu0
        %v5292 = vadd.f32 0.0, %v5291
        %v5293 = vpop.f32.mrf.mxu0
        %5294 = vmatprep.mubr.f32.mxu0 0.0
        %5295 = vmatmul.mubr.f32.gmra.mxu0 %v5220
        %v5296 = vpop.f32.mrf.mxu0
        %v5297 = vadd.f32 0.0, %v5296
        %v5298 = vpop.f32.mrf.mxu0
        %5299 = vmatprep.mubr.f32.mxu0 0.0
        %5300 = vmatmul.mubr.f32.gmra.mxu0 %v5223
        %v5301 = vpop.f32.mrf.mxu0
        %v5302 = vadd.f32 0.0, %v5301
        %v5303 = vpop.f32.mrf.mxu0
        %5304 = vdwg.mxu0
        %v5305 = vadd.f32 %v5048, %v5292
        %v5306 = vadd.f32 %v5049, %v5297
        %v5307 = vadd.f32 %v5050, %v5302
        %v5308 = vsel %vm517, %v3825, -inf
        %5309 = vmax.xlane.f32.xlu0 %v5308
        %v5310 = vpop.xlane.xlu0 %5309
        %v5311 = vsel %vm517, %v3831, -inf
        %5312 = vmax.xlane.f32.xlu0 %v5311
        %v5313 = vpop.xlane.xlu0 %5312
        %v5314 = vsel %vm3845, %v3837, -inf
        %5315 = vmax.xlane.f32.xlu0 %v5314
        %v5316 = vpop.xlane.xlu0 %5315
        %v5317 = vsub.f32 %v3825, %v5310
        %v5318 = vsub.f32 %v3831, %v5313
        %v5319 = vsub.f32 %v3837, %v5316
        %v5320 = vmul.f32 %v5317, 1.442695
        %v5321 = vpow.pop %v5320
        %v5322 = vmul.f32 %v5318, 1.442695
        %v5323 = vpow.pop %v5322
        %v5324 = vmul.f32 %v5319, 1.442695
        %v5325 = vpow.pop %v5324
        %v5326 = vsel %vm517, %v5321, 0.0
        %5327 = vadd.xlane.f32.xlu0 %v5326
        %v5328 = vpop.xlane.xlu0 %5327
        %v5329 = vsel %vm517, %v5323, 0.0
        %5330 = vadd.xlane.f32.xlu0 %v5329
        %v5331 = vpop.xlane.xlu0 %5330
        %v5332 = vsel %vm3845, %v5325, 0.0
        %5333 = vadd.xlane.f32.xlu0 %v5332
        %v5334 = vpop.xlane.xlu0 %5333
        %v5335 = vrcp.pop %v5328
        %v5336 = vrcp.pop %v5331
        %v5337 = vrcp.pop %v5334
        %v5338 = vmul.f32 %v5321, %v5335
        %v5339 = vmul.f32 %v5323, %v5336
        %v5340 = vmul.f32 %v5325, %v5337
        %5341 = vrot.lane.b32.xlu0 %v819, 80
        %v5342 = vpop.permute.xlu0 %5341
        %5343 = vrot.lane.b32.xlu0 %v824, 80
        %v5344 = vpop.permute.xlu0 %5343
        %5345 = vrot.lane.b32.xlu0 %v829, 80
        %v5346 = vpop.permute.xlu0 %5345
        %5347 = vrot.lane.b32.xlu0 %v834, 80
        %v5348 = vpop.permute.xlu0 %5347
        %5349 = vrot.lane.b32.xlu0 %v839, 80
        %v5350 = vpop.permute.xlu0 %5349
        %5351 = vrot.lane.b32.xlu0 %v844, 80
        %v5352 = vpop.permute.xlu0 %5351
        %5353 = vrot.lane.b32.xlu0 %v849, 80
        %v5354 = vpop.permute.xlu0 %5353
        %5355 = vrot.lane.b32.xlu0 %v854, 80
        %v5356 = vpop.permute.xlu0 %5355
        %v5366 = vsel %vm517, %v5338, 0
        %v5369 = vsel %vm517, %v5339, 0
        %v5372 = vsel %vm517, %v5340, 0
        %5374 = vmatprep.subr.mxu0 0.0
        %5375 = vmatpush1.msra.mxu0 0.0
        %5376 = vmatprep.subr.mxu0 0.0
        %5377 = vmatpush1.msra.mxu0 0.0
        %5378 = vmatprep.subr.mxu0 0.0
        %5379 = vmatpush1.msra.mxu0 0.0
        %5380 = vmatprep.subr.mxu0 0.0
        %5381 = vmatpush1.msra.mxu0 0.0
        %5382 = vmatprep.subr.mxu0 0.0
        %5383 = vmatpush1.msra.mxu0 0.0
        %5384 = vmatprep.subr.mxu0 0.0
        %5385 = vmatpush1.msra.mxu0 0.0
        %5386 = vmatprep.subr.mxu0 0.0
        %5387 = vmatpush1.msra.mxu0 0.0
        %5388 = vmatprep.subr.mxu0 0.0
        %5389 = vmatpush1.msra.mxu0 0.0
        %5390 = vmatprep.subr.mxu0 0.0
        %5391 = vmatpush1.msra.mxu0 %v5356
        %5392 = vmatprep.subr.mxu0 0.0
        %5393 = vmatpush1.msra.mxu0 %v5354
        %5394 = vmatprep.subr.mxu0 0.0
        %5395 = vmatpush1.msra.mxu0 %v5352
        %5396 = vmatprep.subr.mxu0 0.0
        %5397 = vmatpush1.msra.mxu0 %v5350
        %5398 = vmatprep.subr.mxu0 0.0
        %5399 = vmatpush1.msra.mxu0 %v5348
        %5400 = vmatprep.subr.mxu0 0.0
        %5401 = vmatpush1.msra.mxu0 %v5346
        %5402 = vmatprep.subr.mxu0 0.0
        %5403 = vmatpush1.msra.mxu0 %v5344
        %5404 = vmatprep.subr.mxu0 0.0
        %5405 = vmatpush1.msra.mxu0 %v5342
        %5406 = vmatprep.subr.mxu0 0.0
        %5407 = vmatpush2.msra.mxu0 0.0
        %5408 = vmatprep.subr.mxu0 0.0
        %5409 = vmatpush2.msra.mxu0 0.0
        %5410 = vmatprep.subr.mxu0 0.0
        %5411 = vmatpush2.msra.mxu0 0.0
        %5412 = vmatprep.subr.mxu0 0.0
        %5413 = vmatpush2.msra.mxu0 0.0
        %5414 = vmatprep.subr.mxu0 0.0
        %5415 = vmatpush2.msra.mxu0 0.0
        %5416 = vmatprep.subr.mxu0 0.0
        %5417 = vmatpush2.msra.mxu0 0.0
        %5418 = vmatprep.subr.mxu0 0.0
        %5419 = vmatpush2.msra.mxu0 0.0
        %5420 = vmatprep.subr.mxu0 0.0
        %5421 = vmatpush2.msra.mxu0 0.0
        %5422 = vmatprep.subr.mxu0 0.0
        %5423 = vmatpush2.msra.mxu0 0.0
        %5424 = vmatprep.subr.mxu0 0.0
        %5425 = vmatpush2.msra.mxu0 0.0
        %5426 = vmatprep.subr.mxu0 0.0
        %5427 = vmatpush2.msra.mxu0 0.0
        %5428 = vmatprep.subr.mxu0 0.0
        %5429 = vmatpush2.msra.mxu0 0.0
        %5430 = vmatprep.subr.mxu0 0.0
        %5431 = vmatpush2.msra.mxu0 0.0
        %5432 = vmatprep.subr.mxu0 0.0
        %5433 = vmatpush2.msra.mxu0 0.0
        %5434 = vmatprep.subr.mxu0 0.0
        %5435 = vmatpush2.msra.mxu0 0.0
        %5436 = vmatprep.subr.mxu0 0.0
        %5437 = vmatpush2.msra.mxu0 0.0
        %5438 = vmatprep.mubr.f32.mxu0 0.0
        %5439 = vmatmul.mubr.f32.gmra.mxu0 %v5366
        %v5440 = vpop.f32.mrf.mxu0
        %v5441 = vadd.f32 0.0, %v5440
        %v5442 = vpop.f32.mrf.mxu0
        %5443 = vmatprep.mubr.f32.mxu0 0.0
        %5444 = vmatmul.mubr.f32.gmra.mxu0 %v5369
        %v5445 = vpop.f32.mrf.mxu0
        %v5446 = vadd.f32 0.0, %v5445
        %v5447 = vpop.f32.mrf.mxu0
        %5448 = vmatprep.mubr.f32.mxu0 0.0
        %5449 = vmatmul.mubr.f32.gmra.mxu0 %v5372
        %v5450 = vpop.f32.mrf.mxu0
        %v5451 = vadd.f32 0.0, %v5450
        %v5452 = vpop.f32.mrf.mxu0
        %5453 = vdwg.mxu0
        %v5454 = vld [vmem:[#allocation10 + $0x30] sm:$0xff]
        %v5456 = vsel %vm857, %v5441, 0
        %v5459 = vsel %vm857, %v5446, 0
        %v5462 = vsel %vm857, %v5451, 0
        %5464 = vmatprep.subr.mxu0 0.0
        %5465 = vmatpush1.msra.mxu0 0.0
        %5466 = vmatprep.subr.mxu0 0.0
        %5467 = vmatpush1.msra.mxu0 0.0
        %5468 = vmatprep.subr.mxu0 0.0
        %5469 = vmatpush1.msra.mxu0 0.0
        %5470 = vmatprep.subr.mxu0 0.0
        %5471 = vmatpush1.msra.mxu0 0.0
        %5472 = vmatprep.subr.mxu0 0.0
        %5473 = vmatpush1.msra.mxu0 0.0
        %5474 = vmatprep.subr.mxu0 0.0
        %5475 = vmatpush1.msra.mxu0 0.0
        %5476 = vmatprep.subr.mxu0 0.0
        %5477 = vmatpush1.msra.mxu0 0.0
        %5478 = vmatprep.subr.mxu0 0.0
        %5479 = vmatpush1.msra.mxu0 0.0
        %5480 = vmatprep.subr.mxu0 0.0
        %5481 = vmatpush1.msra.mxu0 0.0
        %5482 = vmatprep.subr.mxu0 0.0
        %5483 = vmatpush1.msra.mxu0 0.0
        %5484 = vmatprep.subr.mxu0 0.0
        %5485 = vmatpush1.msra.mxu0 0.0
        %5486 = vmatprep.subr.mxu0 0.0
        %5487 = vmatpush1.msra.mxu0 0.0
        %5488 = vmatprep.subr.mxu0 0.0
        %5489 = vmatpush1.msra.mxu0 0.0
        %5490 = vmatprep.subr.mxu0 0.0
        %5491 = vmatpush1.msra.mxu0 0.0
        %5492 = vmatprep.subr.mxu0 0.0
        %5493 = vmatpush1.msra.mxu0 0.0
        %5494 = vmatprep.subr.mxu0 0.0
        %5495 = vmatpush1.msra.mxu0 %v5454
        %5496 = vmatprep.subr.mxu0 0.0
        %5497 = vmatpush2.msra.mxu0 0.0
        %5498 = vmatprep.subr.mxu0 0.0
        %5499 = vmatpush2.msra.mxu0 0.0
        %5500 = vmatprep.subr.mxu0 0.0
        %5501 = vmatpush2.msra.mxu0 0.0
        %5502 = vmatprep.subr.mxu0 0.0
        %5503 = vmatpush2.msra.mxu0 0.0
        %5504 = vmatprep.subr.mxu0 0.0
        %5505 = vmatpush2.msra.mxu0 0.0
        %5506 = vmatprep.subr.mxu0 0.0
        %5507 = vmatpush2.msra.mxu0 0.0
        %5508 = vmatprep.subr.mxu0 0.0
        %5509 = vmatpush2.msra.mxu0 0.0
        %5510 = vmatprep.subr.mxu0 0.0
        %5511 = vmatpush2.msra.mxu0 0.0
        %5512 = vmatprep.subr.mxu0 0.0
        %5513 = vmatpush2.msra.mxu0 0.0
        %5514 = vmatprep.subr.mxu0 0.0
        %5515 = vmatpush2.msra.mxu0 0.0
        %5516 = vmatprep.subr.mxu0 0.0
        %5517 = vmatpush2.msra.mxu0 0.0
        %5518 = vmatprep.subr.mxu0 0.0
        %5519 = vmatpush2.msra.mxu0 0.0
        %5520 = vmatprep.subr.mxu0 0.0
        %5521 = vmatpush2.msra.mxu0 0.0
        %5522 = vmatprep.subr.mxu0 0.0
        %5523 = vmatpush2.msra.mxu0 0.0
        %5524 = vmatprep.subr.mxu0 0.0
        %5525 = vmatpush2.msra.mxu0 0.0
        %5526 = vmatprep.subr.mxu0 0.0
        %5527 = vmatpush2.msra.mxu0 0.0
        %5528 = vmatprep.mubr.f32.mxu0 0.0
        %5529 = vmatmul.mubr.f32.gmra.mxu0 %v5456
        %v5530 = vpop.f32.mrf.mxu0
        %v5531 = vadd.f32 0.0, %v5530
        %v5532 = vpop.f32.mrf.mxu0
        %5533 = vmatprep.mubr.f32.mxu0 0.0
        %5534 = vmatmul.mubr.f32.gmra.mxu0 %v5459
        %v5535 = vpop.f32.mrf.mxu0
        %v5536 = vadd.f32 0.0, %v5535
        %v5537 = vpop.f32.mrf.mxu0
        %5538 = vmatprep.mubr.f32.mxu0 0.0
        %5539 = vmatmul.mubr.f32.gmra.mxu0 %v5462
        %v5540 = vpop.f32.mrf.mxu0
        %v5541 = vadd.f32 0.0, %v5540
        %v5542 = vpop.f32.mrf.mxu0
        %5543 = vdwg.mxu0
        %v5544 = vadd.f32 %v5305, %v5531
        %v5545 = vadd.f32 %v5306, %v5536
        %v5546 = vadd.f32 %v5307, %v5541
        %v5547 = vsel %vm3963, %v3825, -inf
        %5548 = vmax.xlane.f32.xlu0 %v5547
        %v5549 = vpop.xlane.xlu0 %5548
        %v5550 = vsel %vm3963, %v3831, -inf
        %5551 = vmax.xlane.f32.xlu0 %v5550
        %v5552 = vpop.xlane.xlu0 %5551
        %v5553 = vsel %vm3970, %v3837, -inf
        %5554 = vmax.xlane.f32.xlu0 %v5553
        %v5555 = vpop.xlane.xlu0 %5554
        %v5556 = vsub.f32 %v3825, %v5549
        %v5557 = vsub.f32 %v3831, %v5552
        %v5558 = vsub.f32 %v3837, %v5555
        %v5559 = vmul.f32 %v5556, 1.442695
        %v5560 = vpow.pop %v5559
        %v5561 = vmul.f32 %v5557, 1.442695
        %v5562 = vpow.pop %v5561
        %v5563 = vmul.f32 %v5558, 1.442695
        %v5564 = vpow.pop %v5563
        %5568 = vrot.lane.b32.xlu0 %v5560, 64
        %v5569 = vpop.permute.xlu0 %5568
        %5570 = vrot.lane.b32.xlu0 %v5562, 64
        %v5571 = vpop.permute.xlu0 %5570
        %5572 = vrot.lane.b32.xlu0 %v5564, 64
        %v5573 = vpop.permute.xlu0 %5572
        %v5577 = vsel %vm517, %v5569, 0.0
        %5578 = vadd.xlane.f32.xlu0 %v5577
        %v5579 = vpop.xlane.xlu0 %5578
        %v5580 = vsel %vm517, %v5571, 0.0
        %5581 = vadd.xlane.f32.xlu0 %v5580
        %v5582 = vpop.xlane.xlu0 %5581
        %v5583 = vsel %vm3845, %v5573, 0.0
        %5584 = vadd.xlane.f32.xlu0 %v5583
        %v5585 = vpop.xlane.xlu0 %5584
        %v5586 = vrcp.pop %v5579
        %v5587 = vrcp.pop %v5582
        %v5588 = vrcp.pop %v5585
        %v5589 = vmul.f32 %v5560, %v5586
        %v5590 = vmul.f32 %v5562, %v5587
        %v5591 = vmul.f32 %v5564, %v5588
        %5595 = vrot.lane.b32.xlu0 %v5589, 64
        %v5596 = vpop.permute.xlu0 %5595
        %5597 = vrot.lane.b32.xlu0 %v5590, 64
        %v5598 = vpop.permute.xlu0 %5597
        %5599 = vrot.lane.b32.xlu0 %v5591, 64
        %v5600 = vpop.permute.xlu0 %5599
        %5601 = vrot.lane.b32.xlu0 %v819, 72
        %v5602 = vpop.permute.xlu0 %5601
        %5603 = vrot.lane.b32.xlu0 %v824, 72
        %v5604 = vpop.permute.xlu0 %5603
        %5605 = vrot.lane.b32.xlu0 %v829, 72
        %v5606 = vpop.permute.xlu0 %5605
        %5607 = vrot.lane.b32.xlu0 %v834, 72
        %v5608 = vpop.permute.xlu0 %5607
        %5609 = vrot.lane.b32.xlu0 %v839, 72
        %v5610 = vpop.permute.xlu0 %5609
        %5611 = vrot.lane.b32.xlu0 %v844, 72
        %v5612 = vpop.permute.xlu0 %5611
        %5613 = vrot.lane.b32.xlu0 %v849, 72
        %v5614 = vpop.permute.xlu0 %5613
        %5615 = vrot.lane.b32.xlu0 %v854, 72
        %v5616 = vpop.permute.xlu0 %5615
        %v5625 = vsel %vm517, %v5596, 0
        %v5627 = vsel %vm517, %v5598, 0
        %v5629 = vsel %vm517, %v5600, 0
        %5631 = vmatprep.subr.mxu0 0.0
        %5632 = vmatpush1.msra.mxu0 0.0
        %5633 = vmatprep.subr.mxu0 0.0
        %5634 = vmatpush1.msra.mxu0 0.0
        %5635 = vmatprep.subr.mxu0 0.0
        %5636 = vmatpush1.msra.mxu0 0.0
        %5637 = vmatprep.subr.mxu0 0.0
        %5638 = vmatpush1.msra.mxu0 0.0
        %5639 = vmatprep.subr.mxu0 0.0
        %5640 = vmatpush1.msra.mxu0 0.0
        %5641 = vmatprep.subr.mxu0 0.0
        %5642 = vmatpush1.msra.mxu0 0.0
        %5643 = vmatprep.subr.mxu0 0.0
        %5644 = vmatpush1.msra.mxu0 0.0
        %5645 = vmatprep.subr.mxu0 0.0
        %5646 = vmatpush1.msra.mxu0 0.0
        %5647 = vmatprep.subr.mxu0 0.0
        %5648 = vmatpush1.msra.mxu0 %v5616
        %5649 = vmatprep.subr.mxu0 0.0
        %5650 = vmatpush1.msra.mxu0 %v5614
        %5651 = vmatprep.subr.mxu0 0.0
        %5652 = vmatpush1.msra.mxu0 %v5612
        %5653 = vmatprep.subr.mxu0 0.0
        %5654 = vmatpush1.msra.mxu0 %v5610
        %5655 = vmatprep.subr.mxu0 0.0
        %5656 = vmatpush1.msra.mxu0 %v5608
        %5657 = vmatprep.subr.mxu0 0.0
        %5658 = vmatpush1.msra.mxu0 %v5606
        %5659 = vmatprep.subr.mxu0 0.0
        %5660 = vmatpush1.msra.mxu0 %v5604
        %5661 = vmatprep.subr.mxu0 0.0
        %5662 = vmatpush1.msra.mxu0 %v5602
        %5663 = vmatprep.subr.mxu0 0.0
        %5664 = vmatpush2.msra.mxu0 0.0
        %5665 = vmatprep.subr.mxu0 0.0
        %5666 = vmatpush2.msra.mxu0 0.0
        %5667 = vmatprep.subr.mxu0 0.0
        %5668 = vmatpush2.msra.mxu0 0.0
        %5669 = vmatprep.subr.mxu0 0.0
        %5670 = vmatpush2.msra.mxu0 0.0
        %5671 = vmatprep.subr.mxu0 0.0
        %5672 = vmatpush2.msra.mxu0 0.0
        %5673 = vmatprep.subr.mxu0 0.0
        %5674 = vmatpush2.msra.mxu0 0.0
        %5675 = vmatprep.subr.mxu0 0.0
        %5676 = vmatpush2.msra.mxu0 0.0
        %5677 = vmatprep.subr.mxu0 0.0
        %5678 = vmatpush2.msra.mxu0 0.0
        %5679 = vmatprep.subr.mxu0 0.0
        %5680 = vmatpush2.msra.mxu0 0.0
        %5681 = vmatprep.subr.mxu0 0.0
        %5682 = vmatpush2.msra.mxu0 0.0
        %5683 = vmatprep.subr.mxu0 0.0
        %5684 = vmatpush2.msra.mxu0 0.0
        %5685 = vmatprep.subr.mxu0 0.0
        %5686 = vmatpush2.msra.mxu0 0.0
        %5687 = vmatprep.subr.mxu0 0.0
        %5688 = vmatpush2.msra.mxu0 0.0
        %5689 = vmatprep.subr.mxu0 0.0
        %5690 = vmatpush2.msra.mxu0 0.0
        %5691 = vmatprep.subr.mxu0 0.0
        %5692 = vmatpush2.msra.mxu0 0.0
        %5693 = vmatprep.subr.mxu0 0.0
        %5694 = vmatpush2.msra.mxu0 0.0
        %5695 = vmatprep.mubr.f32.mxu0 0.0
        %5696 = vmatmul.mubr.f32.gmra.mxu0 %v5625
        %v5697 = vpop.f32.mrf.mxu0
        %v5698 = vadd.f32 0.0, %v5697
        %v5699 = vpop.f32.mrf.mxu0
        %5700 = vmatprep.mubr.f32.mxu0 0.0
        %5701 = vmatmul.mubr.f32.gmra.mxu0 %v5627
        %v5702 = vpop.f32.mrf.mxu0
        %v5703 = vadd.f32 0.0, %v5702
        %v5704 = vpop.f32.mrf.mxu0
        %5705 = vmatprep.mubr.f32.mxu0 0.0
        %5706 = vmatmul.mubr.f32.gmra.mxu0 %v5629
        %v5707 = vpop.f32.mrf.mxu0
        %v5708 = vadd.f32 0.0, %v5707
        %v5709 = vpop.f32.mrf.mxu0
        %5710 = vdwg.mxu0
        %v5711 = vld [vmem:[#allocation10 + $0x38] sm:$0xff]
        %v5713 = vsel %vm857, %v5698, 0
        %v5716 = vsel %vm857, %v5703, 0
        %v5719 = vsel %vm857, %v5708, 0
        %5721 = vmatprep.subr.mxu0 0.0
        %5722 = vmatpush1.msra.mxu0 0.0
        %5723 = vmatprep.subr.mxu0 0.0
        %5724 = vmatpush1.msra.mxu0 0.0
        %5725 = vmatprep.subr.mxu0 0.0
        %5726 = vmatpush1.msra.mxu0 0.0
        %5727 = vmatprep.subr.mxu0 0.0
        %5728 = vmatpush1.msra.mxu0 0.0
        %5729 = vmatprep.subr.mxu0 0.0
        %5730 = vmatpush1.msra.mxu0 0.0
        %5731 = vmatprep.subr.mxu0 0.0
        %5732 = vmatpush1.msra.mxu0 0.0
        %5733 = vmatprep.subr.mxu0 0.0
        %5734 = vmatpush1.msra.mxu0 0.0
        %5735 = vmatprep.subr.mxu0 0.0
        %5736 = vmatpush1.msra.mxu0 0.0
        %5737 = vmatprep.subr.mxu0 0.0
        %5738 = vmatpush1.msra.mxu0 0.0
        %5739 = vmatprep.subr.mxu0 0.0
        %5740 = vmatpush1.msra.mxu0 0.0
        %5741 = vmatprep.subr.mxu0 0.0
        %5742 = vmatpush1.msra.mxu0 0.0
        %5743 = vmatprep.subr.mxu0 0.0
        %5744 = vmatpush1.msra.mxu0 0.0
        %5745 = vmatprep.subr.mxu0 0.0
        %5746 = vmatpush1.msra.mxu0 0.0
        %5747 = vmatprep.subr.mxu0 0.0
        %5748 = vmatpush1.msra.mxu0 0.0
        %5749 = vmatprep.subr.mxu0 0.0
        %5750 = vmatpush1.msra.mxu0 0.0
        %5751 = vmatprep.subr.mxu0 0.0
        %5752 = vmatpush1.msra.mxu0 %v5711
        %5753 = vmatprep.subr.mxu0 0.0
        %5754 = vmatpush2.msra.mxu0 0.0
        %5755 = vmatprep.subr.mxu0 0.0
        %5756 = vmatpush2.msra.mxu0 0.0
        %5757 = vmatprep.subr.mxu0 0.0
        %5758 = vmatpush2.msra.mxu0 0.0
        %5759 = vmatprep.subr.mxu0 0.0
        %5760 = vmatpush2.msra.mxu0 0.0
        %5761 = vmatprep.subr.mxu0 0.0
        %5762 = vmatpush2.msra.mxu0 0.0
        %5763 = vmatprep.subr.mxu0 0.0
        %5764 = vmatpush2.msra.mxu0 0.0
        %5765 = vmatprep.subr.mxu0 0.0
        %5766 = vmatpush2.msra.mxu0 0.0
        %5767 = vmatprep.subr.mxu0 0.0
        %5768 = vmatpush2.msra.mxu0 0.0
        %5769 = vmatprep.subr.mxu0 0.0
        %5770 = vmatpush2.msra.mxu0 0.0
        %5771 = vmatprep.subr.mxu0 0.0
        %5772 = vmatpush2.msra.mxu0 0.0
        %5773 = vmatprep.subr.mxu0 0.0
        %5774 = vmatpush2.msra.mxu0 0.0
        %5775 = vmatprep.subr.mxu0 0.0
        %5776 = vmatpush2.msra.mxu0 0.0
        %5777 = vmatprep.subr.mxu0 0.0
        %5778 = vmatpush2.msra.mxu0 0.0
        %5779 = vmatprep.subr.mxu0 0.0
        %5780 = vmatpush2.msra.mxu0 0.0
        %5781 = vmatprep.subr.mxu0 0.0
        %5782 = vmatpush2.msra.mxu0 0.0
        %5783 = vmatprep.subr.mxu0 0.0
        %5784 = vmatpush2.msra.mxu0 0.0
        %5785 = vmatprep.mubr.f32.mxu0 0.0
        %5786 = vmatmul.mubr.f32.gmra.mxu0 %v5713
        %v5787 = vpop.f32.mrf.mxu0
        %v5788 = vadd.f32 0.0, %v5787
        %v5789 = vpop.f32.mrf.mxu0
        %5790 = vmatprep.mubr.f32.mxu0 0.0
        %5791 = vmatmul.mubr.f32.gmra.mxu0 %v5716
        %v5792 = vpop.f32.mrf.mxu0
        %v5793 = vadd.f32 0.0, %v5792
        %v5794 = vpop.f32.mrf.mxu0
        %5795 = vmatprep.mubr.f32.mxu0 0.0
        %5796 = vmatmul.mubr.f32.gmra.mxu0 %v5719
        %v5797 = vpop.f32.mrf.mxu0
        %v5798 = vadd.f32 0.0, %v5797
        %v5799 = vpop.f32.mrf.mxu0
        %5800 = vdwg.mxu0
        %v5801 = vadd.f32 %v5544, %v5788
        %v5802 = vadd.f32 %v5545, %v5793
        %v5803 = vadd.f32 %v5546, %v5798
        %v5804 = vld [vmem:[%s10] sm:$0x1]
        %v5806 = vlaneseq
        %v5807 = vshrl.u32 %v5806, 7
        %v5808 = vsub.s32 0, %v5807
        %v5809 = vrot.slane %v5804, %v5808
        %v5811 = vadd.f32 %v5801, %v5809
        %v5812 = vadd.f32 %v5802, %v5809
        %v5813 = vadd.f32 %v5803, %v5809
        %5814 = vst.msk [vmem:[%s497] sm:$0xff] %vm517, %v5811
        %5815 = vst.msk [vmem:[%s497 + $0x8] sm:$0xff] %vm517, %v5812
        %5816 = vst.msk [vmem:[%s497 + $0x10] sm:$0x1] %vm3845, %v5813
        %p5817 = scmp.lt.s32.totalorder %s28, 1
        %s5818 = scalar_select %p5817, %s28, 1
        %s5819 = smul.addr %s5818, 3
        %s5820 = smul.addr %s5819, 8
        %s5821 = scalar_lea.vmem %s11, %s5820
        // Predicated region
        $region89: #{tpu_custom_call.1} parent=63 // pred_check
          %p5822 = pneg %p287
        $region90: #{tpu_custom_call.1} parent=63 // pred_check_branch
          %5824 = sbr.rel (%p5822) target = $region92
        $region91: #{tpu_custom_call.1} parent=63 // pred_region
          _
        $region92: #{tpu_custom_call.1} parent=63 // pred_fallthru
          _
      $region64: #{tpu_custom_call.1} parent=5 // pred_fallthru
        _
      %p5825 = scmp.le.s32.totalorder 2, %s23
      // Predicated region
      $region93: #{tpu_custom_call.1} parent=5 // pred_check
        %p5826 = pneg %p5825
      $region94: #{tpu_custom_call.1} parent=5 // pred_check_branch
        %5828 = sbr.rel (%p5826) target = $region96
      $region95: #{tpu_custom_call.1} parent=5 // pred_region
        %s5829 = ssub.s32 %s23, 2
        // Predicated region
        $region97: #{tpu_custom_call.1} parent=95 // pred_check
          %p5830 = pneg %p293
        $region98: #{tpu_custom_call.1} parent=95 // pred_check_branch
          %5832 = sbr.rel (%p5830) target = $region100
        $region99: #{tpu_custom_call.1} parent=95 // pred_region
          %p5833 = scmp.lt.s32.totalorder %s29, 1
          %s5834 = scalar_select %p5833, %s29, 1
          %s5835 = smul.addr %s5834, 3
          %s5836 = smul.addr %s5835, 8
          %s5837 = scalar_lea.vmem %s11, %s5836
        $region100: #{tpu_custom_call.1} parent=95 // pred_fallthru
          _
      $region96: #{tpu_custom_call.1} parent=5 // pred_fallthru
        _
    $region6: #{tpu_custom_call.1} parent=1 // loop_footer
      %s27 = sadd.s32 1, %s23
    $region7: #{tpu_custom_call.1} parent=1 // loop_footer_branch
      %22 = sbr.rel target = $region3
    $region8: #{tpu_custom_call.1} parent=1 // loop_exit
      _
    %5838 = vsyncpa [#allocation3], 1
    %s5839 = scalar_lea.sflag [#allocation3], 1
    %5840 = vsyncpa %s5839, 1
    %5841 = vsyncpa [#allocation5], 1
    %5842 = vsyncpa [#allocation8], 1
    %5843 = vsyncpa [#allocation11], 1

</llo_original>
